<compile_context>
chip_gen: v6e
topology: v6e:2x2x1
jax: 0.10.0
libtpu: 0.0.40
codegen_flags: <defaults>
</compile_context>

<pallas_src>
import math
import jax
import jax.numpy as jnp
from jax.experimental import pallas as pl
from jax.experimental.pallas import tpu as pltpu

# ---- scaled-down hyper-parameters (structure identical to the reference) ----
d_model    = 64     # ref: 768
maxlen     = 16     # ref: 30
n_segments = 2
vocab_size = 50
d_k = d_v  = 16     # ref: 64
n_heads    = 4      # ref: 12
d_ff       = 128    # ref: 3072
n_layers   = 2      # ref: 6
batch_size = 2      # ref: 6
seq_len    = 8
n_pred     = 3
LN_EPS     = 1e-5

V_PAD   = 128       # lane-dense padded vocab logits (50 -> 128)
CLS_PAD = 128       # lane-dense padded classifier logits (2 -> 128)

_INV_SQRT_DK    = 1.0 / math.sqrt(d_k)
_SQRT_2_OVER_PI = math.sqrt(2.0 / math.pi)


# ----------------------------- in-kernel helpers -----------------------------
def _gelu(x):
    # TODO(synk): tanh-approximation of the reference torch.erf GELU (max abs
    # err ~1e-3); jnp.tanh runs on the EUP slot instead of a long VALU chain.
    return 0.5 * x * (1.0 + jnp.tanh(_SQRT_2_OVER_PI * (x + 0.044715 * x * x * x)))


def _layer_norm(x, gamma=None, beta=None):
    d = x.shape[-1]
    mu = jnp.sum(x, axis=-1, keepdims=True) * (1.0 / d)
    xc = x - mu
    var = jnp.sum(xc * xc, axis=-1, keepdims=True) * (1.0 / d)
    y = xc * jax.lax.rsqrt(var + LN_EPS)        # rsqrt -> EUP
    if gamma is not None:
        y = y * gamma + beta
    return y


# --------------------------------- kernels -----------------------------------
def encoder_kernel(emb_ref, mask_ref, g_ref, be_ref,
                   wqkv_ref, bqkv_ref, wo_ref, bo_ref,
                   w1_ref, b1_ref, w2_ref, b2_ref,
                   out_ref):
    # Embedding LayerNorm fused here.  Every layer (grid axis 1) reads the same
    # `emb` block -> reproduces the reference dataflow bug; the output block is
    # simply overwritten each layer, so the final value is the last layer's.
    x = _layer_norm(emb_ref[...], g_ref[...], be_ref[...])          # (S, D)
    mask_add = mask_ref[...]                                        # (1, S) additive

    hk = n_heads * d_k

    # fused QKV projection: one MXU op instead of three
    qkv = (jnp.dot(x, wqkv_ref[...], preferred_element_type=jnp.float32)
           + bqkv_ref[...])                                         # (S, 3*H*dk)
    q = qkv[:, :hk] * _INV_SQRT_DK          # fold 1/sqrt(d_k) into Q once
    k = qkv[:, hk:2 * hk]
    v = qkv[:, 2 * hk:]

    # (S, H*dk) -> (H, S, dk): heads become a leading batch dim
    q3 = jnp.stack([q[:, h * d_k:(h + 1) * d_k] for h in range(n_heads)], axis=0)
    k3 = jnp.stack([k[:, h * d_k:(h + 1) * d_k] for h in range(n_heads)], axis=0)
    v3 = jnp.stack([v[:, h * d_v:(h + 1) * d_v] for h in range(n_heads)], axis=0)

    # head-batched scores + softmax (additive pad mask, EUP reciprocal)
    scores = jnp.einsum('hqd,hkd->hqk', q3, k3,
                        preferred_element_type=jnp.float32)          # (H, S, S)
    scores = scores + mask_add                                       # bcast over (H, q)
    m = jnp.max(scores, axis=-1, keepdims=True)
    e = jnp.exp(scores - m)
    attn = e * pl.reciprocal(jnp.sum(e, axis=-1, keepdims=True), approx=True)

    ctx = jnp.einsum('hqk,hkd->hqd', attn, v3,
                     preferred_element_type=jnp.float32)             # (H, S, dv)

    # head-batched output projection, reduced over heads (wo stored (H, dv, D))
    attn_out = jnp.sum(
        jnp.einsum('hqd,hdm->hqm', ctx, wo_ref[...],
                   preferred_element_type=jnp.float32), axis=0) + bo_ref[...]

    # residual + LayerNorm (forward-created LN: gamma=1, beta=0)
    y = _layer_norm(attn_out + x)

    # position-wise FFN (no residual in the reference)
    h1 = _gelu(jnp.dot(y, w1_ref[...], preferred_element_type=jnp.float32)
               + b1_ref[...])
    out_ref[...] = (jnp.dot(h1, w2_ref[...], preferred_element_type=jnp.float32)
                    + b2_ref[...])


def head_kernel(cls_ref, hm_ref,
                wfc_ref, bfc_ref, wcls_ref, bcls_ref,
                wlin_ref, blin_ref, g_ref, beta_ref,
                dec_ref, dbias_ref,
                clsf_ref, lm_ref):
    # pooled classifier branch (outputs lane-padded to 128)
    h_pooled = jnp.tanh(jnp.dot(cls_ref[...], wfc_ref[...],
                                preferred_element_type=jnp.float32) + bfc_ref[...])
    clsf_ref[...] = (jnp.dot(h_pooled, wcls_ref[...],
                             preferred_element_type=jnp.float32) + bcls_ref[...])

    # masked-LM branch (vocab lane-padded to 128)
    h = (jnp.dot(hm_ref[...], wlin_ref[...],
                 preferred_element_type=jnp.float32) + blin_ref[...])
    h = _layer_norm(_gelu(h), g_ref[...], beta_ref[...])
    lm_ref[...] = (jnp.dot(h, dec_ref[...],
                           preferred_element_type=jnp.float32) + dbias_ref[...])


# ------------------------------ pallas wrappers -------------------------------
def _full_spec(shape):
    zeros = (0,) * len(shape)
    return pl.BlockSpec(shape, lambda *args: zeros)


def _layer_weight_spec(arr):
    zeros = (0,) * (arr.ndim - 1)
    return pl.BlockSpec((None,) + arr.shape[1:],
                        lambda b, l, z=zeros: (l,) + z)


def encoder_stack(emb_raw, mask_add, emb_ln_g, emb_ln_b, stacked):
    B, S, D = emb_raw.shape
    L = stacked['wqkv'].shape[0]
    weight_args = (stacked['wqkv'], stacked['bqkv'], stacked['wo'], stacked['bo'],
                   stacked['w1'], stacked['b1'], stacked['w2'], stacked['b2'])

    in_specs = ([pl.BlockSpec((None, S, D), lambda b, l: (b, 0, 0)),   # emb (const over l)
                 pl.BlockSpec((None, 1, S), lambda b, l: (b, 0, 0)),   # additive pad mask
                 pl.BlockSpec((1, D), lambda b, l: (0, 0)),            # emb LN gamma
                 pl.BlockSpec((1, D), lambda b, l: (0, 0))]            # emb LN beta
                + [_layer_weight_spec(w) for w in weight_args])

    return pl.pallas_call(
        encoder_kernel,
        out_shape=jax.ShapeDtypeStruct((B, S, D), jnp.float32),
        grid=(B, L),                     # layer axis last ("arbitrary")
        in_specs=in_specs,
        out_specs=pl.BlockSpec((None, S, D), lambda b, l: (b, 0, 0)),
        compiler_params=pltpu.CompilerParams(
            dimension_semantics=("parallel", "arbitrary"),
            # matters at reference scale where per-layer weights are tens of MiB
            vmem_limit_bytes=32 * 1024 * 1024),
    )(emb_raw, mask_add, emb_ln_g, emb_ln_b, *weight_args)


def bert_head(cls_tok, h_masked, hp):
    B = cls_tok.shape[0]
    P = h_masked.shape[1]
    D = d_model
    args = (cls_tok, h_masked,
            hp['wfc'], hp['bfc'], hp['wcls_pad'], hp['bcls_pad'],
            hp['wlin'], hp['blin'], hp['g_norm'], hp['b_norm'],
            hp['dec_pad'], hp['dbias_pad'])

    in_specs = ([pl.BlockSpec((None, 1, D), lambda b: (b, 0, 0)),
                 pl.BlockSpec((None, P, D), lambda b: (b, 0, 0))]
                + [_full_spec(a.shape) for a in args[2:]])

    clsf_pad, lm_pad = pl.pallas_call(
        head_kernel,
        out_shape=(jax.ShapeDtypeStruct((B, 1, CLS_PAD), jnp.float32),
                   jax.ShapeDtypeStruct((B, P, V_PAD), jnp.float32)),
        grid=(B,),
        in_specs=in_specs,
        out_specs=(pl.BlockSpec((None, 1, CLS_PAD), lambda b: (b, 0, 0)),
                   pl.BlockSpec((None, P, V_PAD), lambda b: (b, 0, 0))),
        compiler_params=pltpu.CompilerParams(dimension_semantics=("parallel",)),
    )(*args)
    # strip lane padding in the wrapper
    return clsf_pad[:, 0, :2], lm_pad[:, :, :vocab_size]


# -------------------------- parameter preparation -----------------------------
def _stack_layers(layers):
    wqkv = jnp.stack([jnp.concatenate([lp['wq'], lp['wk'], lp['wv']], axis=1)
                      for lp in layers], axis=0)                   # (L, D, 3*H*dk)
    bqkv = jnp.stack([jnp.concatenate([lp['bq'], lp['bk'], lp['bv']], axis=1)
                      for lp in layers], axis=0)                   # (L, 1, 3*H*dk)
    wo = jnp.stack([lp['wo'].reshape(n_heads, d_v, d_model)
                    for lp in layers], axis=0)                     # (L, H, dv, D)
    bo = jnp.stack([lp['bo'] for lp in layers], axis=0)            # (L, 1, D)
    w1 = jnp.stack([lp['w1'] for lp in layers], axis=0)            # (L, D, d_ff)
    b1 = jnp.stack([lp['b1'] for lp in layers], axis=0)            # (L, 1, d_ff)
    w2 = jnp.stack([lp['w2'] for lp in layers], axis=0)            # (L, d_ff, D)
    b2 = jnp.stack([lp['b2'] for lp in layers], axis=0)            # (L, 1, D)
    return dict(wqkv=wqkv, bqkv=bqkv, wo=wo, bo=bo, w1=w1, b1=b1, w2=w2, b2=b2)


def _pad_last(x, target):
    return jnp.pad(x, ((0, 0), (0, target - x.shape[-1])))


def _pad_head(head):
    hp = dict(head)
    hp['wcls_pad']  = _pad_last(head['wcls'],  CLS_PAD)
    hp['bcls_pad']  = _pad_last(head['bcls'],  CLS_PAD)
    hp['dec_pad']   = _pad_last(head['dec'],   V_PAD)
    hp['dbias_pad'] = _pad_last(head['dbias'], V_PAD)
    return hp


# ------------------------------- full forward ---------------------------------
@jax.jit
def bert_forward(params, input_ids, segment_ids, masked_pos):
    B, S = input_ids.shape

    # Embedding gathers in plain JAX (glue); LayerNorm fused into encoder kernel.
    emb_raw = (params['tok_embed'][input_ids]
               + params['pos_embed'][:S][None, :, :]
               + params['seg_embed'][segment_ids])                 # (B, S, D)

    # get_attn_pad_mask as an additive float mask over key positions
    mask_add = jnp.where(input_ids == 0, jnp.float32(-1e9),
                         jnp.float32(0.0))[:, None, :]             # (B, 1, S)

    stacked = _stack_layers(params['layers'])
    output = encoder_stack(emb_raw, mask_add,
                           params['emb_ln_g'], params['emb_ln_b'], stacked)

    cls_tok = output[:, 0:1, :]                                    # (B, 1, D)
    # torch.gather(output, 1, masked_pos expanded) -- glue gather in JAX
    h_gathered = jax.vmap(lambda o, idx: o[idx])(output, masked_pos)  # (B, P, D)

    logits_clsf, logits_lm = bert_head(cls_tok, h_gathered, _pad_head(params['head']))
    return logits_lm, logits_clsf


# ------------------------------ parameter init --------------------------------
def init_params(key):
    state = {'key': key}

    def nrm(shape, scale=0.02):
        state['key'], sub = jax.random.split(state['key'])
        return scale * jax.random.normal(sub, shape, dtype=jnp.float32)

    params = {
        'tok_embed': nrm((vocab_size, d_model), 1.0),
        'pos_embed': nrm((maxlen, d_model), 1.0),
        'seg_embed': nrm((n_segments, d_model), 1.0),
        'emb_ln_g': jnp.ones((1, d_model), jnp.float32),
        'emb_ln_b': jnp.zeros((1, d_model), jnp.float32),
    }
    layers = []
    for _ in range(n_layers):
        layers.append({
            'wq': nrm((d_model, n_heads * d_k)), 'bq': nrm((1, n_heads * d_k)),
            'wk': nrm((d_model, n_heads * d_k)), 'bk': nrm((1, n_heads * d_k)),
            'wv': nrm((d_model, n_heads * d_v)), 'bv': nrm((1, n_heads * d_v)),
            'wo': nrm((n_heads * d_v, d_model)), 'bo': nrm((1, d_model)),
            'w1': nrm((d_model, d_ff)),          'b1': nrm((1, d_ff)),
            'w2': nrm((d_ff, d_model)),          'b2': nrm((1, d_model)),
        })
    params['layers'] = layers
    params['head'] = {
        'wfc':  nrm((d_model, d_model)), 'bfc':  nrm((1, d_model)),
        'wcls': nrm((d_model, 2)),       'bcls': nrm((1, 2)),
        'wlin': nrm((d_model, d_model)), 'blin': nrm((1, d_model)),
        'g_norm': jnp.ones((1, d_model), jnp.float32),
        'b_norm': jnp.zeros((1, d_model), jnp.float32),
        'dec': params['tok_embed'].T,                      # tied decoder weight
        'dbias': jnp.zeros((1, vocab_size), jnp.float32),
    }
    return params


# ----------------------------------- main --------------------------------------
if __name__ == "__main__":
    key = jax.random.PRNGKey(0)
    pkey, dkey = jax.random.split(key)
    params = init_params(pkey)

    k1, k2 = jax.random.split(dkey)
    input_ids = jax.random.randint(k1, (batch_size, seq_len), 1, vocab_size,
                                   dtype=jnp.int32)
    # insert padding tokens (id 0) so the attention pad mask is exercised
    input_ids = input_ids.at[:, -2:].set(0)
    segment_ids = jnp.concatenate(
        [jnp.zeros((batch_size, seq_len // 2), jnp.int32),
         jnp.ones((batch_size, seq_len - seq_len // 2), jnp.int32)], axis=1)
    masked_pos = jax.random.randint(k2, (batch_size, n_pred), 0, seq_len,
                                    dtype=jnp.int32)

    logits_lm, logits_clsf = bert_forward(params, input_ids, segment_ids,
                                          masked_pos)
    jax.block_until_ready((logits_lm, logits_clsf))

    assert logits_lm.shape == (batch_size, n_pred, vocab_size)
    assert logits_clsf.shape == (batch_size, 2)
    assert jnp.all(jnp.isfinite(logits_lm)) and jnp.all(jnp.isfinite(logits_clsf))
    print("KERNEL_OK")
</pallas_src>

<mosaic_0001>
module attributes {stable_mosaic.version = 11 : i64} {
  func.func @encoder_kernel(%arg0: i32, %arg1: i32, %arg2: memref<1x8x64xf32, #tpu.memory_space<vmem>>, %arg3: memref<1x1x8xf32, #tpu.memory_space<vmem>>, %arg4: memref<1x64xf32, #tpu.memory_space<vmem>>, %arg5: memref<1x64xf32, #tpu.memory_space<vmem>>, %arg6: memref<1x64x192xf32, #tpu.memory_space<vmem>>, %arg7: memref<1x1x192xf32, #tpu.memory_space<vmem>>, %arg8: memref<1x4x16x64xf32, #tpu.memory_space<vmem>>, %arg9: memref<1x1x64xf32, #tpu.memory_space<vmem>>, %arg10: memref<1x64x128xf32, #tpu.memory_space<vmem>>, %arg11: memref<1x1x128xf32, #tpu.memory_space<vmem>>, %arg12: memref<1x128x64xf32, #tpu.memory_space<vmem>>, %arg13: memref<1x1x64xf32, #tpu.memory_space<vmem>>, %arg14: memref<1x8x64xf32, #tpu.memory_space<vmem>>) attributes {dimension_semantics = [#tpu.dimension_semantics<parallel>, #tpu.dimension_semantics<arbitrary>], iteration_bounds = array<i64: 2, 2>, scalar_prefetch = 0 : i64, scratch_operands = 0 : i64, tpu.core_type = #tpu.core_type<tc>, window_params = [{transform_indices = @transform_0, window_bounds = array<i64: 1, 8, 64>}, {transform_indices = @transform_1, window_bounds = array<i64: 1, 1, 8>}, {pipeline_mode = #tpu.pipeline_mode<synchronous>, transform_indices = @transform_2, window_bounds = array<i64: 1, 64>}, {pipeline_mode = #tpu.pipeline_mode<synchronous>, transform_indices = @transform_3, window_bounds = array<i64: 1, 64>}, {transform_indices = @transform_4, window_bounds = array<i64: 1, 64, 192>}, {transform_indices = @transform_5, window_bounds = array<i64: 1, 1, 192>}, {transform_indices = @transform_6, window_bounds = array<i64: 1, 4, 16, 64>}, {transform_indices = @transform_7, window_bounds = array<i64: 1, 1, 64>}, {transform_indices = @transform_8, window_bounds = array<i64: 1, 64, 128>}, {transform_indices = @transform_9, window_bounds = array<i64: 1, 1, 128>}, {transform_indices = @transform_10, window_bounds = array<i64: 1, 128, 64>}, {transform_indices = @transform_11, window_bounds = array<i64: 1, 1, 64>}, {transform_indices = @transform_12, window_bounds = array<i64: 1, 8, 64>}]} {
    %c0 = arith.constant 0 : index
    %c0_0 = arith.constant 0 : index
    %c0_1 = arith.constant 0 : index
    %0 = vector.load %arg2[%c0, %c0_0, %c0_1] : memref<1x8x64xf32, #tpu.memory_space<vmem>>, vector<1x8x64xf32>
    %1 = vector.shape_cast %0 : vector<1x8x64xf32> to vector<8x64xf32>
    %c0_2 = arith.constant 0 : index
    %c0_3 = arith.constant 0 : index
    %2 = vector.load %arg4[%c0_2, %c0_3] : memref<1x64xf32, #tpu.memory_space<vmem>>, vector<1x64xf32>
    %c0_4 = arith.constant 0 : index
    %c0_5 = arith.constant 0 : index
    %3 = vector.load %arg5[%c0_4, %c0_5] : memref<1x64xf32, #tpu.memory_space<vmem>>, vector<1x64xf32>
    %cst = arith.constant dense<0.000000e+00> : vector<8xf32>
    %4 = vector.multi_reduction <add>, %1, %cst [1] : vector<8x64xf32> to vector<8xf32>
    %5 = vector.shape_cast %4 : vector<8xf32> to vector<8x1xf32>
    %cst_6 = arith.constant 1.562500e-02 : f32
    %6 = vector.broadcast %cst_6 : f32 to vector<8x1xf32>
    %7 = arith.mulf %5, %6 : vector<8x1xf32>
    %8 = vector.broadcast %7 : vector<8x1xf32> to vector<8x64xf32>
    %9 = arith.subf %1, %8 : vector<8x64xf32>
    %10 = arith.mulf %9, %9 : vector<8x64xf32>
    %cst_7 = arith.constant dense<0.000000e+00> : vector<8xf32>
    %11 = vector.multi_reduction <add>, %10, %cst_7 [1] : vector<8x64xf32> to vector<8xf32>
    %12 = vector.shape_cast %11 : vector<8xf32> to vector<8x1xf32>
    %cst_8 = arith.constant 1.562500e-02 : f32
    %13 = vector.broadcast %cst_8 : f32 to vector<8x1xf32>
    %14 = arith.mulf %12, %13 : vector<8x1xf32>
    %cst_9 = arith.constant 9.99999974E-6 : f32
    %15 = vector.broadcast %cst_9 : f32 to vector<8x1xf32>
    %16 = arith.addf %14, %15 : vector<8x1xf32>
    %17 = math.rsqrt %16 : vector<8x1xf32>
    %18 = vector.broadcast %17 : vector<8x1xf32> to vector<8x64xf32>
    %19 = arith.mulf %9, %18 : vector<8x64xf32>
    %20 = vector.broadcast %2 : vector<1x64xf32> to vector<8x64xf32>
    %21 = arith.mulf %19, %20 : vector<8x64xf32>
    %22 = vector.broadcast %3 : vector<1x64xf32> to vector<8x64xf32>
    %23 = arith.addf %21, %22 : vector<8x64xf32>
    %c0_10 = arith.constant 0 : index
    %c0_11 = arith.constant 0 : index
    %c0_12 = arith.constant 0 : index
    %24 = vector.load %arg3[%c0_10, %c0_11, %c0_12] : memref<1x1x8xf32, #tpu.memory_space<vmem>>, vector<1x1x8xf32>
    %25 = vector.shape_cast %24 : vector<1x1x8xf32> to vector<1x8xf32>
    %c0_13 = arith.constant 0 : index
    %c0_14 = arith.constant 0 : index
    %c0_15 = arith.constant 0 : index
    %26 = vector.load %arg6[%c0_13, %c0_14, %c0_15] : memref<1x64x192xf32, #tpu.memory_space<vmem>>, vector<1x64x192xf32>
    %27 = vector.shape_cast %26 : vector<1x64x192xf32> to vector<64x192xf32>
    %cst_16 = arith.constant dense<0.000000e+00> : vector<8x192xf32>
    %28 = tpu.matmul %23, %27, %cst_16 {dimension_numbers = #tpu.dot_dimension_numbers<[1], [0], [0], [1], [0, 0, 1, 1], [], []>} : vector<8x64xf32>, vector<64x192xf32>, vector<8x192xf32> -> vector<8x192xf32>
    %c0_17 = arith.constant 0 : index
    %c0_18 = arith.constant 0 : index
    %c0_19 = arith.constant 0 : index
    %29 = vector.load %arg7[%c0_17, %c0_18, %c0_19] : memref<1x1x192xf32, #tpu.memory_space<vmem>>, vector<1x1x192xf32>
    %30 = vector.shape_cast %29 : vector<1x1x192xf32> to vector<1x192xf32>
    %31 = vector.broadcast %30 : vector<1x192xf32> to vector<8x192xf32>
    %32 = arith.addf %28, %31 : vector<8x192xf32>
    %33 = vector.extract_strided_slice %32 {offsets = [0, 0], sizes = [8, 64], strides = [1, 1]} : vector<8x192xf32> to vector<8x64xf32>
    %cst_20 = arith.constant 2.500000e-01 : f32
    %34 = vector.broadcast %cst_20 : f32 to vector<8x64xf32>
    %35 = arith.mulf %33, %34 : vector<8x64xf32>
    %36 = vector.extract_strided_slice %32 {offsets = [0, 64], sizes = [8, 64], strides = [1, 1]} : vector<8x192xf32> to vector<8x64xf32>
    %37 = vector.extract_strided_slice %32 {offsets = [0, 128], sizes = [8, 64], strides = [1, 1]} : vector<8x192xf32> to vector<8x64xf32>
    %38 = vector.extract_strided_slice %35 {offsets = [0, 0], sizes = [8, 16], strides = [1, 1]} : vector<8x64xf32> to vector<8x16xf32>
    %39 = vector.extract_strided_slice %35 {offsets = [0, 16], sizes = [8, 16], strides = [1, 1]} : vector<8x64xf32> to vector<8x16xf32>
    %40 = vector.extract_strided_slice %35 {offsets = [0, 32], sizes = [8, 16], strides = [1, 1]} : vector<8x64xf32> to vector<8x16xf32>
    %41 = vector.extract_strided_slice %35 {offsets = [0, 48], sizes = [8, 16], strides = [1, 1]} : vector<8x64xf32> to vector<8x16xf32>
    %42 = vector.shape_cast %38 : vector<8x16xf32> to vector<1x8x16xf32>
    %43 = vector.shape_cast %39 : vector<8x16xf32> to vector<1x8x16xf32>
    %44 = vector.shape_cast %40 : vector<8x16xf32> to vector<1x8x16xf32>
    %45 = vector.shape_cast %41 : vector<8x16xf32> to vector<1x8x16xf32>
    %46 = tpu.concatenate %42, %43, %44, %45 in 0 : vector<1x8x16xf32>, vector<1x8x16xf32>, vector<1x8x16xf32>, vector<1x8x16xf32> -> vector<4x8x16xf32>
    %47 = vector.extract_strided_slice %36 {offsets = [0, 0], sizes = [8, 16], strides = [1, 1]} : vector<8x64xf32> to vector<8x16xf32>
    %48 = vector.extract_strided_slice %36 {offsets = [0, 16], sizes = [8, 16], strides = [1, 1]} : vector<8x64xf32> to vector<8x16xf32>
    %49 = vector.extract_strided_slice %36 {offsets = [0, 32], sizes = [8, 16], strides = [1, 1]} : vector<8x64xf32> to vector<8x16xf32>
    %50 = vector.extract_strided_slice %36 {offsets = [0, 48], sizes = [8, 16], strides = [1, 1]} : vector<8x64xf32> to vector<8x16xf32>
    %51 = vector.shape_cast %47 : vector<8x16xf32> to vector<1x8x16xf32>
    %52 = vector.shape_cast %48 : vector<8x16xf32> to vector<1x8x16xf32>
    %53 = vector.shape_cast %49 : vector<8x16xf32> to vector<1x8x16xf32>
    %54 = vector.shape_cast %50 : vector<8x16xf32> to vector<1x8x16xf32>
    %55 = tpu.concatenate %51, %52, %53, %54 in 0 : vector<1x8x16xf32>, vector<1x8x16xf32>, vector<1x8x16xf32>, vector<1x8x16xf32> -> vector<4x8x16xf32>
    %56 = vector.extract_strided_slice %37 {offsets = [0, 0], sizes = [8, 16], strides = [1, 1]} : vector<8x64xf32> to vector<8x16xf32>
    %57 = vector.extract_strided_slice %37 {offsets = [0, 16], sizes = [8, 16], strides = [1, 1]} : vector<8x64xf32> to vector<8x16xf32>
    %58 = vector.extract_strided_slice %37 {offsets = [0, 32], sizes = [8, 16], strides = [1, 1]} : vector<8x64xf32> to vector<8x16xf32>
    %59 = vector.extract_strided_slice %37 {offsets = [0, 48], sizes = [8, 16], strides = [1, 1]} : vector<8x64xf32> to vector<8x16xf32>
    %60 = vector.shape_cast %56 : vector<8x16xf32> to vector<1x8x16xf32>
    %61 = vector.shape_cast %57 : vector<8x16xf32> to vector<1x8x16xf32>
    %62 = vector.shape_cast %58 : vector<8x16xf32> to vector<1x8x16xf32>
    %63 = vector.shape_cast %59 : vector<8x16xf32> to vector<1x8x16xf32>
    %64 = tpu.concatenate %60, %61, %62, %63 in 0 : vector<1x8x16xf32>, vector<1x8x16xf32>, vector<1x8x16xf32>, vector<1x8x16xf32> -> vector<4x8x16xf32>
    "tpu.trace_start"() <{level = 10 : i32, message = "hqd,hkd->hqk"}> : () -> ()
    %cst_21 = arith.constant dense<0.000000e+00> : vector<4x8x8xf32>
    %65 = tpu.matmul %46, %55, %cst_21 {dimension_numbers = #tpu.dot_dimension_numbers<[2], [2], [1], [1], [0, 0, 0, 1, 1, 1], [0], [0]>} : vector<4x8x16xf32>, vector<4x8x16xf32>, vector<4x8x8xf32> -> vector<4x8x8xf32>
    "tpu.trace_stop"() : () -> ()
    %66 = vector.shape_cast %25 : vector<1x8xf32> to vector<1x1x8xf32>
    %67 = vector.broadcast %66 : vector<1x1x8xf32> to vector<4x8x8xf32>
    %68 = arith.addf %65, %67 : vector<4x8x8xf32>
    %cst_22 = arith.constant dense<0xFF800000> : vector<4x8xf32>
    %69 = vector.multi_reduction <maximumf>, %68, %cst_22 [2] : vector<4x8x8xf32> to vector<4x8xf32>
    %70 = vector.shape_cast %69 : vector<4x8xf32> to vector<4x8x1xf32>
    %71 = vector.broadcast %70 : vector<4x8x1xf32> to vector<4x8x8xf32>
    %72 = arith.subf %68, %71 : vector<4x8x8xf32>
    %73 = math.exp %72 : vector<4x8x8xf32>
    %cst_23 = arith.constant dense<0.000000e+00> : vector<4x8xf32>
    %74 = vector.multi_reduction <add>, %73, %cst_23 [2] : vector<4x8x8xf32> to vector<4x8xf32>
    %75 = vector.shape_cast %74 : vector<4x8xf32> to vector<4x8x1xf32>
    %76 = tpu.reciprocal %75 {approx = true} : vector<4x8x1xf32> -> vector<4x8x1xf32>
    %77 = vector.broadcast %76 : vector<4x8x1xf32> to vector<4x8x8xf32>
    %78 = arith.mulf %73, %77 : vector<4x8x8xf32>
    "tpu.trace_start"() <{level = 10 : i32, message = "hqk,hkd->hqd"}> : () -> ()
    %cst_24 = arith.constant dense<0.000000e+00> : vector<4x8x16xf32>
    %79 = tpu.matmul %78, %64, %cst_24 {dimension_numbers = #tpu.dot_dimension_numbers<[2], [1], [1], [2], [0, 0, 0, 1, 1, 2], [0], [0]>} : vector<4x8x8xf32>, vector<4x8x16xf32>, vector<4x8x16xf32> -> vector<4x8x16xf32>
    "tpu.trace_stop"() : () -> ()
    %c0_25 = arith.constant 0 : index
    %c0_26 = arith.constant 0 : index
    %c0_27 = arith.constant 0 : index
    %c0_28 = arith.constant 0 : index
    %80 = vector.load %arg8[%c0_25, %c0_26, %c0_27, %c0_28] : memref<1x4x16x64xf32, #tpu.memory_space<vmem>>, vector<1x4x16x64xf32>
    %81 = vector.shape_cast %80 : vector<1x4x16x64xf32> to vector<4x16x64xf32>
    "tpu.trace_start"() <{level = 10 : i32, message = "hqd,hdm->hqm"}> : () -> ()
    %cst_29 = arith.constant dense<0.000000e+00> : vector<4x8x64xf32>
    %82 = tpu.matmul %79, %81, %cst_29 {dimension_numbers = #tpu.dot_dimension_numbers<[2], [1], [1], [2], [0, 0, 0, 1, 1, 2], [0], [0]>} : vector<4x8x16xf32>, vector<4x16x64xf32>, vector<4x8x64xf32> -> vector<4x8x64xf32>
    "tpu.trace_stop"() : () -> ()
    %cst_30 = arith.constant dense<0.000000e+00> : vector<8x64xf32>
    %83 = vector.multi_reduction <add>, %82, %cst_30 [0] : vector<4x8x64xf32> to vector<8x64xf32>
    %c0_31 = arith.constant 0 : index
    %c0_32 = arith.constant 0 : index
    %c0_33 = arith.constant 0 : index
    %84 = vector.load %arg9[%c0_31, %c0_32, %c0_33] : memref<1x1x64xf32, #tpu.memory_space<vmem>>, vector<1x1x64xf32>
    %85 = vector.shape_cast %84 : vector<1x1x64xf32> to vector<1x64xf32>
    %86 = vector.broadcast %85 : vector<1x64xf32> to vector<8x64xf32>
    %87 = arith.addf %83, %86 : vector<8x64xf32>
    %88 = arith.addf %87, %23 : vector<8x64xf32>
    %cst_34 = arith.constant dense<0.000000e+00> : vector<8xf32>
    %89 = vector.multi_reduction <add>, %88, %cst_34 [1] : vector<8x64xf32> to vector<8xf32>
    %90 = vector.shape_cast %89 : vector<8xf32> to vector<8x1xf32>
    %cst_35 = arith.constant 1.562500e-02 : f32
    %91 = vector.broadcast %cst_35 : f32 to vector<8x1xf32>
    %92 = arith.mulf %90, %91 : vector<8x1xf32>
    %93 = vector.broadcast %92 : vector<8x1xf32> to vector<8x64xf32>
    %94 = arith.subf %88, %93 : vector<8x64xf32>
    %95 = arith.mulf %94, %94 : vector<8x64xf32>
    %cst_36 = arith.constant dense<0.000000e+00> : vector<8xf32>
    %96 = vector.multi_reduction <add>, %95, %cst_36 [1] : vector<8x64xf32> to vector<8xf32>
    %97 = vector.shape_cast %96 : vector<8xf32> to vector<8x1xf32>
    %cst_37 = arith.constant 1.562500e-02 : f32
    %98 = vector.broadcast %cst_37 : f32 to vector<8x1xf32>
    %99 = arith.mulf %97, %98 : vector<8x1xf32>
    %cst_38 = arith.constant 9.99999974E-6 : f32
    %100 = vector.broadcast %cst_38 : f32 to vector<8x1xf32>
    %101 = arith.addf %99, %100 : vector<8x1xf32>
    %102 = math.rsqrt %101 : vector<8x1xf32>
    %103 = vector.broadcast %102 : vector<8x1xf32> to vector<8x64xf32>
    %104 = arith.mulf %94, %103 : vector<8x64xf32>
    %c0_39 = arith.constant 0 : index
    %c0_40 = arith.constant 0 : index
    %c0_41 = arith.constant 0 : index
    %105 = vector.load %arg10[%c0_39, %c0_40, %c0_41] : memref<1x64x128xf32, #tpu.memory_space<vmem>>, vector<1x64x128xf32>
    %106 = vector.shape_cast %105 : vector<1x64x128xf32> to vector<64x128xf32>
    %cst_42 = arith.constant dense<0.000000e+00> : vector<8x128xf32>
    %107 = tpu.matmul %104, %106, %cst_42 {dimension_numbers = #tpu.dot_dimension_numbers<[1], [0], [0], [1], [0, 0, 1, 1], [], []>} : vector<8x64xf32>, vector<64x128xf32>, vector<8x128xf32> -> vector<8x128xf32>
    %c0_43 = arith.constant 0 : index
    %c0_44 = arith.constant 0 : index
    %c0_45 = arith.constant 0 : index
    %108 = vector.load %arg11[%c0_43, %c0_44, %c0_45] : memref<1x1x128xf32, #tpu.memory_space<vmem>>, vector<1x1x128xf32>
    %109 = vector.shape_cast %108 : vector<1x1x128xf32> to vector<1x128xf32>
    %110 = vector.broadcast %109 : vector<1x128xf32> to vector<8x128xf32>
    %111 = arith.addf %107, %110 : vector<8x128xf32>
    %cst_46 = arith.constant 5.000000e-01 : f32
    %112 = vector.broadcast %cst_46 : f32 to vector<8x128xf32>
    %113 = arith.mulf %112, %111 : vector<8x128xf32>
    %cst_47 = arith.constant 4.471500e-02 : f32
    %114 = vector.broadcast %cst_47 : f32 to vector<8x128xf32>
    %115 = arith.mulf %114, %111 : vector<8x128xf32>
    %116 = arith.mulf %115, %111 : vector<8x128xf32>
    %117 = arith.mulf %116, %111 : vector<8x128xf32>
    %118 = arith.addf %111, %117 : vector<8x128xf32>
    %cst_48 = arith.constant 0.797884583 : f32
    %119 = vector.broadcast %cst_48 : f32 to vector<8x128xf32>
    %120 = arith.mulf %119, %118 : vector<8x128xf32>
    %121 = math.tanh %120 : vector<8x128xf32>
    %cst_49 = arith.constant 1.000000e+00 : f32
    %122 = vector.broadcast %cst_49 : f32 to vector<8x128xf32>
    %123 = arith.addf %122, %121 : vector<8x128xf32>
    %124 = arith.mulf %113, %123 : vector<8x128xf32>
    %c0_50 = arith.constant 0 : index
    %c0_51 = arith.constant 0 : index
    %c0_52 = arith.constant 0 : index
    %125 = vector.load %arg12[%c0_50, %c0_51, %c0_52] : memref<1x128x64xf32, #tpu.memory_space<vmem>>, vector<1x128x64xf32>
    %126 = vector.shape_cast %125 : vector<1x128x64xf32> to vector<128x64xf32>
    %cst_53 = arith.constant dense<0.000000e+00> : vector<8x64xf32>
    %127 = tpu.matmul %124, %126, %cst_53 {dimension_numbers = #tpu.dot_dimension_numbers<[1], [0], [0], [1], [0, 0, 1, 1], [], []>} : vector<8x128xf32>, vector<128x64xf32>, vector<8x64xf32> -> vector<8x64xf32>
    %c0_54 = arith.constant 0 : index
    %c0_55 = arith.constant 0 : index
    %c0_56 = arith.constant 0 : index
    %128 = vector.load %arg13[%c0_54, %c0_55, %c0_56] : memref<1x1x64xf32, #tpu.memory_space<vmem>>, vector<1x1x64xf32>
    %129 = vector.shape_cast %128 : vector<1x1x64xf32> to vector<1x64xf32>
    %130 = vector.broadcast %129 : vector<1x64xf32> to vector<8x64xf32>
    %131 = arith.addf %127, %130 : vector<8x64xf32>
    %c0_57 = arith.constant 0 : index
    %c0_58 = arith.constant 0 : index
    %c0_59 = arith.constant 0 : index
    %132 = vector.load %arg14[%c0_57, %c0_58, %c0_59] : memref<1x8x64xf32, #tpu.memory_space<vmem>>, vector<1x8x64xf32>
    %133 = vector.shape_cast %132 : vector<1x8x64xf32> to vector<8x64xf32>
    %134 = vector.shape_cast %131 : vector<8x64xf32> to vector<1x8x64xf32>
    tpu.vector_store %arg14[%c0_57, %c0_58, %c0_59], %134 {strides = array<i32>} : memref<1x8x64xf32, #tpu.memory_space<vmem>>, vector<1x8x64xf32>,
    return
  }
  func.func @transform_0(%arg0: i32, %arg1: i32) -> (i32, i32, i32) {
    %c0_i32 = arith.constant 0 : i32
    %c0_i32_0 = arith.constant 0 : i32
    %c0_i32_1 = arith.constant 0 : i32
    return %arg0, %c0_i32, %c0_i32_0 : i32, i32, i32
  }
  func.func @transform_1(%arg0: i32, %arg1: i32) -> (i32, i32, i32) {
    %c0_i32 = arith.constant 0 : i32
    %c0_i32_0 = arith.constant 0 : i32
    %c0_i32_1 = arith.constant 0 : i32
    return %arg0, %c0_i32, %c0_i32_0 : i32, i32, i32
  }
  func.func @transform_2(%arg0: i32, %arg1: i32) -> (i32, i32) {
    %c0_i32 = arith.constant 0 : i32
    %c0_i32_0 = arith.constant 0 : i32
    %c0_i32_1 = arith.constant 0 : i32
    return %c0_i32, %c0_i32_0 : i32, i32
  }
  func.func @transform_3(%arg0: i32, %arg1: i32) -> (i32, i32) {
    %c0_i32 = arith.constant 0 : i32
    %c0_i32_0 = arith.constant 0 : i32
    %c0_i32_1 = arith.constant 0 : i32
    return %c0_i32, %c0_i32_0 : i32, i32
  }
  func.func @transform_4(%arg0: i32, %arg1: i32) -> (i32, i32, i32) {
    %c0_i32 = arith.constant 0 : i32
    %c0_i32_0 = arith.constant 0 : i32
    %c0_i32_1 = arith.constant 0 : i32
    return %arg1, %c0_i32, %c0_i32_0 : i32, i32, i32
  }
  func.func @transform_5(%arg0: i32, %arg1: i32) -> (i32, i32, i32) {
    %c0_i32 = arith.constant 0 : i32
    %c0_i32_0 = arith.constant 0 : i32
    %c0_i32_1 = arith.constant 0 : i32
    return %arg1, %c0_i32, %c0_i32_0 : i32, i32, i32
  }
  func.func @transform_6(%arg0: i32, %arg1: i32) -> (i32, i32, i32, i32) {
    %c0_i32 = arith.constant 0 : i32
    %c0_i32_0 = arith.constant 0 : i32
    %c0_i32_1 = arith.constant 0 : i32
    %c0_i32_2 = arith.constant 0 : i32
    return %arg1, %c0_i32, %c0_i32_0, %c0_i32_1 : i32, i32, i32, i32
  }
  func.func @transform_7(%arg0: i32, %arg1: i32) -> (i32, i32, i32) {
    %c0_i32 = arith.constant 0 : i32
    %c0_i32_0 = arith.constant 0 : i32
    %c0_i32_1 = arith.constant 0 : i32
    return %arg1, %c0_i32, %c0_i32_0 : i32, i32, i32
  }
  func.func @transform_8(%arg0: i32, %arg1: i32) -> (i32, i32, i32) {
    %c0_i32 = arith.constant 0 : i32
    %c0_i32_0 = arith.constant 0 : i32
    %c0_i32_1 = arith.constant 0 : i32
    return %arg1, %c0_i32, %c0_i32_0 : i32, i32, i32
  }
  func.func @transform_9(%arg0: i32, %arg1: i32) -> (i32, i32, i32) {
    %c0_i32 = arith.constant 0 : i32
    %c0_i32_0 = arith.constant 0 : i32
    %c0_i32_1 = arith.constant 0 : i32
    return %arg1, %c0_i32, %c0_i32_0 : i32, i32, i32
  }
  func.func @transform_10(%arg0: i32, %arg1: i32) -> (i32, i32, i32) {
    %c0_i32 = arith.constant 0 : i32
    %c0_i32_0 = arith.constant 0 : i32
    %c0_i32_1 = arith.constant 0 : i32
    return %arg1, %c0_i32, %c0_i32_0 : i32, i32, i32
  }
  func.func @transform_11(%arg0: i32, %arg1: i32) -> (i32, i32, i32) {
    %c0_i32 = arith.constant 0 : i32
    %c0_i32_0 = arith.constant 0 : i32
    %c0_i32_1 = arith.constant 0 : i32
    return %arg1, %c0_i32, %c0_i32_0 : i32, i32, i32
  }
  func.func @transform_12(%arg0: i32, %arg1: i32) -> (i32, i32, i32) {
    %c0_i32 = arith.constant 0 : i32
    %c0_i32_0 = arith.constant 0 : i32
    %c0_i32_1 = arith.constant 0 : i32
    return %arg0, %c0_i32, %c0_i32_0 : i32, i32, i32
  }
}

module attributes {stable_mosaic.version = 11 : i64} {
  func.func @head_kernel(%arg0: i32, %arg1: memref<1x1x64xf32, #tpu.memory_space<vmem>>, %arg2: memref<1x3x64xf32, #tpu.memory_space<vmem>>, %arg3: memref<64x64xf32, #tpu.memory_space<vmem>>, %arg4: memref<1x64xf32, #tpu.memory_space<vmem>>, %arg5: memref<64x128xf32, #tpu.memory_space<vmem>>, %arg6: memref<1x128xf32, #tpu.memory_space<vmem>>, %arg7: memref<64x64xf32, #tpu.memory_space<vmem>>, %arg8: memref<1x64xf32, #tpu.memory_space<vmem>>, %arg9: memref<1x64xf32, #tpu.memory_space<vmem>>, %arg10: memref<1x64xf32, #tpu.memory_space<vmem>>, %arg11: memref<64x128xf32, #tpu.memory_space<vmem>>, %arg12: memref<1x128xf32, #tpu.memory_space<vmem>>, %arg13: memref<1x1x128xf32, #tpu.memory_space<vmem>>, %arg14: memref<1x3x128xf32, #tpu.memory_space<vmem>>) attributes {dimension_semantics = [#tpu.dimension_semantics<parallel>], iteration_bounds = array<i64: 2>, scalar_prefetch = 0 : i64, scratch_operands = 0 : i64, tpu.core_type = #tpu.core_type<tc>, window_params = [{transform_indices = @transform_0, window_bounds = array<i64: 1, 1, 64>}, {transform_indices = @transform_1, window_bounds = array<i64: 1, 3, 64>}, {pipeline_mode = #tpu.pipeline_mode<synchronous>, transform_indices = @transform_2, window_bounds = array<i64: 64, 64>}, {pipeline_mode = #tpu.pipeline_mode<synchronous>, transform_indices = @transform_3, window_bounds = array<i64: 1, 64>}, {pipeline_mode = #tpu.pipeline_mode<synchronous>, transform_indices = @transform_4, window_bounds = array<i64: 64, 128>}, {pipeline_mode = #tpu.pipeline_mode<synchronous>, transform_indices = @transform_5, window_bounds = array<i64: 1, 128>}, {pipeline_mode = #tpu.pipeline_mode<synchronous>, transform_indices = @transform_6, window_bounds = array<i64: 64, 64>}, {pipeline_mode = #tpu.pipeline_mode<synchronous>, transform_indices = @transform_7, window_bounds = array<i64: 1, 64>}, {pipeline_mode = #tpu.pipeline_mode<synchronous>, transform_indices = @transform_8, window_bounds = array<i64: 1, 64>}, {pipeline_mode = #tpu.pipeline_mode<synchronous>, transform_indices = @transform_9, window_bounds = array<i64: 1, 64>}, {pipeline_mode = #tpu.pipeline_mode<synchronous>, transform_indices = @transform_10, window_bounds = array<i64: 64, 128>}, {pipeline_mode = #tpu.pipeline_mode<synchronous>, transform_indices = @transform_11, window_bounds = array<i64: 1, 128>}, {transform_indices = @transform_12, window_bounds = array<i64: 1, 1, 128>}, {transform_indices = @transform_13, window_bounds = array<i64: 1, 3, 128>}]} {
    %c0 = arith.constant 0 : index
    %c0_0 = arith.constant 0 : index
    %c0_1 = arith.constant 0 : index
    %0 = vector.load %arg1[%c0, %c0_0, %c0_1] : memref<1x1x64xf32, #tpu.memory_space<vmem>>, vector<1x1x64xf32>
    %1 = vector.shape_cast %0 : vector<1x1x64xf32> to vector<1x64xf32>
    %c0_2 = arith.constant 0 : index
    %c0_3 = arith.constant 0 : index
    %2 = vector.load %arg3[%c0_2, %c0_3] : memref<64x64xf32, #tpu.memory_space<vmem>>, vector<64x64xf32>
    %cst = arith.constant dense<0.000000e+00> : vector<1x64xf32>
    %3 = tpu.matmul %1, %2, %cst {dimension_numbers = #tpu.dot_dimension_numbers<[1], [0], [0], [1], [0, 0, 1, 1], [], []>} : vector<1x64xf32>, vector<64x64xf32>, vector<1x64xf32> -> vector<1x64xf32>
    %c0_4 = arith.constant 0 : index
    %c0_5 = arith.constant 0 : index
    %4 = vector.load %arg4[%c0_4, %c0_5] : memref<1x64xf32, #tpu.memory_space<vmem>>, vector<1x64xf32>
    %5 = arith.addf %3, %4 : vector<1x64xf32>
    %6 = math.tanh %5 : vector<1x64xf32>
    %c0_6 = arith.constant 0 : index
    %c0_7 = arith.constant 0 : index
    %7 = vector.load %arg5[%c0_6, %c0_7] : memref<64x128xf32, #tpu.memory_space<vmem>>, vector<64x128xf32>
    %cst_8 = arith.constant dense<0.000000e+00> : vector<1x128xf32>
    %8 = tpu.matmul %6, %7, %cst_8 {dimension_numbers = #tpu.dot_dimension_numbers<[1], [0], [0], [1], [0, 0, 1, 1], [], []>} : vector<1x64xf32>, vector<64x128xf32>, vector<1x128xf32> -> vector<1x128xf32>
    %c0_9 = arith.constant 0 : index
    %c0_10 = arith.constant 0 : index
    %9 = vector.load %arg6[%c0_9, %c0_10] : memref<1x128xf32, #tpu.memory_space<vmem>>, vector<1x128xf32>
    %10 = arith.addf %8, %9 : vector<1x128xf32>
    %c0_11 = arith.constant 0 : index
    %c0_12 = arith.constant 0 : index
    %c0_13 = arith.constant 0 : index
    %11 = vector.load %arg13[%c0_11, %c0_12, %c0_13] : memref<1x1x128xf32, #tpu.memory_space<vmem>>, vector<1x1x128xf32>
    %12 = vector.shape_cast %11 : vector<1x1x128xf32> to vector<1x128xf32>
    %13 = vector.shape_cast %10 : vector<1x128xf32> to vector<1x1x128xf32>
    tpu.vector_store %arg13[%c0_11, %c0_12, %c0_13], %13 {strides = array<i32>} : memref<1x1x128xf32, #tpu.memory_space<vmem>>, vector<1x1x128xf32>,
    %c0_14 = arith.constant 0 : index
    %c0_15 = arith.constant 0 : index
    %c0_16 = arith.constant 0 : index
    %14 = vector.load %arg2[%c0_14, %c0_15, %c0_16] : memref<1x3x64xf32, #tpu.memory_space<vmem>>, vector<1x3x64xf32>
    %15 = vector.shape_cast %14 : vector<1x3x64xf32> to vector<3x64xf32>
    %c0_17 = arith.constant 0 : index
    %c0_18 = arith.constant 0 : index
    %16 = vector.load %arg7[%c0_17, %c0_18] : memref<64x64xf32, #tpu.memory_space<vmem>>, vector<64x64xf32>
    %cst_19 = arith.constant dense<0.000000e+00> : vector<3x64xf32>
    %17 = tpu.matmul %15, %16, %cst_19 {dimension_numbers = #tpu.dot_dimension_numbers<[1], [0], [0], [1], [0, 0, 1, 1], [], []>} : vector<3x64xf32>, vector<64x64xf32>, vector<3x64xf32> -> vector<3x64xf32>
    %c0_20 = arith.constant 0 : index
    %c0_21 = arith.constant 0 : index
    %18 = vector.load %arg8[%c0_20, %c0_21] : memref<1x64xf32, #tpu.memory_space<vmem>>, vector<1x64xf32>
    %19 = vector.broadcast %18 : vector<1x64xf32> to vector<3x64xf32>
    %20 = arith.addf %17, %19 : vector<3x64xf32>
    %cst_22 = arith.constant 5.000000e-01 : f32
    %21 = vector.broadcast %cst_22 : f32 to vector<3x64xf32>
    %22 = arith.mulf %21, %20 : vector<3x64xf32>
    %cst_23 = arith.constant 4.471500e-02 : f32
    %23 = vector.broadcast %cst_23 : f32 to vector<3x64xf32>
    %24 = arith.mulf %23, %20 : vector<3x64xf32>
    %25 = arith.mulf %24, %20 : vector<3x64xf32>
    %26 = arith.mulf %25, %20 : vector<3x64xf32>
    %27 = arith.addf %20, %26 : vector<3x64xf32>
    %cst_24 = arith.constant 0.797884583 : f32
    %28 = vector.broadcast %cst_24 : f32 to vector<3x64xf32>
    %29 = arith.mulf %28, %27 : vector<3x64xf32>
    %30 = math.tanh %29 : vector<3x64xf32>
    %cst_25 = arith.constant 1.000000e+00 : f32
    %31 = vector.broadcast %cst_25 : f32 to vector<3x64xf32>
    %32 = arith.addf %31, %30 : vector<3x64xf32>
    %33 = arith.mulf %22, %32 : vector<3x64xf32>
    %c0_26 = arith.constant 0 : index
    %c0_27 = arith.constant 0 : index
    %34 = vector.load %arg9[%c0_26, %c0_27] : memref<1x64xf32, #tpu.memory_space<vmem>>, vector<1x64xf32>
    %c0_28 = arith.constant 0 : index
    %c0_29 = arith.constant 0 : index
    %35 = vector.load %arg10[%c0_28, %c0_29] : memref<1x64xf32, #tpu.memory_space<vmem>>, vector<1x64xf32>
    %cst_30 = arith.constant dense<0.000000e+00> : vector<3xf32>
    %36 = vector.multi_reduction <add>, %33, %cst_30 [1] : vector<3x64xf32> to vector<3xf32>
    %37 = vector.shape_cast %36 : vector<3xf32> to vector<3x1xf32>
    %cst_31 = arith.constant 1.562500e-02 : f32
    %38 = vector.broadcast %cst_31 : f32 to vector<3x1xf32>
    %39 = arith.mulf %37, %38 : vector<3x1xf32>
    %40 = vector.broadcast %39 : vector<3x1xf32> to vector<3x64xf32>
    %41 = arith.subf %33, %40 : vector<3x64xf32>
    %42 = arith.mulf %41, %41 : vector<3x64xf32>
    %cst_32 = arith.constant dense<0.000000e+00> : vector<3xf32>
    %43 = vector.multi_reduction <add>, %42, %cst_32 [1] : vector<3x64xf32> to vector<3xf32>
    %44 = vector.shape_cast %43 : vector<3xf32> to vector<3x1xf32>
    %cst_33 = arith.constant 1.562500e-02 : f32
    %45 = vector.broadcast %cst_33 : f32 to vector<3x1xf32>
    %46 = arith.mulf %44, %45 : vector<3x1xf32>
    %cst_34 = arith.constant 9.99999974E-6 : f32
    %47 = vector.broadcast %cst_34 : f32 to vector<3x1xf32>
    %48 = arith.addf %46, %47 : vector<3x1xf32>
    %49 = math.rsqrt %48 : vector<3x1xf32>
    %50 = vector.broadcast %49 : vector<3x1xf32> to vector<3x64xf32>
    %51 = arith.mulf %41, %50 : vector<3x64xf32>
    %52 = vector.broadcast %34 : vector<1x64xf32> to vector<3x64xf32>
    %53 = arith.mulf %51, %52 : vector<3x64xf32>
    %54 = vector.broadcast %35 : vector<1x64xf32> to vector<3x64xf32>
    %55 = arith.addf %53, %54 : vector<3x64xf32>
    %c0_35 = arith.constant 0 : index
    %c0_36 = arith.constant 0 : index
    %56 = vector.load %arg11[%c0_35, %c0_36] : memref<64x128xf32, #tpu.memory_space<vmem>>, vector<64x128xf32>
    %cst_37 = arith.constant dense<0.000000e+00> : vector<3x128xf32>
    %57 = tpu.matmul %55, %56, %cst_37 {dimension_numbers = #tpu.dot_dimension_numbers<[1], [0], [0], [1], [0, 0, 1, 1], [], []>} : vector<3x64xf32>, vector<64x128xf32>, vector<3x128xf32> -> vector<3x128xf32>
    %c0_38 = arith.constant 0 : index
    %c0_39 = arith.constant 0 : index
    %58 = vector.load %arg12[%c0_38, %c0_39] : memref<1x128xf32, #tpu.memory_space<vmem>>, vector<1x128xf32>
    %59 = vector.broadcast %58 : vector<1x128xf32> to vector<3x128xf32>
    %60 = arith.addf %57, %59 : vector<3x128xf32>
    %c0_40 = arith.constant 0 : index
    %c0_41 = arith.constant 0 : index
    %c0_42 = arith.constant 0 : index
    %61 = vector.load %arg14[%c0_40, %c0_41, %c0_42] : memref<1x3x128xf32, #tpu.memory_space<vmem>>, vector<1x3x128xf32>
    %62 = vector.shape_cast %61 : vector<1x3x128xf32> to vector<3x128xf32>
    %63 = vector.shape_cast %60 : vector<3x128xf32> to vector<1x3x128xf32>
    tpu.vector_store %arg14[%c0_40, %c0_41, %c0_42], %63 {strides = array<i32>} : memref<1x3x128xf32, #tpu.memory_space<vmem>>, vector<1x3x128xf32>,
    return
  }
  func.func @transform_0(%arg0: i32) -> (i32, i32, i32) {
    %c0_i32 = arith.constant 0 : i32
    %c0_i32_0 = arith.constant 0 : i32
    %c0_i32_1 = arith.constant 0 : i32
    return %arg0, %c0_i32, %c0_i32_0 : i32, i32, i32
  }
  func.func @transform_1(%arg0: i32) -> (i32, i32, i32) {
    %c0_i32 = arith.constant 0 : i32
    %c0_i32_0 = arith.constant 0 : i32
    %c0_i32_1 = arith.constant 0 : i32
    return %arg0, %c0_i32, %c0_i32_0 : i32, i32, i32
  }
  func.func @transform_2(%arg0: i32) -> (i32, i32) {
    %c0_i32 = arith.constant 0 : i32
    %c0_i32_0 = arith.constant 0 : i32
    %c0_i32_1 = arith.constant 0 : i32
    return %c0_i32, %c0_i32_0 : i32, i32
  }
  func.func @transform_3(%arg0: i32) -> (i32, i32) {
    %c0_i32 = arith.constant 0 : i32
    %c0_i32_0 = arith.constant 0 : i32
    %c0_i32_1 = arith.constant 0 : i32
    return %c0_i32, %c0_i32_0 : i32, i32
  }
  func.func @transform_4(%arg0: i32) -> (i32, i32) {
    %c0_i32 = arith.constant 0 : i32
    %c0_i32_0 = arith.constant 0 : i32
    %c0_i32_1 = arith.constant 0 : i32
    return %c0_i32, %c0_i32_0 : i32, i32
  }
  func.func @transform_5(%arg0: i32) -> (i32, i32) {
    %c0_i32 = arith.constant 0 : i32
    %c0_i32_0 = arith.constant 0 : i32
    %c0_i32_1 = arith.constant 0 : i32
    return %c0_i32, %c0_i32_0 : i32, i32
  }
  func.func @transform_6(%arg0: i32) -> (i32, i32) {
    %c0_i32 = arith.constant 0 : i32
    %c0_i32_0 = arith.constant 0 : i32
    %c0_i32_1 = arith.constant 0 : i32
    return %c0_i32, %c0_i32_0 : i32, i32
  }
  func.func @transform_7(%arg0: i32) -> (i32, i32) {
    %c0_i32 = arith.constant 0 : i32
    %c0_i32_0 = arith.constant 0 : i32
    %c0_i32_1 = arith.constant 0 : i32
    return %c0_i32, %c0_i32_0 : i32, i32
  }
  func.func @transform_8(%arg0: i32) -> (i32, i32) {
    %c0_i32 = arith.constant 0 : i32
    %c0_i32_0 = arith.constant 0 : i32
    %c0_i32_1 = arith.constant 0 : i32
    return %c0_i32, %c0_i32_0 : i32, i32
  }
  func.func @transform_9(%arg0: i32) -> (i32, i32) {
    %c0_i32 = arith.constant 0 : i32
    %c0_i32_0 = arith.constant 0 : i32
    %c0_i32_1 = arith.constant 0 : i32
    return %c0_i32, %c0_i32_0 : i32, i32
  }
  func.func @transform_10(%arg0: i32) -> (i32, i32) {
    %c0_i32 = arith.constant 0 : i32
    %c0_i32_0 = arith.constant 0 : i32
    %c0_i32_1 = arith.constant 0 : i32
    return %c0_i32, %c0_i32_0 : i32, i32
  }
  func.func @transform_11(%arg0: i32) -> (i32, i32) {
    %c0_i32 = arith.constant 0 : i32
    %c0_i32_0 = arith.constant 0 : i32
    %c0_i32_1 = arith.constant 0 : i32
    return %c0_i32, %c0_i32_0 : i32, i32
  }
  func.func @transform_12(%arg0: i32) -> (i32, i32, i32) {
    %c0_i32 = arith.constant 0 : i32
    %c0_i32_0 = arith.constant 0 : i32
    %c0_i32_1 = arith.constant 0 : i32
    return %arg0, %c0_i32, %c0_i32_0 : i32, i32, i32
  }
  func.func @transform_13(%arg0: i32) -> (i32, i32, i32) {
    %c0_i32 = arith.constant 0 : i32
    %c0_i32_0 = arith.constant 0 : i32
    %c0_i32_1 = arith.constant 0 : i32
    return %arg0, %c0_i32, %c0_i32_0 : i32, i32, i32
  }
}

</mosaic_0001>

<llo_original>
// kernel: bert_forward.3
$region0: #{bert_forward.3}
  #allocation0 [shape = 'u32[]', space=smem, size = 0x4, offset = 0x4, fixed_abs, tag = 'smem constant byte address 0x4 - core index']
  #allocation1 [shape = 'u32[144,128]{1,0:T(1,128)}', space=vmem, size = 0x12000, scoped, tag = 'internal scratch']
  %s0 = inlined_call_operand.vmem [shape: f32[2,1,64], index: 0, kind: input, shape index: {}]
  %s1 = inlined_call_operand.vmem [shape: f32[2,3,64], index: 1, kind: input, shape index: {}]
  %s2 = inlined_call_operand.vmem [shape: f32[64,64], index: 2, kind: input, shape index: {}]
  %s3 = inlined_call_operand.vmem [shape: f32[1,64], index: 3, kind: input, shape index: {}]
  %s4 = inlined_call_operand.vmem [shape: f32[64,128], index: 4, kind: input, shape index: {}]
  %s5 = inlined_call_operand.vmem [shape: f32[1,128], index: 5, kind: input, shape index: {}]
  %s6 = inlined_call_operand.vmem [shape: f32[64,64], index: 6, kind: input, shape index: {}]
  %s7 = inlined_call_operand.vmem [shape: f32[1,64], index: 7, kind: input, shape index: {}]
  %s8 = inlined_call_operand.vmem [shape: f32[1,64], index: 8, kind: input, shape index: {}]
  %s9 = inlined_call_operand.vmem [shape: f32[1,64], index: 9, kind: input, shape index: {}]
  %s10 = inlined_call_operand.vmem [shape: f32[64,128], index: 10, kind: input, shape index: {}]
  %s11 = inlined_call_operand.vmem [shape: f32[1,128], index: 11, kind: input, shape index: {}]
  %s12 = inlined_call_operand.hbm [shape: f32[2,1,128], index: 12, kind: output, shape index: {0}]
  %s13 = inlined_call_operand.vmem [shape: f32[2,3,128], index: 13, kind: output, shape index: {1}]
  %14 = xla_tuple %s12, %s13
  %s15 = sld [smem:[#allocation0]]
  $region89: #{bert_forward.3} parent=0
    _
  %s17 = ssub.s32 1, %s15
  %s18 = scalar_select 0, %s17, %s15
  $region1: #{bert_forward.3} parent=0
    #allocation2 [shape = 'u8[1024]{0}', space=vmem, size = 0x400, scoped, tag = 'output window, operand 0']
    #allocation3 [shape = 's32[2]{0}', space=sflag, size = 0x8, scoped, tag = 'scoped memory for bert_forward.3']
    %19 = vsyncpa [#allocation3], 0
    %s20 = scalar_lea.sflag [#allocation3], 1
    %21 = vsyncpa %s20, 0
    loop: start=0, step=1, limit=4
    $region2: #{bert_forward.3} parent=1 // loop_pre_header
      _
    $region3: #{bert_forward.3} parent=1 // loop_header
      %s23 = sphi 0, %s27
      %p24 = scmp.ge.s32.totalorder %s23, 4
      %s33 = sphi 0, %s35
      %s36 = sphi 0, %s33
      %s37 = sphi 0, %s36
      %s53 = sphi 0, %s37
      %s59 = sphi 0, %s61
      %s62 = sphi 0, %s59
      %s63 = sphi 0, %s62
      %s79 = sphi 0, %s63
      %s83 = sphi 0, %s83
      %s85 = sphi 0, %s83
      %s86 = sphi 0, %s85
      %s100 = sphi 0, %s86
      %s104 = sphi 0, %s104
      %s106 = sphi 0, %s104
      %s107 = sphi 0, %s106
      %s121 = sphi 0, %s107
      %s125 = sphi 0, %s125
      %s127 = sphi 0, %s125
      %s128 = sphi 0, %s127
      %s142 = sphi 0, %s128
      %s146 = sphi 0, %s146
      %s148 = sphi 0, %s146
      %s149 = sphi 0, %s148
      %s163 = sphi 0, %s149
      %s167 = sphi 0, %s167
      %s169 = sphi 0, %s167
      %s170 = sphi 0, %s169
      %s184 = sphi 0, %s170
      %s188 = sphi 0, %s188
      %s190 = sphi 0, %s188
      %s191 = sphi 0, %s190
      %s205 = sphi 0, %s191
      %s209 = sphi 0, %s209
      %s211 = sphi 0, %s209
      %s212 = sphi 0, %s211
      %s226 = sphi 0, %s212
      %s230 = sphi 0, %s230
      %s232 = sphi 0, %s230
      %s233 = sphi 0, %s232
      %s247 = sphi 0, %s233
      %s251 = sphi 0, %s251
      %s253 = sphi 0, %s251
      %s254 = sphi 0, %s253
      %s268 = sphi 0, %s254
      %s272 = sphi 0, %s272
      %s274 = sphi 0, %s272
      %s275 = sphi 0, %s274
      %s289 = sphi 0, %s275
      %s295 = sphi 0, %s297
      %s298 = sphi 0, %s295
      %s299 = sphi 0, %s298
      %s315 = sphi 0, %s299
      %s321 = sphi 0, %s323
      %s324 = sphi 0, %s321
      %s325 = sphi 0, %s324
      %s341 = sphi 0, %s325
    $region4: #{bert_forward.3} parent=1 // loop_header_branch
      %26 = sbr.rel (%p24) target = $region8
    $region5: #{bert_forward.3} parent=1 // loop_body
      %s28 = ssub.s32 %s23, 1
      %s29 = ssub.s32 %s23, 2
      %s30 = sadd.s32 %s23, 1
      %s31 = ssub.s32 %s23, %s30
      %p32 = scmp.eq.s32.totalorder %s31, 0
      %s34 = sadd.s32 %s33, 1
      %s35 = scalar_select %p32, %s33, %s34
      %p38 = pneg %p32
      %p39 = scmp.eq.s32.totalorder %s23, 1
      %p40 = por %p38, %p39
      %p41 = scmp.ne.s32.totalorder %s33, %s36
      %p42 = scmp.eq.s32.totalorder %s23, 0
      %p43 = por %p41, %p42
      %p44 = scmp.ne.s32.totalorder %s33, %s36
      %p45 = scmp.eq.s32.totalorder %s28, 1
      %p46 = por %p44, %p45
      %p47 = scmp.ne.s32.totalorder %s36, %s37
      %p48 = scmp.eq.s32.totalorder %s28, 0
      %p49 = por %p47, %p48
      %p50 = scmp.ne.s32.totalorder %s36, %s37
      %p51 = scmp.eq.s32.totalorder %s29, 1
      %p52 = por %p50, %p51
      %p54 = scmp.ne.s32.totalorder %s37, %s53
      %p55 = scmp.eq.s32.totalorder %s29, 0
      %p56 = por %p54, %p55
      %s57 = ssub.s32 %s23, %s30
      %p58 = scmp.eq.s32.totalorder %s57, 0
      %s60 = sadd.s32 %s59, 1
      %s61 = scalar_select %p58, %s59, %s60
      %p64 = pneg %p58
      %p65 = scmp.eq.s32.totalorder %s23, 1
      %p66 = por %p64, %p65
      %p67 = scmp.ne.s32.totalorder %s59, %s62
      %p68 = scmp.eq.s32.totalorder %s23, 0
      %p69 = por %p67, %p68
      %p70 = scmp.ne.s32.totalorder %s59, %s62
      %p71 = scmp.eq.s32.totalorder %s28, 1
      %p72 = por %p70, %p71
      %p73 = scmp.ne.s32.totalorder %s62, %s63
      %p74 = scmp.eq.s32.totalorder %s28, 0
      %p75 = por %p73, %p74
      %p76 = scmp.ne.s32.totalorder %s62, %s63
      %p77 = scmp.eq.s32.totalorder %s29, 1
      %p78 = por %p76, %p77
      %p80 = scmp.ne.s32.totalorder %s63, %s79
      %p81 = scmp.eq.s32.totalorder %s29, 0
      %p82 = por %p80, %p81
      %s84 = sadd.s32 %s83, 1
      %p87 = scmp.eq.s32.totalorder %s23, 1
      %p88 = scmp.ne.s32.totalorder %s83, %s85
      %p89 = scmp.eq.s32.totalorder %s23, 0
      %p90 = por %p88, %p89
      %p91 = scmp.ne.s32.totalorder %s83, %s85
      %p92 = scmp.eq.s32.totalorder %s28, 1
      %p93 = por %p91, %p92
      %p94 = scmp.ne.s32.totalorder %s85, %s86
      %p95 = scmp.eq.s32.totalorder %s28, 0
      %p96 = por %p94, %p95
      %p97 = scmp.ne.s32.totalorder %s85, %s86
      %p98 = scmp.eq.s32.totalorder %s29, 1
      %p99 = por %p97, %p98
      %p101 = scmp.ne.s32.totalorder %s86, %s100
      %p102 = scmp.eq.s32.totalorder %s29, 0
      %p103 = por %p101, %p102
      %s105 = sadd.s32 %s104, 1
      %p108 = scmp.eq.s32.totalorder %s23, 1
      %p109 = scmp.ne.s32.totalorder %s104, %s106
      %p110 = scmp.eq.s32.totalorder %s23, 0
      %p111 = por %p109, %p110
      %p112 = scmp.ne.s32.totalorder %s104, %s106
      %p113 = scmp.eq.s32.totalorder %s28, 1
      %p114 = por %p112, %p113
      %p115 = scmp.ne.s32.totalorder %s106, %s107
      %p116 = scmp.eq.s32.totalorder %s28, 0
      %p117 = por %p115, %p116
      %p118 = scmp.ne.s32.totalorder %s106, %s107
      %p119 = scmp.eq.s32.totalorder %s29, 1
      %p120 = por %p118, %p119
      %p122 = scmp.ne.s32.totalorder %s107, %s121
      %p123 = scmp.eq.s32.totalorder %s29, 0
      %p124 = por %p122, %p123
      %s126 = sadd.s32 %s125, 1
      %p129 = scmp.eq.s32.totalorder %s23, 1
      %p130 = scmp.ne.s32.totalorder %s125, %s127
      %p131 = scmp.eq.s32.totalorder %s23, 0
      %p132 = por %p130, %p131
      %p133 = scmp.ne.s32.totalorder %s125, %s127
      %p134 = scmp.eq.s32.totalorder %s28, 1
      %p135 = por %p133, %p134
      %p136 = scmp.ne.s32.totalorder %s127, %s128
      %p137 = scmp.eq.s32.totalorder %s28, 0
      %p138 = por %p136, %p137
      %p139 = scmp.ne.s32.totalorder %s127, %s128
      %p140 = scmp.eq.s32.totalorder %s29, 1
      %p141 = por %p139, %p140
      %p143 = scmp.ne.s32.totalorder %s128, %s142
      %p144 = scmp.eq.s32.totalorder %s29, 0
      %p145 = por %p143, %p144
      %s147 = sadd.s32 %s146, 1
      %p150 = scmp.eq.s32.totalorder %s23, 1
      %p151 = scmp.ne.s32.totalorder %s146, %s148
      %p152 = scmp.eq.s32.totalorder %s23, 0
      %p153 = por %p151, %p152
      %p154 = scmp.ne.s32.totalorder %s146, %s148
      %p155 = scmp.eq.s32.totalorder %s28, 1
      %p156 = por %p154, %p155
      %p157 = scmp.ne.s32.totalorder %s148, %s149
      %p158 = scmp.eq.s32.totalorder %s28, 0
      %p159 = por %p157, %p158
      %p160 = scmp.ne.s32.totalorder %s148, %s149
      %p161 = scmp.eq.s32.totalorder %s29, 1
      %p162 = por %p160, %p161
      %p164 = scmp.ne.s32.totalorder %s149, %s163
      %p165 = scmp.eq.s32.totalorder %s29, 0
      %p166 = por %p164, %p165
      %s168 = sadd.s32 %s167, 1
      %p171 = scmp.eq.s32.totalorder %s23, 1
      %p172 = scmp.ne.s32.totalorder %s167, %s169
      %p173 = scmp.eq.s32.totalorder %s23, 0
      %p174 = por %p172, %p173
      %p175 = scmp.ne.s32.totalorder %s167, %s169
      %p176 = scmp.eq.s32.totalorder %s28, 1
      %p177 = por %p175, %p176
      %p178 = scmp.ne.s32.totalorder %s169, %s170
      %p179 = scmp.eq.s32.totalorder %s28, 0
      %p180 = por %p178, %p179
      %p181 = scmp.ne.s32.totalorder %s169, %s170
      %p182 = scmp.eq.s32.totalorder %s29, 1
      %p183 = por %p181, %p182
      %p185 = scmp.ne.s32.totalorder %s170, %s184
      %p186 = scmp.eq.s32.totalorder %s29, 0
      %p187 = por %p185, %p186
      %s189 = sadd.s32 %s188, 1
      %p192 = scmp.eq.s32.totalorder %s23, 1
      %p193 = scmp.ne.s32.totalorder %s188, %s190
      %p194 = scmp.eq.s32.totalorder %s23, 0
      %p195 = por %p193, %p194
      %p196 = scmp.ne.s32.totalorder %s188, %s190
      %p197 = scmp.eq.s32.totalorder %s28, 1
      %p198 = por %p196, %p197
      %p199 = scmp.ne.s32.totalorder %s190, %s191
      %p200 = scmp.eq.s32.totalorder %s28, 0
      %p201 = por %p199, %p200
      %p202 = scmp.ne.s32.totalorder %s190, %s191
      %p203 = scmp.eq.s32.totalorder %s29, 1
      %p204 = por %p202, %p203
      %p206 = scmp.ne.s32.totalorder %s191, %s205
      %p207 = scmp.eq.s32.totalorder %s29, 0
      %p208 = por %p206, %p207
      %s210 = sadd.s32 %s209, 1
      %p213 = scmp.eq.s32.totalorder %s23, 1
      %p214 = scmp.ne.s32.totalorder %s209, %s211
      %p215 = scmp.eq.s32.totalorder %s23, 0
      %p216 = por %p214, %p215
      %p217 = scmp.ne.s32.totalorder %s209, %s211
      %p218 = scmp.eq.s32.totalorder %s28, 1
      %p219 = por %p217, %p218
      %p220 = scmp.ne.s32.totalorder %s211, %s212
      %p221 = scmp.eq.s32.totalorder %s28, 0
      %p222 = por %p220, %p221
      %p223 = scmp.ne.s32.totalorder %s211, %s212
      %p224 = scmp.eq.s32.totalorder %s29, 1
      %p225 = por %p223, %p224
      %p227 = scmp.ne.s32.totalorder %s212, %s226
      %p228 = scmp.eq.s32.totalorder %s29, 0
      %p229 = por %p227, %p228
      %s231 = sadd.s32 %s230, 1
      %p234 = scmp.eq.s32.totalorder %s23, 1
      %p235 = scmp.ne.s32.totalorder %s230, %s232
      %p236 = scmp.eq.s32.totalorder %s23, 0
      %p237 = por %p235, %p236
      %p238 = scmp.ne.s32.totalorder %s230, %s232
      %p239 = scmp.eq.s32.totalorder %s28, 1
      %p240 = por %p238, %p239
      %p241 = scmp.ne.s32.totalorder %s232, %s233
      %p242 = scmp.eq.s32.totalorder %s28, 0
      %p243 = por %p241, %p242
      %p244 = scmp.ne.s32.totalorder %s232, %s233
      %p245 = scmp.eq.s32.totalorder %s29, 1
      %p246 = por %p244, %p245
      %p248 = scmp.ne.s32.totalorder %s233, %s247
      %p249 = scmp.eq.s32.totalorder %s29, 0
      %p250 = por %p248, %p249
      %s252 = sadd.s32 %s251, 1
      %p255 = scmp.eq.s32.totalorder %s23, 1
      %p256 = scmp.ne.s32.totalorder %s251, %s253
      %p257 = scmp.eq.s32.totalorder %s23, 0
      %p258 = por %p256, %p257
      %p259 = scmp.ne.s32.totalorder %s251, %s253
      %p260 = scmp.eq.s32.totalorder %s28, 1
      %p261 = por %p259, %p260
      %p262 = scmp.ne.s32.totalorder %s253, %s254
      %p263 = scmp.eq.s32.totalorder %s28, 0
      %p264 = por %p262, %p263
      %p265 = scmp.ne.s32.totalorder %s253, %s254
      %p266 = scmp.eq.s32.totalorder %s29, 1
      %p267 = por %p265, %p266
      %p269 = scmp.ne.s32.totalorder %s254, %s268
      %p270 = scmp.eq.s32.totalorder %s29, 0
      %p271 = por %p269, %p270
      %s273 = sadd.s32 %s272, 1
      %p276 = scmp.eq.s32.totalorder %s23, 1
      %p277 = scmp.ne.s32.totalorder %s272, %s274
      %p278 = scmp.eq.s32.totalorder %s23, 0
      %p279 = por %p277, %p278
      %p280 = scmp.ne.s32.totalorder %s272, %s274
      %p281 = scmp.eq.s32.totalorder %s28, 1
      %p282 = por %p280, %p281
      %p283 = scmp.ne.s32.totalorder %s274, %s275
      %p284 = scmp.eq.s32.totalorder %s28, 0
      %p285 = por %p283, %p284
      %p286 = scmp.ne.s32.totalorder %s274, %s275
      %p287 = scmp.eq.s32.totalorder %s29, 1
      %p288 = por %p286, %p287
      %p290 = scmp.ne.s32.totalorder %s275, %s289
      %p291 = scmp.eq.s32.totalorder %s29, 0
      %p292 = por %p290, %p291
      %s293 = ssub.s32 %s23, %s30
      %p294 = scmp.eq.s32.totalorder %s293, 0
      %s296 = sadd.s32 %s295, 1
      %s297 = scalar_select %p294, %s295, %s296
      %p300 = pneg %p294
      %p301 = scmp.eq.s32.totalorder %s23, 1
      %p302 = por %p300, %p301
      %p303 = scmp.ne.s32.totalorder %s295, %s298
      %p304 = scmp.eq.s32.totalorder %s23, 0
      %p305 = por %p303, %p304
      %p306 = scmp.ne.s32.totalorder %s295, %s298
      %p307 = scmp.eq.s32.totalorder %s28, 1
      %p308 = por %p306, %p307
      %p309 = scmp.ne.s32.totalorder %s298, %s299
      %p310 = scmp.eq.s32.totalorder %s28, 0
      %p311 = por %p309, %p310
      %p312 = scmp.ne.s32.totalorder %s298, %s299
      %p313 = scmp.eq.s32.totalorder %s29, 1
      %p314 = por %p312, %p313
      %p316 = scmp.ne.s32.totalorder %s299, %s315
      %p317 = scmp.eq.s32.totalorder %s29, 0
      %p318 = por %p316, %p317
      %s319 = ssub.s32 %s23, %s30
      %p320 = scmp.eq.s32.totalorder %s319, 0
      %s322 = sadd.s32 %s321, 1
      %s323 = scalar_select %p320, %s321, %s322
      %p326 = pneg %p320
      %p327 = scmp.eq.s32.totalorder %s23, 1
      %p328 = por %p326, %p327
      %p329 = scmp.ne.s32.totalorder %s321, %s324
      %p330 = scmp.eq.s32.totalorder %s23, 0
      %p331 = por %p329, %p330
      %p332 = scmp.ne.s32.totalorder %s321, %s324
      %p333 = scmp.eq.s32.totalorder %s28, 1
      %p334 = por %p332, %p333
      %p335 = scmp.ne.s32.totalorder %s324, %s325
      %p336 = scmp.eq.s32.totalorder %s28, 0
      %p337 = por %p335, %p336
      %p338 = scmp.ne.s32.totalorder %s324, %s325
      %p339 = scmp.eq.s32.totalorder %s29, 1
      %p340 = por %p338, %p339
      %p342 = scmp.ne.s32.totalorder %s325, %s341
      %p343 = scmp.eq.s32.totalorder %s29, 0
      %p344 = por %p342, %p343
      %p345 = scmp.le.s32.totalorder 1, %s23
      %p346 = scmp.lt.s32.totalorder %s23, 3
      %p347 = pnand %p345, %p346
      %p348 = pneg %p347
      // Predicated region
      $region9: #{bert_forward.3} parent=5 // pred_check
        _
      $region10: #{bert_forward.3} parent=5 // pred_check_branch
        %350 = sbr.rel (%p347) target = $region12
      $region11: #{bert_forward.3} parent=5 // pred_region
        %s351 = ssub.s32 %s23, 1
        // Predicated region
        $region13: #{bert_forward.3} parent=11 // pred_check
          %p352 = pneg %p96
        $region14: #{bert_forward.3} parent=11 // pred_check_branch
          %354 = sbr.rel (%p352) target = $region16
        $region15: #{bert_forward.3} parent=11 // pred_region
          _
        $region16: #{bert_forward.3} parent=11 // pred_fallthru
          _
        // Predicated region
        $region17: #{bert_forward.3} parent=11 // pred_check
          %p355 = pneg %p117
        $region18: #{bert_forward.3} parent=11 // pred_check_branch
          %357 = sbr.rel (%p355) target = $region20
        $region19: #{bert_forward.3} parent=11 // pred_region
          _
        $region20: #{bert_forward.3} parent=11 // pred_fallthru
          _
        // Predicated region
        $region21: #{bert_forward.3} parent=11 // pred_check
          %p358 = pneg %p138
        $region22: #{bert_forward.3} parent=11 // pred_check_branch
          %360 = sbr.rel (%p358) target = $region24
        $region23: #{bert_forward.3} parent=11 // pred_region
          _
        $region24: #{bert_forward.3} parent=11 // pred_fallthru
          _
        // Predicated region
        $region25: #{bert_forward.3} parent=11 // pred_check
          %p361 = pneg %p159
        $region26: #{bert_forward.3} parent=11 // pred_check_branch
          %363 = sbr.rel (%p361) target = $region28
        $region27: #{bert_forward.3} parent=11 // pred_region
          _
        $region28: #{bert_forward.3} parent=11 // pred_fallthru
          _
        // Predicated region
        $region29: #{bert_forward.3} parent=11 // pred_check
          %p364 = pneg %p180
        $region30: #{bert_forward.3} parent=11 // pred_check_branch
          %366 = sbr.rel (%p364) target = $region32
        $region31: #{bert_forward.3} parent=11 // pred_region
          _
        $region32: #{bert_forward.3} parent=11 // pred_fallthru
          _
        // Predicated region
        $region33: #{bert_forward.3} parent=11 // pred_check
          %p367 = pneg %p201
        $region34: #{bert_forward.3} parent=11 // pred_check_branch
          %369 = sbr.rel (%p367) target = $region36
        $region35: #{bert_forward.3} parent=11 // pred_region
          _
        $region36: #{bert_forward.3} parent=11 // pred_fallthru
          _
        // Predicated region
        $region37: #{bert_forward.3} parent=11 // pred_check
          %p370 = pneg %p222
        $region38: #{bert_forward.3} parent=11 // pred_check_branch
          %372 = sbr.rel (%p370) target = $region40
        $region39: #{bert_forward.3} parent=11 // pred_region
          _
        $region40: #{bert_forward.3} parent=11 // pred_fallthru
          _
        // Predicated region
        $region41: #{bert_forward.3} parent=11 // pred_check
          %p373 = pneg %p243
        $region42: #{bert_forward.3} parent=11 // pred_check_branch
          %375 = sbr.rel (%p373) target = $region44
        $region43: #{bert_forward.3} parent=11 // pred_region
          _
        $region44: #{bert_forward.3} parent=11 // pred_fallthru
          _
        // Predicated region
        $region45: #{bert_forward.3} parent=11 // pred_check
          %p376 = pneg %p264
        $region46: #{bert_forward.3} parent=11 // pred_check_branch
          %378 = sbr.rel (%p376) target = $region48
        $region47: #{bert_forward.3} parent=11 // pred_region
          _
        $region48: #{bert_forward.3} parent=11 // pred_fallthru
          _
        // Predicated region
        $region49: #{bert_forward.3} parent=11 // pred_check
          %p379 = pneg %p285
        $region50: #{bert_forward.3} parent=11 // pred_check_branch
          %381 = sbr.rel (%p379) target = $region52
        $region51: #{bert_forward.3} parent=11 // pred_region
          _
        $region52: #{bert_forward.3} parent=11 // pred_fallthru
          _
      $region12: #{bert_forward.3} parent=5 // pred_fallthru
        _
      %p382 = scmp.lt.s32.totalorder %s23, 2
      // Predicated region
      $region53: #{bert_forward.3} parent=5 // pred_check
        %p383 = pneg %p382
      $region54: #{bert_forward.3} parent=5 // pred_check_branch
        %385 = sbr.rel (%p383) target = $region56
      $region55: #{bert_forward.3} parent=5 // pred_region
        // Predicated region
        $region57: #{bert_forward.3} parent=55 // pred_check
          %p386 = pneg %p43
        $region58: #{bert_forward.3} parent=55 // pred_check_branch
          %388 = sbr.rel (%p386) target = $region60
        $region59: #{bert_forward.3} parent=55 // pred_region
          %p389 = scmp.lt.s32.totalorder %s23, 1
          %s390 = scalar_select %p389, %s23, 1
          %s391 = scalar_lea.vmem %s0, %s390
        $region60: #{bert_forward.3} parent=55 // pred_fallthru
          _
        // Predicated region
        $region61: #{bert_forward.3} parent=55 // pred_check
          %p392 = pneg %p69
        $region62: #{bert_forward.3} parent=55 // pred_check_branch
          %394 = sbr.rel (%p392) target = $region64
        $region63: #{bert_forward.3} parent=55 // pred_region
          %p395 = scmp.lt.s32.totalorder %s23, 1
          %s396 = scalar_select %p395, %s23, 1
          %s397 = smul.addr %s396, 4
          %s398 = scalar_lea.vmem %s1, %s397
        $region64: #{bert_forward.3} parent=55 // pred_fallthru
          _
      $region56: #{bert_forward.3} parent=5 // pred_fallthru
        _
      %p399 = scmp.le.s32.totalorder 1, %s23
      %p400 = scmp.lt.s32.totalorder %s23, 3
      %p401 = pnand %p399, %p400
      %p402 = pneg %p401
      // Predicated region
      $region65: #{bert_forward.3} parent=5 // pred_check
        _
      $region66: #{bert_forward.3} parent=5 // pred_check_branch
        %404 = sbr.rel (%p401) target = $region68
      $region67: #{bert_forward.3} parent=5 // pred_region
        %s405 = ssub.s32 %s23, 1
        %p406 = scmp.lt.s32.totalorder %s28, 1
        %s407 = scalar_select %p406, %s28, 1
        %s408 = scalar_lea.vmem %s0, %s407
        %p409 = pneg %p49
        %p410 = pneg %p46
        %p411 = scmp.lt.s32.totalorder %s28, 1
        %s412 = scalar_select %p411, %s28, 1
        %s413 = smul.addr %s412, 4
        %s414 = scalar_lea.vmem %s1, %s413
        %p415 = pneg %p75
        %p416 = pneg %p72
        %p417 = pneg %p96
        %p418 = pneg %p93
        %p419 = pneg %p117
        %p420 = pneg %p114
        %p421 = pneg %p138
        %p422 = pneg %p135
        %p423 = pneg %p159
        %p424 = pneg %p156
        %p425 = pneg %p180
        %p426 = pneg %p177
        %p427 = pneg %p201
        %p428 = pneg %p198
        %p429 = pneg %p222
        %p430 = pneg %p219
        %p431 = pneg %p243
        %p432 = pneg %p240
        %p433 = pneg %p264
        %p434 = pneg %p261
        %p435 = pneg %p285
        %p436 = pneg %p282
        %p437 = pneg %p311
        %p438 = pneg %p308
        %s439 = sand.u32 %s298, 1
        %s440 = scalar_lea.sflag [#allocation3], %s439
        %s441 = sand.u32 %s298, 1
        %s442 = scalar_lea.vmem [#allocation2], %s441
        %p443 = pneg %p337
        %p444 = pneg %p334
        %p445 = scmp.lt.s32.totalorder %s28, 1
        %s446 = scalar_select %p445, %s28, 1
        %s447 = smul.addr %s446, 4
        %s448 = scalar_lea.vmem %s13, %s447
        %p449 = scmp.lt.s32.totalorder %s28, 1
        %s450 = scalar_select %p449, %s28, 1
        %s451 = scalar_lea.vmem %s0, %s450
        %p452 = scmp.lt.s32.totalorder %s28, 1
        %s453 = scalar_select %p452, %s28, 1
        %s454 = smul.addr %s453, 4
        %s455 = scalar_lea.vmem %s1, %s454
        %p456 = scmp.lt.s32.totalorder %s28, 1
        %s457 = scalar_select %p456, %s28, 1
        %s458 = smul.addr %s457, 4
        %s459 = scalar_lea.vmem %s13, %s458
        %v460 = vld [vmem:[%s451] sm:$0x1]
        %v461 = vld [vmem:[%s2] sm:$0xff]
        %v462 = vld [vmem:[%s2 + $0x8] sm:$0xff]
        %v463 = vld [vmem:[%s2 + $0x10] sm:$0xff]
        %v464 = vld [vmem:[%s2 + $0x18] sm:$0xff]
        %v465 = vld [vmem:[%s2 + $0x20] sm:$0xff]
        %v466 = vld [vmem:[%s2 + $0x28] sm:$0xff]
        %v467 = vld [vmem:[%s2 + $0x30] sm:$0xff]
        %v468 = vld [vmem:[%s2 + $0x38] sm:$0xff]
        %v469 = vld [vmem:[%s3] sm:$0x1]
        %vm470 = vcmask 523264
        %v472 = vsel %vm470, %v460, 0
        %474 = vmatprep.subr.mxu0 0.0
        %475 = vmatpush1.msra.mxu0 0.0
        %476 = vmatprep.subr.mxu0 0.0
        %477 = vmatpush1.msra.mxu0 0.0
        %478 = vmatprep.subr.mxu0 0.0
        %479 = vmatpush1.msra.mxu0 0.0
        %480 = vmatprep.subr.mxu0 0.0
        %481 = vmatpush1.msra.mxu0 0.0
        %482 = vmatprep.subr.mxu0 0.0
        %483 = vmatpush1.msra.mxu0 0.0
        %484 = vmatprep.subr.mxu0 0.0
        %485 = vmatpush1.msra.mxu0 0.0
        %486 = vmatprep.subr.mxu0 0.0
        %487 = vmatpush1.msra.mxu0 0.0
        %488 = vmatprep.subr.mxu0 0.0
        %489 = vmatpush1.msra.mxu0 0.0
        %490 = vmatprep.subr.mxu0 0.0
        %491 = vmatpush1.msra.mxu0 %v468
        %492 = vmatprep.subr.mxu0 0.0
        %493 = vmatpush1.msra.mxu0 %v467
        %494 = vmatprep.subr.mxu0 0.0
        %495 = vmatpush1.msra.mxu0 %v466
        %496 = vmatprep.subr.mxu0 0.0
        %497 = vmatpush1.msra.mxu0 %v465
        %498 = vmatprep.subr.mxu0 0.0
        %499 = vmatpush1.msra.mxu0 %v464
        %500 = vmatprep.subr.mxu0 0.0
        %501 = vmatpush1.msra.mxu0 %v463
        %502 = vmatprep.subr.mxu0 0.0
        %503 = vmatpush1.msra.mxu0 %v462
        %504 = vmatprep.subr.mxu0 0.0
        %505 = vmatpush1.msra.mxu0 %v461
        %506 = vmatprep.subr.mxu0 0.0
        %507 = vmatpush2.msra.mxu0 0.0
        %508 = vmatprep.subr.mxu0 0.0
        %509 = vmatpush2.msra.mxu0 0.0
        %510 = vmatprep.subr.mxu0 0.0
        %511 = vmatpush2.msra.mxu0 0.0
        %512 = vmatprep.subr.mxu0 0.0
        %513 = vmatpush2.msra.mxu0 0.0
        %514 = vmatprep.subr.mxu0 0.0
        %515 = vmatpush2.msra.mxu0 0.0
        %516 = vmatprep.subr.mxu0 0.0
        %517 = vmatpush2.msra.mxu0 0.0
        %518 = vmatprep.subr.mxu0 0.0
        %519 = vmatpush2.msra.mxu0 0.0
        %520 = vmatprep.subr.mxu0 0.0
        %521 = vmatpush2.msra.mxu0 0.0
        %522 = vmatprep.subr.mxu0 0.0
        %523 = vmatpush2.msra.mxu0 0.0
        %524 = vmatprep.subr.mxu0 0.0
        %525 = vmatpush2.msra.mxu0 0.0
        %526 = vmatprep.subr.mxu0 0.0
        %527 = vmatpush2.msra.mxu0 0.0
        %528 = vmatprep.subr.mxu0 0.0
        %529 = vmatpush2.msra.mxu0 0.0
        %530 = vmatprep.subr.mxu0 0.0
        %531 = vmatpush2.msra.mxu0 0.0
        %532 = vmatprep.subr.mxu0 0.0
        %533 = vmatpush2.msra.mxu0 0.0
        %534 = vmatprep.subr.mxu0 0.0
        %535 = vmatpush2.msra.mxu0 0.0
        %536 = vmatprep.subr.mxu0 0.0
        %537 = vmatpush2.msra.mxu0 0.0
        %538 = vmatprep.mubr.f32.mxu0 0.0
        %539 = vmatmul.mubr.f32.gmra.mxu0 %v472
        %v540 = vpop.f32.mrf.mxu0
        %v541 = vadd.f32 %v469, %v540
        %v542 = vpop.f32.mrf.mxu0
        %543 = vdwg.mxu0
        %v544 = vtanh.pop %v541
        %v545 = vld [vmem:[%s4] sm:$0xff]
        %v546 = vld [vmem:[%s4 + $0x8] sm:$0xff]
        %v547 = vld [vmem:[%s4 + $0x10] sm:$0xff]
        %v548 = vld [vmem:[%s4 + $0x18] sm:$0xff]
        %v549 = vld [vmem:[%s4 + $0x20] sm:$0xff]
        %v550 = vld [vmem:[%s4 + $0x28] sm:$0xff]
        %v551 = vld [vmem:[%s4 + $0x30] sm:$0xff]
        %v552 = vld [vmem:[%s4 + $0x38] sm:$0xff]
        %v553 = vld [vmem:[%s5] sm:$0x1]
        %v555 = vsel %vm470, %v544, 0
        %557 = vmatprep.subr.mxu0 0.0
        %558 = vmatpush1.msra.mxu0 0.0
        %559 = vmatprep.subr.mxu0 0.0
        %560 = vmatpush1.msra.mxu0 0.0
        %561 = vmatprep.subr.mxu0 0.0
        %562 = vmatpush1.msra.mxu0 0.0
        %563 = vmatprep.subr.mxu0 0.0
        %564 = vmatpush1.msra.mxu0 0.0
        %565 = vmatprep.subr.mxu0 0.0
        %566 = vmatpush1.msra.mxu0 0.0
        %567 = vmatprep.subr.mxu0 0.0
        %568 = vmatpush1.msra.mxu0 0.0
        %569 = vmatprep.subr.mxu0 0.0
        %570 = vmatpush1.msra.mxu0 0.0
        %571 = vmatprep.subr.mxu0 0.0
        %572 = vmatpush1.msra.mxu0 0.0
        %573 = vmatprep.subr.mxu0 0.0
        %574 = vmatpush1.msra.mxu0 %v552
        %575 = vmatprep.subr.mxu0 0.0
        %576 = vmatpush1.msra.mxu0 %v551
        %577 = vmatprep.subr.mxu0 0.0
        %578 = vmatpush1.msra.mxu0 %v550
        %579 = vmatprep.subr.mxu0 0.0
        %580 = vmatpush1.msra.mxu0 %v549
        %581 = vmatprep.subr.mxu0 0.0
        %582 = vmatpush1.msra.mxu0 %v548
        %583 = vmatprep.subr.mxu0 0.0
        %584 = vmatpush1.msra.mxu0 %v547
        %585 = vmatprep.subr.mxu0 0.0
        %586 = vmatpush1.msra.mxu0 %v546
        %587 = vmatprep.subr.mxu0 0.0
        %588 = vmatpush1.msra.mxu0 %v545
        %589 = vmatprep.subr.mxu0 0.0
        %590 = vmatpush2.msra.mxu0 0.0
        %591 = vmatprep.subr.mxu0 0.0
        %592 = vmatpush2.msra.mxu0 0.0
        %593 = vmatprep.subr.mxu0 0.0
        %594 = vmatpush2.msra.mxu0 0.0
        %595 = vmatprep.subr.mxu0 0.0
        %596 = vmatpush2.msra.mxu0 0.0
        %597 = vmatprep.subr.mxu0 0.0
        %598 = vmatpush2.msra.mxu0 0.0
        %599 = vmatprep.subr.mxu0 0.0
        %600 = vmatpush2.msra.mxu0 0.0
        %601 = vmatprep.subr.mxu0 0.0
        %602 = vmatpush2.msra.mxu0 0.0
        %603 = vmatprep.subr.mxu0 0.0
        %604 = vmatpush2.msra.mxu0 0.0
        %605 = vmatprep.subr.mxu0 0.0
        %606 = vmatpush2.msra.mxu0 0.0
        %607 = vmatprep.subr.mxu0 0.0
        %608 = vmatpush2.msra.mxu0 0.0
        %609 = vmatprep.subr.mxu0 0.0
        %610 = vmatpush2.msra.mxu0 0.0
        %611 = vmatprep.subr.mxu0 0.0
        %612 = vmatpush2.msra.mxu0 0.0
        %613 = vmatprep.subr.mxu0 0.0
        %614 = vmatpush2.msra.mxu0 0.0
        %615 = vmatprep.subr.mxu0 0.0
        %616 = vmatpush2.msra.mxu0 0.0
        %617 = vmatprep.subr.mxu0 0.0
        %618 = vmatpush2.msra.mxu0 0.0
        %619 = vmatprep.subr.mxu0 0.0
        %620 = vmatpush2.msra.mxu0 0.0
        %621 = vmatprep.mubr.f32.mxu0 0.0
        %622 = vmatmul.mubr.f32.gmra.mxu0 %v555
        %v623 = vpop.f32.mrf.mxu0
        %v624 = vadd.f32 %v553, %v623
        %v625 = vpop.f32.mrf.mxu0
        %626 = vdwg.mxu0
        %627 = vst [vmem:[%s442] sm:$0x1] %v624
        %v628 = vld [vmem:[%s455] sm:$0x7]
        %v629 = vld [vmem:[%s6] sm:$0xff]
        %v630 = vld [vmem:[%s6 + $0x8] sm:$0xff]
        %v631 = vld [vmem:[%s6 + $0x10] sm:$0xff]
        %v632 = vld [vmem:[%s6 + $0x18] sm:$0xff]
        %v633 = vld [vmem:[%s6 + $0x20] sm:$0xff]
        %v634 = vld [vmem:[%s6 + $0x28] sm:$0xff]
        %v635 = vld [vmem:[%s6 + $0x30] sm:$0xff]
        %v636 = vld [vmem:[%s6 + $0x38] sm:$0xff]
        %v637 = vld [vmem:[%s7] sm:$0x1]
        %v639 = vlaneseq
        %v640 = vshrl.u32 %v639, 7
        %v641 = vsub.s32 0, %v640
        %v642 = vrot.slane %v637, %v641
        %v645 = vsel %vm470, %v628, 0
        %647 = vmatprep.subr.mxu0 0.0
        %648 = vmatpush1.msra.mxu0 0.0
        %649 = vmatprep.subr.mxu0 0.0
        %650 = vmatpush1.msra.mxu0 0.0
        %651 = vmatprep.subr.mxu0 0.0
        %652 = vmatpush1.msra.mxu0 0.0
        %653 = vmatprep.subr.mxu0 0.0
        %654 = vmatpush1.msra.mxu0 0.0
        %655 = vmatprep.subr.mxu0 0.0
        %656 = vmatpush1.msra.mxu0 0.0
        %657 = vmatprep.subr.mxu0 0.0
        %658 = vmatpush1.msra.mxu0 0.0
        %659 = vmatprep.subr.mxu0 0.0
        %660 = vmatpush1.msra.mxu0 0.0
        %661 = vmatprep.subr.mxu0 0.0
        %662 = vmatpush1.msra.mxu0 0.0
        %663 = vmatprep.subr.mxu0 0.0
        %664 = vmatpush1.msra.mxu0 %v636
        %665 = vmatprep.subr.mxu0 0.0
        %666 = vmatpush1.msra.mxu0 %v635
        %667 = vmatprep.subr.mxu0 0.0
        %668 = vmatpush1.msra.mxu0 %v634
        %669 = vmatprep.subr.mxu0 0.0
        %670 = vmatpush1.msra.mxu0 %v633
        %671 = vmatprep.subr.mxu0 0.0
        %672 = vmatpush1.msra.mxu0 %v632
        %673 = vmatprep.subr.mxu0 0.0
        %674 = vmatpush1.msra.mxu0 %v631
        %675 = vmatprep.subr.mxu0 0.0
        %676 = vmatpush1.msra.mxu0 %v630
        %677 = vmatprep.subr.mxu0 0.0
        %678 = vmatpush1.msra.mxu0 %v629
        %679 = vmatprep.subr.mxu0 0.0
        %680 = vmatpush2.msra.mxu0 0.0
        %681 = vmatprep.subr.mxu0 0.0
        %682 = vmatpush2.msra.mxu0 0.0
        %683 = vmatprep.subr.mxu0 0.0
        %684 = vmatpush2.msra.mxu0 0.0
        %685 = vmatprep.subr.mxu0 0.0
        %686 = vmatpush2.msra.mxu0 0.0
        %687 = vmatprep.subr.mxu0 0.0
        %688 = vmatpush2.msra.mxu0 0.0
        %689 = vmatprep.subr.mxu0 0.0
        %690 = vmatpush2.msra.mxu0 0.0
        %691 = vmatprep.subr.mxu0 0.0
        %692 = vmatpush2.msra.mxu0 0.0
        %693 = vmatprep.subr.mxu0 0.0
        %694 = vmatpush2.msra.mxu0 0.0
        %695 = vmatprep.subr.mxu0 0.0
        %696 = vmatpush2.msra.mxu0 0.0
        %697 = vmatprep.subr.mxu0 0.0
        %698 = vmatpush2.msra.mxu0 0.0
        %699 = vmatprep.subr.mxu0 0.0
        %700 = vmatpush2.msra.mxu0 0.0
        %701 = vmatprep.subr.mxu0 0.0
        %702 = vmatpush2.msra.mxu0 0.0
        %703 = vmatprep.subr.mxu0 0.0
        %704 = vmatpush2.msra.mxu0 0.0
        %705 = vmatprep.subr.mxu0 0.0
        %706 = vmatpush2.msra.mxu0 0.0
        %707 = vmatprep.subr.mxu0 0.0
        %708 = vmatpush2.msra.mxu0 0.0
        %709 = vmatprep.subr.mxu0 0.0
        %710 = vmatpush2.msra.mxu0 0.0
        %711 = vmatprep.mubr.f32.mxu0 0.0
        %712 = vmatmul.mubr.f32.gmra.mxu0 %v645
        %v713 = vpop.f32.mrf.mxu0
        %v714 = vadd.f32 %v642, %v713
        %v715 = vpop.f32.mrf.mxu0
        %716 = vdwg.mxu0
        %v717 = vmul.f32 %v714, 0.5
        %v718 = vmul.f32 %v714, 0.044715
        %v719 = vmul.f32 %v718, %v714
        %v720 = vmul.f32 %v719, %v714
        %v721 = vadd.f32 %v714, %v720
        %v722 = vmul.f32 %v721, 0.7978846
        %v723 = vtanh.pop %v722
        %v724 = vadd.f32 %v723, 1.0
        %v725 = vmul.f32 %v717, %v724
        %v726 = vld [vmem:[%s8] sm:$0x1]
        %v727 = vld [vmem:[%s9] sm:$0x1]
        %vm728 = vcmask 518144
        %v729 = vsel %vm728, %v725, 0.0
        %730 = vadd.xlane.f32.xlu0 %v729
        %v731 = vpop.xlane.xlu0 %730
        %v732 = vmul.f32 %v731, 0.015625
        %v733 = vsub.f32 %v725, %v732
        %v734 = vmul.f32 %v733, %v733
        %v735 = vsel %vm728, %v734, 0.0
        %736 = vadd.xlane.f32.xlu0 %v735
        %v737 = vpop.xlane.xlu0 %736
        %v738 = vmul.f32 %v737, 0.015625
        %v739 = vadd.f32 %v738, 1e-05
        %v740 = vrsqrt.pop %v739
        %v741 = vmul.f32 %v733, %v740
        %v743 = vlaneseq
        %v744 = vshrl.u32 %v743, 7
        %v745 = vsub.s32 0, %v744
        %v746 = vrot.slane %v726, %v745
        %v748 = vmul.f32 %v741, %v746
        %v750 = vlaneseq
        %v751 = vshrl.u32 %v750, 7
        %v752 = vsub.s32 0, %v751
        %v753 = vrot.slane %v727, %v752
        %v755 = vadd.f32 %v748, %v753
        %v756 = vld [vmem:[%s10] sm:$0xff]
        %v757 = vld [vmem:[%s10 + $0x8] sm:$0xff]
        %v758 = vld [vmem:[%s10 + $0x10] sm:$0xff]
        %v759 = vld [vmem:[%s10 + $0x18] sm:$0xff]
        %v760 = vld [vmem:[%s10 + $0x20] sm:$0xff]
        %v761 = vld [vmem:[%s10 + $0x28] sm:$0xff]
        %v762 = vld [vmem:[%s10 + $0x30] sm:$0xff]
        %v763 = vld [vmem:[%s10 + $0x38] sm:$0xff]
        %v764 = vld [vmem:[%s11] sm:$0x1]
        %v766 = vlaneseq
        %v767 = vshrl.u32 %v766, 7
        %v768 = vsub.s32 0, %v767
        %v769 = vrot.slane %v764, %v768
        %v772 = vsel %vm470, %v755, 0
        %774 = vmatprep.subr.mxu0 0.0
        %775 = vmatpush1.msra.mxu0 0.0
        %776 = vmatprep.subr.mxu0 0.0
        %777 = vmatpush1.msra.mxu0 0.0
        %778 = vmatprep.subr.mxu0 0.0
        %779 = vmatpush1.msra.mxu0 0.0
        %780 = vmatprep.subr.mxu0 0.0
        %781 = vmatpush1.msra.mxu0 0.0
        %782 = vmatprep.subr.mxu0 0.0
        %783 = vmatpush1.msra.mxu0 0.0
        %784 = vmatprep.subr.mxu0 0.0
        %785 = vmatpush1.msra.mxu0 0.0
        %786 = vmatprep.subr.mxu0 0.0
        %787 = vmatpush1.msra.mxu0 0.0
        %788 = vmatprep.subr.mxu0 0.0
        %789 = vmatpush1.msra.mxu0 0.0
        %790 = vmatprep.subr.mxu0 0.0
        %791 = vmatpush1.msra.mxu0 %v763
        %792 = vmatprep.subr.mxu0 0.0
        %793 = vmatpush1.msra.mxu0 %v762
        %794 = vmatprep.subr.mxu0 0.0
        %795 = vmatpush1.msra.mxu0 %v761
        %796 = vmatprep.subr.mxu0 0.0
        %797 = vmatpush1.msra.mxu0 %v760
        %798 = vmatprep.subr.mxu0 0.0
        %799 = vmatpush1.msra.mxu0 %v759
        %800 = vmatprep.subr.mxu0 0.0
        %801 = vmatpush1.msra.mxu0 %v758
        %802 = vmatprep.subr.mxu0 0.0
        %803 = vmatpush1.msra.mxu0 %v757
        %804 = vmatprep.subr.mxu0 0.0
        %805 = vmatpush1.msra.mxu0 %v756
        %806 = vmatprep.subr.mxu0 0.0
        %807 = vmatpush2.msra.mxu0 0.0
        %808 = vmatprep.subr.mxu0 0.0
        %809 = vmatpush2.msra.mxu0 0.0
        %810 = vmatprep.subr.mxu0 0.0
        %811 = vmatpush2.msra.mxu0 0.0
        %812 = vmatprep.subr.mxu0 0.0
        %813 = vmatpush2.msra.mxu0 0.0
        %814 = vmatprep.subr.mxu0 0.0
        %815 = vmatpush2.msra.mxu0 0.0
        %816 = vmatprep.subr.mxu0 0.0
        %817 = vmatpush2.msra.mxu0 0.0
        %818 = vmatprep.subr.mxu0 0.0
        %819 = vmatpush2.msra.mxu0 0.0
        %820 = vmatprep.subr.mxu0 0.0
        %821 = vmatpush2.msra.mxu0 0.0
        %822 = vmatprep.subr.mxu0 0.0
        %823 = vmatpush2.msra.mxu0 0.0
        %824 = vmatprep.subr.mxu0 0.0
        %825 = vmatpush2.msra.mxu0 0.0
        %826 = vmatprep.subr.mxu0 0.0
        %827 = vmatpush2.msra.mxu0 0.0
        %828 = vmatprep.subr.mxu0 0.0
        %829 = vmatpush2.msra.mxu0 0.0
        %830 = vmatprep.subr.mxu0 0.0
        %831 = vmatpush2.msra.mxu0 0.0
        %832 = vmatprep.subr.mxu0 0.0
        %833 = vmatpush2.msra.mxu0 0.0
        %834 = vmatprep.subr.mxu0 0.0
        %835 = vmatpush2.msra.mxu0 0.0
        %836 = vmatprep.subr.mxu0 0.0
        %837 = vmatpush2.msra.mxu0 0.0
        %838 = vmatprep.mubr.f32.mxu0 0.0
        %839 = vmatmul.mubr.f32.gmra.mxu0 %v772
        %v840 = vpop.f32.mrf.mxu0
        %v841 = vadd.f32 %v769, %v840
        %v842 = vpop.f32.mrf.mxu0
        %843 = vdwg.mxu0
        %844 = vst [vmem:[%s459] sm:$0x7] %v841
        %s845 = sand.u32 %s298, 1
        %s846 = scalar_lea.sflag [#allocation3], %s845
        %s847 = sand.u32 %s298, 1
        %s848 = scalar_lea.vmem [#allocation2], %s847
        %p849 = scmp.lt.s32.totalorder %s28, 1
        %s850 = scalar_select %p849, %s28, 1
        %s851 = smul.addr %s850, 4
        %s852 = scalar_lea.vmem %s13, %s851
        // Predicated region
        $region69: #{bert_forward.3} parent=67 // pred_check
          %p853 = pneg %p308
        $region70: #{bert_forward.3} parent=67 // pred_check_branch
          %855 = sbr.rel (%p853) target = $region72
        $region71: #{bert_forward.3} parent=67 // pred_region
          %s857 = ssub.s32 16, 16
          %858 = vsyncadd %s846, %s857
          %s859 = smul.addr %s28, 16
          %s860 = scalar_lea.hbm %s12, %s859
          %s862 = sshll.u32 %s848, 4
          %s863 = int_to_ptr.vmem [resolvable:$true] %s862
          %865 = dma.vmem_to_hbm [thread:$0]  %s863, 16, %s860, %s846
        $region72: #{bert_forward.3} parent=67 // pred_fallthru
          _
        // Predicated region
        $region73: #{bert_forward.3} parent=67 // pred_check
          %p866 = pneg %p334
        $region74: #{bert_forward.3} parent=67 // pred_check_branch
          %868 = sbr.rel (%p866) target = $region76
        $region75: #{bert_forward.3} parent=67 // pred_region
          _
        $region76: #{bert_forward.3} parent=67 // pred_fallthru
          _
      $region68: #{bert_forward.3} parent=5 // pred_fallthru
        _
      %p869 = scmp.le.s32.totalorder 2, %s23
      // Predicated region
      $region77: #{bert_forward.3} parent=5 // pred_check
        %p870 = pneg %p869
      $region78: #{bert_forward.3} parent=5 // pred_check_branch
        %872 = sbr.rel (%p870) target = $region80
      $region79: #{bert_forward.3} parent=5 // pred_region
        %s873 = ssub.s32 %s23, 2
        // Predicated region
        $region81: #{bert_forward.3} parent=79 // pred_check
          %p874 = pneg %p314
        $region82: #{bert_forward.3} parent=79 // pred_check_branch
          %876 = sbr.rel (%p874) target = $region84
        $region83: #{bert_forward.3} parent=79 // pred_region
          %s877 = sand.u32 %s299, 1
          %s878 = scalar_lea.sflag [#allocation3], %s877
          %s879 = sand.u32 %s299, 1
          %s880 = scalar_lea.vmem [#allocation2], %s879
          %881 = dma.done %s878, 16
        $region84: #{bert_forward.3} parent=79 // pred_fallthru
          _
        // Predicated region
        $region85: #{bert_forward.3} parent=79 // pred_check
          %p882 = pneg %p340
        $region86: #{bert_forward.3} parent=79 // pred_check_branch
          %884 = sbr.rel (%p882) target = $region88
        $region87: #{bert_forward.3} parent=79 // pred_region
          %p885 = scmp.lt.s32.totalorder %s29, 1
          %s886 = scalar_select %p885, %s29, 1
          %s887 = smul.addr %s886, 4
          %s888 = scalar_lea.vmem %s13, %s887
        $region88: #{bert_forward.3} parent=79 // pred_fallthru
          _
      $region80: #{bert_forward.3} parent=5 // pred_fallthru
        _
    $region6: #{bert_forward.3} parent=1 // loop_footer
      %s27 = sadd.s32 1, %s23
    $region7: #{bert_forward.3} parent=1 // loop_footer_branch
      %22 = sbr.rel target = $region3
    $region8: #{bert_forward.3} parent=1 // loop_exit
      _
    %889 = vsyncpa [#allocation3], 1
    %s890 = scalar_lea.sflag [#allocation3], 1
    %891 = vsyncpa %s890, 1

// kernel: bert_forward.2
$region0: #{bert_forward.2}
  #allocation0 [shape = 'u32[]', space=smem, size = 0x4, offset = 0x4, fixed_abs, tag = 'smem constant byte address 0x4 - core index']
  #allocation1 [shape = 'u32[144,128]{1,0:T(1,128)}', space=vmem, size = 0x12000, scoped, tag = 'internal scratch']
  %s0 = inlined_call_operand.vmem [shape: f32[2,8,64], index: 0, kind: input, shape index: {}]
  %s1 = inlined_call_operand.vmem [shape: f32[2,1,8], index: 1, kind: input, shape index: {}]
  %s2 = inlined_call_operand.vmem [shape: f32[1,64], index: 2, kind: input, shape index: {}]
  %s3 = inlined_call_operand.vmem [shape: f32[1,64], index: 3, kind: input, shape index: {}]
  %s4 = inlined_call_operand.vmem [shape: f32[2,64,192], index: 4, kind: input, shape index: {}]
  %s5 = inlined_call_operand.vmem [shape: f32[2,1,192], index: 5, kind: input, shape index: {}]
  %s6 = inlined_call_operand.vmem [shape: f32[2,4,16,64], index: 6, kind: input, shape index: {}]
  %s7 = inlined_call_operand.vmem [shape: f32[2,1,64], index: 7, kind: input, shape index: {}]
  %s8 = inlined_call_operand.vmem [shape: f32[2,64,128], index: 8, kind: input, shape index: {}]
  %s9 = inlined_call_operand.vmem [shape: f32[2,1,128], index: 9, kind: input, shape index: {}]
  %s10 = inlined_call_operand.vmem [shape: f32[2,128,64], index: 10, kind: input, shape index: {}]
  %s11 = inlined_call_operand.vmem [shape: f32[2,1,64], index: 11, kind: input, shape index: {}]
  %s12 = inlined_call_operand.vmem [shape: f32[2,8,64], index: 12, kind: output, shape index: {}]
  %s13 = sld [smem:[#allocation0]]
  $region81: #{bert_forward.2} parent=0
    _
  %s15 = ssub.s32 1, %s13
  %s16 = scalar_select 0, %s15, %s13
  loop: start=0, step=1, limit=6
  $region2: #{bert_forward.2} parent=0 // loop_pre_header
    _
  $region3: #{bert_forward.2} parent=0 // loop_header
    %s18 = sphi 0, %s22
    %p19 = scmp.ge.s32.totalorder %s18, 6
    %s25 = sphi 0, %s37
    %s26 = sphi 0, %s33
    %s27 = sphi 0, %s25
    %s28 = sphi 0, %s26
    %s29 = sphi 0, %s27
    %s30 = sphi 0, %s28
    %s40 = sphi 0, %s42
    %s43 = sphi 0, %s40
    %s44 = sphi 0, %s43
    %s60 = sphi 0, %s44
    %s66 = sphi 0, %s68
    %s69 = sphi 0, %s66
    %s70 = sphi 0, %s69
    %s86 = sphi 0, %s70
    %s90 = sphi 0, %s90
    %s92 = sphi 0, %s90
    %s93 = sphi 0, %s92
    %s107 = sphi 0, %s93
    %s111 = sphi 0, %s111
    %s113 = sphi 0, %s111
    %s114 = sphi 0, %s113
    %s128 = sphi 0, %s114
    %s134 = sphi 0, %s136
    %s137 = sphi 0, %s134
    %s138 = sphi 0, %s137
    %s154 = sphi 0, %s138
    %s160 = sphi 0, %s162
    %s163 = sphi 0, %s160
    %s164 = sphi 0, %s163
    %s180 = sphi 0, %s164
    %s186 = sphi 0, %s188
    %s189 = sphi 0, %s186
    %s190 = sphi 0, %s189
    %s206 = sphi 0, %s190
    %s212 = sphi 0, %s214
    %s215 = sphi 0, %s212
    %s216 = sphi 0, %s215
    %s232 = sphi 0, %s216
    %s238 = sphi 0, %s240
    %s241 = sphi 0, %s238
    %s242 = sphi 0, %s241
    %s258 = sphi 0, %s242
    %s264 = sphi 0, %s266
    %s267 = sphi 0, %s264
    %s268 = sphi 0, %s267
    %s284 = sphi 0, %s268
    %s290 = sphi 0, %s292
    %s293 = sphi 0, %s290
    %s294 = sphi 0, %s293
    %s310 = sphi 0, %s294
    %s316 = sphi 0, %s318
    %s319 = sphi 0, %s316
    %s320 = sphi 0, %s319
    %s336 = sphi 0, %s320
    %s342 = sphi 0, %s344
    %s345 = sphi 0, %s342
    %s346 = sphi 0, %s345
    %s362 = sphi 0, %s346
  $region4: #{bert_forward.2} parent=0 // loop_header_branch
    %21 = sbr.rel (%p19) target = $region8
  $region5: #{bert_forward.2} parent=0 // loop_body
    %s23 = ssub.s32 %s18, 1
    %s24 = ssub.s32 %s18, 2
    %s31 = sadd.s32 1, %s26
    %p32 = scmp.ge.s32.totalorder %s31, 2
    %s33 = scalar_select %p32, 0, %s31
    %s34 = sadd.s32 1, %s25
    %s35 = scalar_select %p32, %s34, %s25
    %p36 = scmp.ge.s32.totalorder %s35, 2
    %s37 = scalar_select %p36, 0, %s35
    %s38 = ssub.s32 %s25, %s37
    %p39 = scmp.eq.s32.totalorder %s38, 0
    %s41 = sadd.s32 %s40, 1
    %s42 = scalar_select %p39, %s40, %s41
    %p45 = pneg %p39
    %p46 = scmp.eq.s32.totalorder %s18, 3
    %p47 = por %p45, %p46
    %p48 = scmp.ne.s32.totalorder %s40, %s43
    %p49 = scmp.eq.s32.totalorder %s18, 0
    %p50 = por %p48, %p49
    %p51 = scmp.ne.s32.totalorder %s40, %s43
    %p52 = scmp.eq.s32.totalorder %s23, 3
    %p53 = por %p51, %p52
    %p54 = scmp.ne.s32.totalorder %s43, %s44
    %p55 = scmp.eq.s32.totalorder %s23, 0
    %p56 = por %p54, %p55
    %p57 = scmp.ne.s32.totalorder %s43, %s44
    %p58 = scmp.eq.s32.totalorder %s24, 3
    %p59 = por %p57, %p58
    %p61 = scmp.ne.s32.totalorder %s44, %s60
    %p62 = scmp.eq.s32.totalorder %s24, 0
    %p63 = por %p61, %p62
    %s64 = ssub.s32 %s25, %s37
    %p65 = scmp.eq.s32.totalorder %s64, 0
    %s67 = sadd.s32 %s66, 1
    %s68 = scalar_select %p65, %s66, %s67
    %p71 = pneg %p65
    %p72 = scmp.eq.s32.totalorder %s18, 3
    %p73 = por %p71, %p72
    %p74 = scmp.ne.s32.totalorder %s66, %s69
    %p75 = scmp.eq.s32.totalorder %s18, 0
    %p76 = por %p74, %p75
    %p77 = scmp.ne.s32.totalorder %s66, %s69
    %p78 = scmp.eq.s32.totalorder %s23, 3
    %p79 = por %p77, %p78
    %p80 = scmp.ne.s32.totalorder %s69, %s70
    %p81 = scmp.eq.s32.totalorder %s23, 0
    %p82 = por %p80, %p81
    %p83 = scmp.ne.s32.totalorder %s69, %s70
    %p84 = scmp.eq.s32.totalorder %s24, 3
    %p85 = por %p83, %p84
    %p87 = scmp.ne.s32.totalorder %s70, %s86
    %p88 = scmp.eq.s32.totalorder %s24, 0
    %p89 = por %p87, %p88
    %s91 = sadd.s32 %s90, 1
    %p94 = scmp.eq.s32.totalorder %s18, 3
    %p95 = scmp.ne.s32.totalorder %s90, %s92
    %p96 = scmp.eq.s32.totalorder %s18, 0
    %p97 = por %p95, %p96
    %p98 = scmp.ne.s32.totalorder %s90, %s92
    %p99 = scmp.eq.s32.totalorder %s23, 3
    %p100 = por %p98, %p99
    %p101 = scmp.ne.s32.totalorder %s92, %s93
    %p102 = scmp.eq.s32.totalorder %s23, 0
    %p103 = por %p101, %p102
    %p104 = scmp.ne.s32.totalorder %s92, %s93
    %p105 = scmp.eq.s32.totalorder %s24, 3
    %p106 = por %p104, %p105
    %p108 = scmp.ne.s32.totalorder %s93, %s107
    %p109 = scmp.eq.s32.totalorder %s24, 0
    %p110 = por %p108, %p109
    %s112 = sadd.s32 %s111, 1
    %p115 = scmp.eq.s32.totalorder %s18, 3
    %p116 = scmp.ne.s32.totalorder %s111, %s113
    %p117 = scmp.eq.s32.totalorder %s18, 0
    %p118 = por %p116, %p117
    %p119 = scmp.ne.s32.totalorder %s111, %s113
    %p120 = scmp.eq.s32.totalorder %s23, 3
    %p121 = por %p119, %p120
    %p122 = scmp.ne.s32.totalorder %s113, %s114
    %p123 = scmp.eq.s32.totalorder %s23, 0
    %p124 = por %p122, %p123
    %p125 = scmp.ne.s32.totalorder %s113, %s114
    %p126 = scmp.eq.s32.totalorder %s24, 3
    %p127 = por %p125, %p126
    %p129 = scmp.ne.s32.totalorder %s114, %s128
    %p130 = scmp.eq.s32.totalorder %s24, 0
    %p131 = por %p129, %p130
    %s132 = ssub.s32 %s26, %s33
    %p133 = scmp.eq.s32.totalorder %s132, 0
    %s135 = sadd.s32 %s134, 1
    %s136 = scalar_select %p133, %s134, %s135
    %p139 = pneg %p133
    %p140 = scmp.eq.s32.totalorder %s18, 3
    %p141 = por %p139, %p140
    %p142 = scmp.ne.s32.totalorder %s134, %s137
    %p143 = scmp.eq.s32.totalorder %s18, 0
    %p144 = por %p142, %p143
    %p145 = scmp.ne.s32.totalorder %s134, %s137
    %p146 = scmp.eq.s32.totalorder %s23, 3
    %p147 = por %p145, %p146
    %p148 = scmp.ne.s32.totalorder %s137, %s138
    %p149 = scmp.eq.s32.totalorder %s23, 0
    %p150 = por %p148, %p149
    %p151 = scmp.ne.s32.totalorder %s137, %s138
    %p152 = scmp.eq.s32.totalorder %s24, 3
    %p153 = por %p151, %p152
    %p155 = scmp.ne.s32.totalorder %s138, %s154
    %p156 = scmp.eq.s32.totalorder %s24, 0
    %p157 = por %p155, %p156
    %s158 = ssub.s32 %s26, %s33
    %p159 = scmp.eq.s32.totalorder %s158, 0
    %s161 = sadd.s32 %s160, 1
    %s162 = scalar_select %p159, %s160, %s161
    %p165 = pneg %p159
    %p166 = scmp.eq.s32.totalorder %s18, 3
    %p167 = por %p165, %p166
    %p168 = scmp.ne.s32.totalorder %s160, %s163
    %p169 = scmp.eq.s32.totalorder %s18, 0
    %p170 = por %p168, %p169
    %p171 = scmp.ne.s32.totalorder %s160, %s163
    %p172 = scmp.eq.s32.totalorder %s23, 3
    %p173 = por %p171, %p172
    %p174 = scmp.ne.s32.totalorder %s163, %s164
    %p175 = scmp.eq.s32.totalorder %s23, 0
    %p176 = por %p174, %p175
    %p177 = scmp.ne.s32.totalorder %s163, %s164
    %p178 = scmp.eq.s32.totalorder %s24, 3
    %p179 = por %p177, %p178
    %p181 = scmp.ne.s32.totalorder %s164, %s180
    %p182 = scmp.eq.s32.totalorder %s24, 0
    %p183 = por %p181, %p182
    %s184 = ssub.s32 %s26, %s33
    %p185 = scmp.eq.s32.totalorder %s184, 0
    %s187 = sadd.s32 %s186, 1
    %s188 = scalar_select %p185, %s186, %s187
    %p191 = pneg %p185
    %p192 = scmp.eq.s32.totalorder %s18, 3
    %p193 = por %p191, %p192
    %p194 = scmp.ne.s32.totalorder %s186, %s189
    %p195 = scmp.eq.s32.totalorder %s18, 0
    %p196 = por %p194, %p195
    %p197 = scmp.ne.s32.totalorder %s186, %s189
    %p198 = scmp.eq.s32.totalorder %s23, 3
    %p199 = por %p197, %p198
    %p200 = scmp.ne.s32.totalorder %s189, %s190
    %p201 = scmp.eq.s32.totalorder %s23, 0
    %p202 = por %p200, %p201
    %p203 = scmp.ne.s32.totalorder %s189, %s190
    %p204 = scmp.eq.s32.totalorder %s24, 3
    %p205 = por %p203, %p204
    %p207 = scmp.ne.s32.totalorder %s190, %s206
    %p208 = scmp.eq.s32.totalorder %s24, 0
    %p209 = por %p207, %p208
    %s210 = ssub.s32 %s26, %s33
    %p211 = scmp.eq.s32.totalorder %s210, 0
    %s213 = sadd.s32 %s212, 1
    %s214 = scalar_select %p211, %s212, %s213
    %p217 = pneg %p211
    %p218 = scmp.eq.s32.totalorder %s18, 3
    %p219 = por %p217, %p218
    %p220 = scmp.ne.s32.totalorder %s212, %s215
    %p221 = scmp.eq.s32.totalorder %s18, 0
    %p222 = por %p220, %p221
    %p223 = scmp.ne.s32.totalorder %s212, %s215
    %p224 = scmp.eq.s32.totalorder %s23, 3
    %p225 = por %p223, %p224
    %p226 = scmp.ne.s32.totalorder %s215, %s216
    %p227 = scmp.eq.s32.totalorder %s23, 0
    %p228 = por %p226, %p227
    %p229 = scmp.ne.s32.totalorder %s215, %s216
    %p230 = scmp.eq.s32.totalorder %s24, 3
    %p231 = por %p229, %p230
    %p233 = scmp.ne.s32.totalorder %s216, %s232
    %p234 = scmp.eq.s32.totalorder %s24, 0
    %p235 = por %p233, %p234
    %s236 = ssub.s32 %s26, %s33
    %p237 = scmp.eq.s32.totalorder %s236, 0
    %s239 = sadd.s32 %s238, 1
    %s240 = scalar_select %p237, %s238, %s239
    %p243 = pneg %p237
    %p244 = scmp.eq.s32.totalorder %s18, 3
    %p245 = por %p243, %p244
    %p246 = scmp.ne.s32.totalorder %s238, %s241
    %p247 = scmp.eq.s32.totalorder %s18, 0
    %p248 = por %p246, %p247
    %p249 = scmp.ne.s32.totalorder %s238, %s241
    %p250 = scmp.eq.s32.totalorder %s23, 3
    %p251 = por %p249, %p250
    %p252 = scmp.ne.s32.totalorder %s241, %s242
    %p253 = scmp.eq.s32.totalorder %s23, 0
    %p254 = por %p252, %p253
    %p255 = scmp.ne.s32.totalorder %s241, %s242
    %p256 = scmp.eq.s32.totalorder %s24, 3
    %p257 = por %p255, %p256
    %p259 = scmp.ne.s32.totalorder %s242, %s258
    %p260 = scmp.eq.s32.totalorder %s24, 0
    %p261 = por %p259, %p260
    %s262 = ssub.s32 %s26, %s33
    %p263 = scmp.eq.s32.totalorder %s262, 0
    %s265 = sadd.s32 %s264, 1
    %s266 = scalar_select %p263, %s264, %s265
    %p269 = pneg %p263
    %p270 = scmp.eq.s32.totalorder %s18, 3
    %p271 = por %p269, %p270
    %p272 = scmp.ne.s32.totalorder %s264, %s267
    %p273 = scmp.eq.s32.totalorder %s18, 0
    %p274 = por %p272, %p273
    %p275 = scmp.ne.s32.totalorder %s264, %s267
    %p276 = scmp.eq.s32.totalorder %s23, 3
    %p277 = por %p275, %p276
    %p278 = scmp.ne.s32.totalorder %s267, %s268
    %p279 = scmp.eq.s32.totalorder %s23, 0
    %p280 = por %p278, %p279
    %p281 = scmp.ne.s32.totalorder %s267, %s268
    %p282 = scmp.eq.s32.totalorder %s24, 3
    %p283 = por %p281, %p282
    %p285 = scmp.ne.s32.totalorder %s268, %s284
    %p286 = scmp.eq.s32.totalorder %s24, 0
    %p287 = por %p285, %p286
    %s288 = ssub.s32 %s26, %s33
    %p289 = scmp.eq.s32.totalorder %s288, 0
    %s291 = sadd.s32 %s290, 1
    %s292 = scalar_select %p289, %s290, %s291
    %p295 = pneg %p289
    %p296 = scmp.eq.s32.totalorder %s18, 3
    %p297 = por %p295, %p296
    %p298 = scmp.ne.s32.totalorder %s290, %s293
    %p299 = scmp.eq.s32.totalorder %s18, 0
    %p300 = por %p298, %p299
    %p301 = scmp.ne.s32.totalorder %s290, %s293
    %p302 = scmp.eq.s32.totalorder %s23, 3
    %p303 = por %p301, %p302
    %p304 = scmp.ne.s32.totalorder %s293, %s294
    %p305 = scmp.eq.s32.totalorder %s23, 0
    %p306 = por %p304, %p305
    %p307 = scmp.ne.s32.totalorder %s293, %s294
    %p308 = scmp.eq.s32.totalorder %s24, 3
    %p309 = por %p307, %p308
    %p311 = scmp.ne.s32.totalorder %s294, %s310
    %p312 = scmp.eq.s32.totalorder %s24, 0
    %p313 = por %p311, %p312
    %s314 = ssub.s32 %s26, %s33
    %p315 = scmp.eq.s32.totalorder %s314, 0
    %s317 = sadd.s32 %s316, 1
    %s318 = scalar_select %p315, %s316, %s317
    %p321 = pneg %p315
    %p322 = scmp.eq.s32.totalorder %s18, 3
    %p323 = por %p321, %p322
    %p324 = scmp.ne.s32.totalorder %s316, %s319
    %p325 = scmp.eq.s32.totalorder %s18, 0
    %p326 = por %p324, %p325
    %p327 = scmp.ne.s32.totalorder %s316, %s319
    %p328 = scmp.eq.s32.totalorder %s23, 3
    %p329 = por %p327, %p328
    %p330 = scmp.ne.s32.totalorder %s319, %s320
    %p331 = scmp.eq.s32.totalorder %s23, 0
    %p332 = por %p330, %p331
    %p333 = scmp.ne.s32.totalorder %s319, %s320
    %p334 = scmp.eq.s32.totalorder %s24, 3
    %p335 = por %p333, %p334
    %p337 = scmp.ne.s32.totalorder %s320, %s336
    %p338 = scmp.eq.s32.totalorder %s24, 0
    %p339 = por %p337, %p338
    %s340 = ssub.s32 %s25, %s37
    %p341 = scmp.eq.s32.totalorder %s340, 0
    %s343 = sadd.s32 %s342, 1
    %s344 = scalar_select %p341, %s342, %s343
    %p347 = pneg %p341
    %p348 = scmp.eq.s32.totalorder %s18, 3
    %p349 = por %p347, %p348
    %p350 = scmp.ne.s32.totalorder %s342, %s345
    %p351 = scmp.eq.s32.totalorder %s18, 0
    %p352 = por %p350, %p351
    %p353 = scmp.ne.s32.totalorder %s342, %s345
    %p354 = scmp.eq.s32.totalorder %s23, 3
    %p355 = por %p353, %p354
    %p356 = scmp.ne.s32.totalorder %s345, %s346
    %p357 = scmp.eq.s32.totalorder %s23, 0
    %p358 = por %p356, %p357
    %p359 = scmp.ne.s32.totalorder %s345, %s346
    %p360 = scmp.eq.s32.totalorder %s24, 3
    %p361 = por %p359, %p360
    %p363 = scmp.ne.s32.totalorder %s346, %s362
    %p364 = scmp.eq.s32.totalorder %s24, 0
    %p365 = por %p363, %p364
    %p366 = scmp.le.s32.totalorder 1, %s18
    %p367 = scmp.lt.s32.totalorder %s18, 5
    %p368 = pnand %p366, %p367
    %p369 = pneg %p368
    // Predicated region
    $region9: #{bert_forward.2} parent=5 // pred_check
      _
    $region10: #{bert_forward.2} parent=5 // pred_check_branch
      %371 = sbr.rel (%p368) target = $region12
    $region11: #{bert_forward.2} parent=5 // pred_region
      %s372 = ssub.s32 %s18, 1
      // Predicated region
      $region13: #{bert_forward.2} parent=11 // pred_check
        %p373 = pneg %p103
      $region14: #{bert_forward.2} parent=11 // pred_check_branch
        %375 = sbr.rel (%p373) target = $region16
      $region15: #{bert_forward.2} parent=11 // pred_region
        _
      $region16: #{bert_forward.2} parent=11 // pred_fallthru
        _
      // Predicated region
      $region17: #{bert_forward.2} parent=11 // pred_check
        %p376 = pneg %p124
      $region18: #{bert_forward.2} parent=11 // pred_check_branch
        %378 = sbr.rel (%p376) target = $region20
      $region19: #{bert_forward.2} parent=11 // pred_region
        _
      $region20: #{bert_forward.2} parent=11 // pred_fallthru
        _
    $region12: #{bert_forward.2} parent=5 // pred_fallthru
      _
    %p379 = scmp.lt.s32.totalorder %s18, 4
    // Predicated region
    $region21: #{bert_forward.2} parent=5 // pred_check
      %p380 = pneg %p379
    $region22: #{bert_forward.2} parent=5 // pred_check_branch
      %382 = sbr.rel (%p380) target = $region24
    $region23: #{bert_forward.2} parent=5 // pred_region
      // Predicated region
      $region25: #{bert_forward.2} parent=23 // pred_check
        %p383 = pneg %p50
      $region26: #{bert_forward.2} parent=23 // pred_check_branch
        %385 = sbr.rel (%p383) target = $region28
      $region27: #{bert_forward.2} parent=23 // pred_region
        %p386 = scmp.lt.s32.totalorder %s25, 1
        %s387 = scalar_select %p386, %s25, 1
        %s388 = smul.addr %s387, 8
        %s389 = scalar_lea.vmem %s0, %s388
      $region28: #{bert_forward.2} parent=23 // pred_fallthru
        _
      // Predicated region
      $region29: #{bert_forward.2} parent=23 // pred_check
        %p390 = pneg %p76
      $region30: #{bert_forward.2} parent=23 // pred_check_branch
        %392 = sbr.rel (%p390) target = $region32
      $region31: #{bert_forward.2} parent=23 // pred_region
        %p393 = scmp.lt.s32.totalorder %s25, 1
        %s394 = scalar_select %p393, %s25, 1
        %s395 = scalar_lea.vmem %s1, %s394
      $region32: #{bert_forward.2} parent=23 // pred_fallthru
        _
      // Predicated region
      $region33: #{bert_forward.2} parent=23 // pred_check
        %p396 = pneg %p144
      $region34: #{bert_forward.2} parent=23 // pred_check_branch
        %398 = sbr.rel (%p396) target = $region36
      $region35: #{bert_forward.2} parent=23 // pred_region
        %p399 = scmp.lt.s32.totalorder %s26, 1
        %s400 = scalar_select %p399, %s26, 1
        %s401 = smul.addr %s400, 16
        %s402 = smul.addr %s401, 8
        %s403 = scalar_lea.vmem %s4, %s402
      $region36: #{bert_forward.2} parent=23 // pred_fallthru
        _
      // Predicated region
      $region37: #{bert_forward.2} parent=23 // pred_check
        %p404 = pneg %p170
      $region38: #{bert_forward.2} parent=23 // pred_check_branch
        %406 = sbr.rel (%p404) target = $region40
      $region39: #{bert_forward.2} parent=23 // pred_region
        %p407 = scmp.lt.s32.totalorder %s26, 1
        %s408 = scalar_select %p407, %s26, 1
        %s409 = smul.addr %s408, 2
        %s410 = scalar_lea.vmem %s5, %s409
      $region40: #{bert_forward.2} parent=23 // pred_fallthru
        _
      // Predicated region
      $region41: #{bert_forward.2} parent=23 // pred_check
        %p411 = pneg %p196
      $region42: #{bert_forward.2} parent=23 // pred_check_branch
        %413 = sbr.rel (%p411) target = $region44
      $region43: #{bert_forward.2} parent=23 // pred_region
        %p414 = scmp.lt.s32.totalorder %s26, 1
        %s415 = scalar_select %p414, %s26, 1
        %s416 = smul.addr %s415, 8
        %s417 = smul.addr %s416, 8
        %s418 = scalar_lea.vmem %s6, %s417
      $region44: #{bert_forward.2} parent=23 // pred_fallthru
        _
      // Predicated region
      $region45: #{bert_forward.2} parent=23 // pred_check
        %p419 = pneg %p222
      $region46: #{bert_forward.2} parent=23 // pred_check_branch
        %421 = sbr.rel (%p419) target = $region48
      $region47: #{bert_forward.2} parent=23 // pred_region
        %p422 = scmp.lt.s32.totalorder %s26, 1
        %s423 = scalar_select %p422, %s26, 1
        %s424 = scalar_lea.vmem %s7, %s423
      $region48: #{bert_forward.2} parent=23 // pred_fallthru
        _
      // Predicated region
      $region49: #{bert_forward.2} parent=23 // pred_check
        %p425 = pneg %p248
      $region50: #{bert_forward.2} parent=23 // pred_check_branch
        %427 = sbr.rel (%p425) target = $region52
      $region51: #{bert_forward.2} parent=23 // pred_region
        %p428 = scmp.lt.s32.totalorder %s26, 1
        %s429 = scalar_select %p428, %s26, 1
        %s430 = smul.addr %s429, 8
        %s431 = smul.addr %s430, 8
        %s432 = scalar_lea.vmem %s8, %s431
      $region52: #{bert_forward.2} parent=23 // pred_fallthru
        _
      // Predicated region
      $region53: #{bert_forward.2} parent=23 // pred_check
        %p433 = pneg %p274
      $region54: #{bert_forward.2} parent=23 // pred_check_branch
        %435 = sbr.rel (%p433) target = $region56
      $region55: #{bert_forward.2} parent=23 // pred_region
        %p436 = scmp.lt.s32.totalorder %s26, 1
        %s437 = scalar_select %p436, %s26, 1
        %s438 = scalar_lea.vmem %s9, %s437
      $region56: #{bert_forward.2} parent=23 // pred_fallthru
        _
      // Predicated region
      $region57: #{bert_forward.2} parent=23 // pred_check
        %p439 = pneg %p300
      $region58: #{bert_forward.2} parent=23 // pred_check_branch
        %441 = sbr.rel (%p439) target = $region60
      $region59: #{bert_forward.2} parent=23 // pred_region
        %p442 = scmp.lt.s32.totalorder %s26, 1
        %s443 = scalar_select %p442, %s26, 1
        %s444 = smul.addr %s443, 16
        %s445 = smul.addr %s444, 8
        %s446 = scalar_lea.vmem %s10, %s445
      $region60: #{bert_forward.2} parent=23 // pred_fallthru
        _
      // Predicated region
      $region61: #{bert_forward.2} parent=23 // pred_check
        %p447 = pneg %p326
      $region62: #{bert_forward.2} parent=23 // pred_check_branch
        %449 = sbr.rel (%p447) target = $region64
      $region63: #{bert_forward.2} parent=23 // pred_region
        %p450 = scmp.lt.s32.totalorder %s26, 1
        %s451 = scalar_select %p450, %s26, 1
        %s452 = scalar_lea.vmem %s11, %s451
      $region64: #{bert_forward.2} parent=23 // pred_fallthru
        _
    $region24: #{bert_forward.2} parent=5 // pred_fallthru
      _
    %p453 = scmp.le.s32.totalorder 1, %s18
    %p454 = scmp.lt.s32.totalorder %s18, 5
    %p455 = pnand %p453, %p454
    %p456 = pneg %p455
    // Predicated region
    $region65: #{bert_forward.2} parent=5 // pred_check
      _
    $region66: #{bert_forward.2} parent=5 // pred_check_branch
      %458 = sbr.rel (%p455) target = $region68
    $region67: #{bert_forward.2} parent=5 // pred_region
      %s459 = ssub.s32 %s18, 1
      %p460 = scmp.lt.s32.totalorder %s27, 1
      %s461 = scalar_select %p460, %s27, 1
      %s462 = smul.addr %s461, 8
      %s463 = scalar_lea.vmem %s0, %s462
      %p464 = pneg %p56
      %p465 = pneg %p53
      %p466 = scmp.lt.s32.totalorder %s27, 1
      %s467 = scalar_select %p466, %s27, 1
      %s468 = scalar_lea.vmem %s1, %s467
      %p469 = pneg %p82
      %p470 = pneg %p79
      %p471 = pneg %p103
      %p472 = pneg %p100
      %p473 = pneg %p124
      %p474 = pneg %p121
      %p475 = scmp.lt.s32.totalorder %s28, 1
      %s476 = scalar_select %p475, %s28, 1
      %s477 = smul.addr %s476, 16
      %s478 = smul.addr %s477, 8
      %s479 = scalar_lea.vmem %s4, %s478
      %p480 = pneg %p150
      %p481 = pneg %p147
      %p482 = scmp.lt.s32.totalorder %s28, 1
      %s483 = scalar_select %p482, %s28, 1
      %s484 = smul.addr %s483, 2
      %s485 = scalar_lea.vmem %s5, %s484
      %p486 = pneg %p176
      %p487 = pneg %p173
      %p488 = scmp.lt.s32.totalorder %s28, 1
      %s489 = scalar_select %p488, %s28, 1
      %s490 = smul.addr %s489, 8
      %s491 = smul.addr %s490, 8
      %s492 = scalar_lea.vmem %s6, %s491
      %p493 = pneg %p202
      %p494 = pneg %p199
      %p495 = scmp.lt.s32.totalorder %s28, 1
      %s496 = scalar_select %p495, %s28, 1
      %s497 = scalar_lea.vmem %s7, %s496
      %p498 = pneg %p228
      %p499 = pneg %p225
      %p500 = scmp.lt.s32.totalorder %s28, 1
      %s501 = scalar_select %p500, %s28, 1
      %s502 = smul.addr %s501, 8
      %s503 = smul.addr %s502, 8
      %s504 = scalar_lea.vmem %s8, %s503
      %p505 = pneg %p254
      %p506 = pneg %p251
      %p507 = scmp.lt.s32.totalorder %s28, 1
      %s508 = scalar_select %p507, %s28, 1
      %s509 = scalar_lea.vmem %s9, %s508
      %p510 = pneg %p280
      %p511 = pneg %p277
      %p512 = scmp.lt.s32.totalorder %s28, 1
      %s513 = scalar_select %p512, %s28, 1
      %s514 = smul.addr %s513, 16
      %s515 = smul.addr %s514, 8
      %s516 = scalar_lea.vmem %s10, %s515
      %p517 = pneg %p306
      %p518 = pneg %p303
      %p519 = scmp.lt.s32.totalorder %s28, 1
      %s520 = scalar_select %p519, %s28, 1
      %s521 = scalar_lea.vmem %s11, %s520
      %p522 = pneg %p332
      %p523 = pneg %p329
      %p524 = pneg %p358
      %p525 = pneg %p355
      %p526 = scmp.lt.s32.totalorder %s27, 1
      %s527 = scalar_select %p526, %s27, 1
      %s528 = smul.addr %s527, 8
      %s529 = scalar_lea.vmem %s12, %s528
      %p530 = scmp.lt.s32.totalorder %s27, 1
      %s531 = scalar_select %p530, %s27, 1
      %s532 = smul.addr %s531, 8
      %s533 = scalar_lea.vmem %s0, %s532
      %p534 = scmp.lt.s32.totalorder %s27, 1
      %s535 = scalar_select %p534, %s27, 1
      %s536 = scalar_lea.vmem %s1, %s535
      %p537 = scmp.lt.s32.totalorder %s28, 1
      %s538 = scalar_select %p537, %s28, 1
      %s539 = smul.addr %s538, 16
      %s540 = smul.addr %s539, 8
      %s541 = scalar_lea.vmem %s4, %s540
      %p542 = scmp.lt.s32.totalorder %s28, 1
      %s543 = scalar_select %p542, %s28, 1
      %s544 = smul.addr %s543, 2
      %s545 = scalar_lea.vmem %s5, %s544
      %p546 = scmp.lt.s32.totalorder %s28, 1
      %s547 = scalar_select %p546, %s28, 1
      %s548 = smul.addr %s547, 8
      %s549 = smul.addr %s548, 8
      %s550 = scalar_lea.vmem %s6, %s549
      %p551 = scmp.lt.s32.totalorder %s28, 1
      %s552 = scalar_select %p551, %s28, 1
      %s553 = scalar_lea.vmem %s7, %s552
      %p554 = scmp.lt.s32.totalorder %s28, 1
      %s555 = scalar_select %p554, %s28, 1
      %s556 = smul.addr %s555, 8
      %s557 = smul.addr %s556, 8
      %s558 = scalar_lea.vmem %s8, %s557
      %p559 = scmp.lt.s32.totalorder %s28, 1
      %s560 = scalar_select %p559, %s28, 1
      %s561 = scalar_lea.vmem %s9, %s560
      %p562 = scmp.lt.s32.totalorder %s28, 1
      %s563 = scalar_select %p562, %s28, 1
      %s564 = smul.addr %s563, 16
      %s565 = smul.addr %s564, 8
      %s566 = scalar_lea.vmem %s10, %s565
      %p567 = scmp.lt.s32.totalorder %s28, 1
      %s568 = scalar_select %p567, %s28, 1
      %s569 = scalar_lea.vmem %s11, %s568
      %p570 = scmp.lt.s32.totalorder %s27, 1
      %s571 = scalar_select %p570, %s27, 1
      %s572 = smul.addr %s571, 8
      %s573 = scalar_lea.vmem %s12, %s572
      %v574 = vld [vmem:[%s533] sm:$0xff]
      %v575 = vld [vmem:[%s2] sm:$0x1]
      %v576 = vld [vmem:[%s3] sm:$0x1]
      %vm577 = vcmask 523264
      %v578 = vsel %vm577, %v574, 0.0
      %579 = vadd.xlane.f32.xlu0 %v578
      %v580 = vpop.xlane.xlu0 %579
      %v581 = vmul.f32 %v580, 0.015625
      %v582 = vsub.f32 %v574, %v581
      %v583 = vmul.f32 %v582, %v582
      %v584 = vsel %vm577, %v583, 0.0
      %585 = vadd.xlane.f32.xlu0 %v584
      %v586 = vpop.xlane.xlu0 %585
      %v587 = vmul.f32 %v586, 0.015625
      %v588 = vadd.f32 %v587, 1e-05
      %v589 = vrsqrt.pop %v588
      %v590 = vmul.f32 %v582, %v589
      %v592 = vlaneseq
      %v593 = vshrl.u32 %v592, 7
      %v594 = vsub.s32 0, %v593
      %v595 = vrot.slane %v575, %v594
      %v597 = vmul.f32 %v590, %v595
      %v599 = vlaneseq
      %v600 = vshrl.u32 %v599, 7
      %v601 = vsub.s32 0, %v600
      %v602 = vrot.slane %v576, %v601
      %v604 = vadd.f32 %v597, %v602
      %v605 = vld [vmem:[%s536] sm:$0x1]
      %v606 = vld [vmem:[%s541] sm:$0xff]
      %v607 = vld [vmem:[%s541 + $0x8] sm:$0xff]
      %v608 = vld [vmem:[%s541 + $0x10] sm:$0xff]
      %v609 = vld [vmem:[%s541 + $0x18] sm:$0xff]
      %v610 = vld [vmem:[%s541 + $0x20] sm:$0xff]
      %v611 = vld [vmem:[%s541 + $0x28] sm:$0xff]
      %v612 = vld [vmem:[%s541 + $0x30] sm:$0xff]
      %v613 = vld [vmem:[%s541 + $0x38] sm:$0xff]
      %v614 = vld [vmem:[%s541 + $0x40] sm:$0xff]
      %v615 = vld [vmem:[%s541 + $0x48] sm:$0xff]
      %v616 = vld [vmem:[%s541 + $0x50] sm:$0xff]
      %v617 = vld [vmem:[%s541 + $0x58] sm:$0xff]
      %v618 = vld [vmem:[%s541 + $0x60] sm:$0xff]
      %v619 = vld [vmem:[%s541 + $0x68] sm:$0xff]
      %v620 = vld [vmem:[%s541 + $0x70] sm:$0xff]
      %v621 = vld [vmem:[%s541 + $0x78] sm:$0xff]
      %v622 = vld [vmem:[%s545] sm:$0x3]
      %v624 = vlaneseq
      %v625 = vshrl.u32 %v624, 7
      %v626 = vsub.s32 0, %v625
      %v627 = vrot.slane %v622, %v626
      %v628 = vlaneseq
      %v629 = vshrl.u32 %v628, 7
      %v630 = vsub.s32 1, %v629
      %v631 = vrot.slane %v622, %v630
      %v635 = vsel %vm577, %v604, 0
      %637 = vmatprep.subr.mxu0 0.0
      %638 = vmatpush1.msra.mxu0 0.0
      %639 = vmatprep.subr.mxu0 0.0
      %640 = vmatpush1.msra.mxu0 0.0
      %641 = vmatprep.subr.mxu0 0.0
      %642 = vmatpush1.msra.mxu0 0.0
      %643 = vmatprep.subr.mxu0 0.0
      %644 = vmatpush1.msra.mxu0 0.0
      %645 = vmatprep.subr.mxu0 0.0
      %646 = vmatpush1.msra.mxu0 0.0
      %647 = vmatprep.subr.mxu0 0.0
      %648 = vmatpush1.msra.mxu0 0.0
      %649 = vmatprep.subr.mxu0 0.0
      %650 = vmatpush1.msra.mxu0 0.0
      %651 = vmatprep.subr.mxu0 0.0
      %652 = vmatpush1.msra.mxu0 0.0
      %653 = vmatprep.subr.mxu0 %v621
      %654 = vmatpush1.msra.mxu0 %v620
      %655 = vmatprep.subr.mxu0 %v619
      %656 = vmatpush1.msra.mxu0 %v618
      %657 = vmatprep.subr.mxu0 %v617
      %658 = vmatpush1.msra.mxu0 %v616
      %659 = vmatprep.subr.mxu0 %v615
      %660 = vmatpush1.msra.mxu0 %v614
      %661 = vmatprep.subr.mxu0 %v613
      %662 = vmatpush1.msra.mxu0 %v612
      %663 = vmatprep.subr.mxu0 %v611
      %664 = vmatpush1.msra.mxu0 %v610
      %665 = vmatprep.subr.mxu0 %v609
      %666 = vmatpush1.msra.mxu0 %v608
      %667 = vmatprep.subr.mxu0 %v607
      %668 = vmatpush1.msra.mxu0 %v606
      %669 = vmatprep.subr.mxu0 0.0
      %670 = vmatpush2.msra.mxu0 0.0
      %671 = vmatprep.subr.mxu0 0.0
      %672 = vmatpush2.msra.mxu0 0.0
      %673 = vmatprep.subr.mxu0 0.0
      %674 = vmatpush2.msra.mxu0 0.0
      %675 = vmatprep.subr.mxu0 0.0
      %676 = vmatpush2.msra.mxu0 0.0
      %677 = vmatprep.subr.mxu0 0.0
      %678 = vmatpush2.msra.mxu0 0.0
      %679 = vmatprep.subr.mxu0 0.0
      %680 = vmatpush2.msra.mxu0 0.0
      %681 = vmatprep.subr.mxu0 0.0
      %682 = vmatpush2.msra.mxu0 0.0
      %683 = vmatprep.subr.mxu0 0.0
      %684 = vmatpush2.msra.mxu0 0.0
      %685 = vmatprep.subr.mxu0 0.0
      %686 = vmatpush2.msra.mxu0 0.0
      %687 = vmatprep.subr.mxu0 0.0
      %688 = vmatpush2.msra.mxu0 0.0
      %689 = vmatprep.subr.mxu0 0.0
      %690 = vmatpush2.msra.mxu0 0.0
      %691 = vmatprep.subr.mxu0 0.0
      %692 = vmatpush2.msra.mxu0 0.0
      %693 = vmatprep.subr.mxu0 0.0
      %694 = vmatpush2.msra.mxu0 0.0
      %695 = vmatprep.subr.mxu0 0.0
      %696 = vmatpush2.msra.mxu0 0.0
      %697 = vmatprep.subr.mxu0 0.0
      %698 = vmatpush2.msra.mxu0 0.0
      %699 = vmatprep.subr.mxu0 0.0
      %700 = vmatpush2.msra.mxu0 0.0
      %701 = vmatprep.mubr.f32.mxu0 0.0
      %702 = vmatmul.mubr.f32.gmra.mxu0 %v635
      %v703 = vpop.f32.mrf.mxu0
      %v704 = vadd.f32 %v627, %v703
      %v705 = vpop.f32.mrf.mxu0
      %v706 = vadd.f32 %v631, %v705
      %707 = vdwg.mxu0
      %v708 = vmul.f32 %v704, 0.25
      %710 = vrot.lane.b32.xlu0 %v708, 112
      %v711 = vpop.permute.xlu0 %710
      %712 = vrot.lane.b32.xlu0 %v708, 96
      %v713 = vpop.permute.xlu0 %712
      %714 = vrot.lane.b32.xlu0 %v708, 80
      %v715 = vpop.permute.xlu0 %714
      %717 = vrot.lane.b32.xlu0 %v704, 112
      %v718 = vpop.permute.xlu0 %717
      %719 = vrot.lane.b32.xlu0 %v704, 96
      %v720 = vpop.permute.xlu0 %719
      %721 = vrot.lane.b32.xlu0 %v704, 80
      %v722 = vpop.permute.xlu0 %721
      %724 = vrot.lane.b32.xlu0 %v706, 112
      %v725 = vpop.permute.xlu0 %724
      %727 = vrot.lane.b32.xlu0 %v706, 96
      %v728 = vpop.permute.xlu0 %727
      %730 = vrot.lane.b32.xlu0 %v706, 80
      %v731 = vpop.permute.xlu0 %730
      %v734 = vlaneseq
      %v735 = vshrl.u32 %v734, 7
      %v736 = vsub.s32 0, %v735
      %v737 = vrot.slane %v605, %v736
      %739 = vrot.lane.b32.xlu0 %v704, 64
      %v740 = vpop.permute.xlu0 %739
      %vm741 = vcmask 130048
      %v742 = vsel %vm741, %v708, 0
      %v744 = vsel %vm741, %v740, 0
      %746 = vmatprep.subr.mxu0 0.0
      %747 = vmatpush1.xpose.msra.mxu0 0.0
      %748 = vmatprep.subr.mxu0 0.0
      %749 = vmatpush1.xpose.msra.mxu0 0.0
      %750 = vmatprep.subr.mxu0 0.0
      %751 = vmatpush1.xpose.msra.mxu0 0.0
      %752 = vmatprep.subr.mxu0 0.0
      %753 = vmatpush1.xpose.msra.mxu0 0.0
      %754 = vmatprep.subr.mxu0 0.0
      %755 = vmatpush1.xpose.msra.mxu0 0.0
      %756 = vmatprep.subr.mxu0 0.0
      %757 = vmatpush1.xpose.msra.mxu0 0.0
      %758 = vmatprep.subr.mxu0 0.0
      %759 = vmatpush1.xpose.msra.mxu0 0.0
      %760 = vmatprep.subr.mxu0 0.0
      %761 = vmatpush1.xpose.msra.mxu0 0.0
      %762 = vmatprep.subr.mxu0 0.0
      %763 = vmatpush1.xpose.msra.mxu0 0.0
      %764 = vmatprep.subr.mxu0 0.0
      %765 = vmatpush1.xpose.msra.mxu0 0.0
      %766 = vmatprep.subr.mxu0 0.0
      %767 = vmatpush1.xpose.msra.mxu0 0.0
      %768 = vmatprep.subr.mxu0 0.0
      %769 = vmatpush1.xpose.msra.mxu0 0.0
      %770 = vmatprep.subr.mxu0 0.0
      %771 = vmatpush1.xpose.msra.mxu0 0.0
      %772 = vmatprep.subr.mxu0 0.0
      %773 = vmatpush1.xpose.msra.mxu0 0.0
      %774 = vmatprep.subr.mxu0 0.0
      %775 = vmatpush1.xpose.msra.mxu0 0.0
      %776 = vmatprep.subr.mxu0 0.0
      %777 = vmatpush1.xpose.msra.mxu0 %v744
      %778 = vmatprep.subr.mxu0 0.0
      %779 = vmatpush2.xpose.msra.mxu0 0.0
      %780 = vmatprep.subr.mxu0 0.0
      %781 = vmatpush2.xpose.msra.mxu0 0.0
      %782 = vmatprep.subr.mxu0 0.0
      %783 = vmatpush2.xpose.msra.mxu0 0.0
      %784 = vmatprep.subr.mxu0 0.0
      %785 = vmatpush2.xpose.msra.mxu0 0.0
      %786 = vmatprep.subr.mxu0 0.0
      %787 = vmatpush2.xpose.msra.mxu0 0.0
      %788 = vmatprep.subr.mxu0 0.0
      %789 = vmatpush2.xpose.msra.mxu0 0.0
      %790 = vmatprep.subr.mxu0 0.0
      %791 = vmatpush2.xpose.msra.mxu0 0.0
      %792 = vmatprep.subr.mxu0 0.0
      %793 = vmatpush2.xpose.msra.mxu0 0.0
      %794 = vmatprep.subr.mxu0 0.0
      %795 = vmatpush2.xpose.msra.mxu0 0.0
      %796 = vmatprep.subr.mxu0 0.0
      %797 = vmatpush2.xpose.msra.mxu0 0.0
      %798 = vmatprep.subr.mxu0 0.0
      %799 = vmatpush2.xpose.msra.mxu0 0.0
      %800 = vmatprep.subr.mxu0 0.0
      %801 = vmatpush2.xpose.msra.mxu0 0.0
      %802 = vmatprep.subr.mxu0 0.0
      %803 = vmatpush2.xpose.msra.mxu0 0.0
      %804 = vmatprep.subr.mxu0 0.0
      %805 = vmatpush2.xpose.msra.mxu0 0.0
      %806 = vmatprep.subr.mxu0 0.0
      %807 = vmatpush2.xpose.msra.mxu0 0.0
      %808 = vmatprep.subr.mxu0 0.0
      %809 = vmatpush2.xpose.msra.mxu0 0.0
      %810 = vmatprep.mubr.f32.mxu0 0.0
      %811 = vmatmul.mubr.f32.gmra.mxu0 %v742
      %v812 = vpop.f32.mrf.mxu0
      %v813 = vadd.f32 %v737, %v812
      %v814 = vpop.f32.mrf.mxu0
      %815 = vdwg.mxu0
      %816 = vrot.lane.b32.xlu0 %v718, 64
      %v817 = vpop.permute.xlu0 %816
      %v818 = vsel %vm741, %v711, 0
      %v820 = vsel %vm741, %v817, 0
      %822 = vmatprep.subr.mxu0 0.0
      %823 = vmatpush1.xpose.msra.mxu0 0.0
      %824 = vmatprep.subr.mxu0 0.0
      %825 = vmatpush1.xpose.msra.mxu0 0.0
      %826 = vmatprep.subr.mxu0 0.0
      %827 = vmatpush1.xpose.msra.mxu0 0.0
      %828 = vmatprep.subr.mxu0 0.0
      %829 = vmatpush1.xpose.msra.mxu0 0.0
      %830 = vmatprep.subr.mxu0 0.0
      %831 = vmatpush1.xpose.msra.mxu0 0.0
      %832 = vmatprep.subr.mxu0 0.0
      %833 = vmatpush1.xpose.msra.mxu0 0.0
      %834 = vmatprep.subr.mxu0 0.0
      %835 = vmatpush1.xpose.msra.mxu0 0.0
      %836 = vmatprep.subr.mxu0 0.0
      %837 = vmatpush1.xpose.msra.mxu0 0.0
      %838 = vmatprep.subr.mxu0 0.0
      %839 = vmatpush1.xpose.msra.mxu0 0.0
      %840 = vmatprep.subr.mxu0 0.0
      %841 = vmatpush1.xpose.msra.mxu0 0.0
      %842 = vmatprep.subr.mxu0 0.0
      %843 = vmatpush1.xpose.msra.mxu0 0.0
      %844 = vmatprep.subr.mxu0 0.0
      %845 = vmatpush1.xpose.msra.mxu0 0.0
      %846 = vmatprep.subr.mxu0 0.0
      %847 = vmatpush1.xpose.msra.mxu0 0.0
      %848 = vmatprep.subr.mxu0 0.0
      %849 = vmatpush1.xpose.msra.mxu0 0.0
      %850 = vmatprep.subr.mxu0 0.0
      %851 = vmatpush1.xpose.msra.mxu0 0.0
      %852 = vmatprep.subr.mxu0 0.0
      %853 = vmatpush1.xpose.msra.mxu0 %v820
      %854 = vmatprep.subr.mxu0 0.0
      %855 = vmatpush2.xpose.msra.mxu0 0.0
      %856 = vmatprep.subr.mxu0 0.0
      %857 = vmatpush2.xpose.msra.mxu0 0.0
      %858 = vmatprep.subr.mxu0 0.0
      %859 = vmatpush2.xpose.msra.mxu0 0.0
      %860 = vmatprep.subr.mxu0 0.0
      %861 = vmatpush2.xpose.msra.mxu0 0.0
      %862 = vmatprep.subr.mxu0 0.0
      %863 = vmatpush2.xpose.msra.mxu0 0.0
      %864 = vmatprep.subr.mxu0 0.0
      %865 = vmatpush2.xpose.msra.mxu0 0.0
      %866 = vmatprep.subr.mxu0 0.0
      %867 = vmatpush2.xpose.msra.mxu0 0.0
      %868 = vmatprep.subr.mxu0 0.0
      %869 = vmatpush2.xpose.msra.mxu0 0.0
      %870 = vmatprep.subr.mxu0 0.0
      %871 = vmatpush2.xpose.msra.mxu0 0.0
      %872 = vmatprep.subr.mxu0 0.0
      %873 = vmatpush2.xpose.msra.mxu0 0.0
      %874 = vmatprep.subr.mxu0 0.0
      %875 = vmatpush2.xpose.msra.mxu0 0.0
      %876 = vmatprep.subr.mxu0 0.0
      %877 = vmatpush2.xpose.msra.mxu0 0.0
      %878 = vmatprep.subr.mxu0 0.0
      %879 = vmatpush2.xpose.msra.mxu0 0.0
      %880 = vmatprep.subr.mxu0 0.0
      %881 = vmatpush2.xpose.msra.mxu0 0.0
      %882 = vmatprep.subr.mxu0 0.0
      %883 = vmatpush2.xpose.msra.mxu0 0.0
      %884 = vmatprep.subr.mxu0 0.0
      %885 = vmatpush2.xpose.msra.mxu0 0.0
      %886 = vmatprep.mubr.f32.mxu0 0.0
      %887 = vmatmul.mubr.f32.gmra.mxu0 %v818
      %v888 = vpop.f32.mrf.mxu0
      %v889 = vadd.f32 %v737, %v888
      %v890 = vpop.f32.mrf.mxu0
      %891 = vdwg.mxu0
      %892 = vrot.lane.b32.xlu0 %v720, 64
      %v893 = vpop.permute.xlu0 %892
      %v894 = vsel %vm741, %v713, 0
      %v896 = vsel %vm741, %v893, 0
      %898 = vmatprep.subr.mxu0 0.0
      %899 = vmatpush1.xpose.msra.mxu0 0.0
      %900 = vmatprep.subr.mxu0 0.0
      %901 = vmatpush1.xpose.msra.mxu0 0.0
      %902 = vmatprep.subr.mxu0 0.0
      %903 = vmatpush1.xpose.msra.mxu0 0.0
      %904 = vmatprep.subr.mxu0 0.0
      %905 = vmatpush1.xpose.msra.mxu0 0.0
      %906 = vmatprep.subr.mxu0 0.0
      %907 = vmatpush1.xpose.msra.mxu0 0.0
      %908 = vmatprep.subr.mxu0 0.0
      %909 = vmatpush1.xpose.msra.mxu0 0.0
      %910 = vmatprep.subr.mxu0 0.0
      %911 = vmatpush1.xpose.msra.mxu0 0.0
      %912 = vmatprep.subr.mxu0 0.0
      %913 = vmatpush1.xpose.msra.mxu0 0.0
      %914 = vmatprep.subr.mxu0 0.0
      %915 = vmatpush1.xpose.msra.mxu0 0.0
      %916 = vmatprep.subr.mxu0 0.0
      %917 = vmatpush1.xpose.msra.mxu0 0.0
      %918 = vmatprep.subr.mxu0 0.0
      %919 = vmatpush1.xpose.msra.mxu0 0.0
      %920 = vmatprep.subr.mxu0 0.0
      %921 = vmatpush1.xpose.msra.mxu0 0.0
      %922 = vmatprep.subr.mxu0 0.0
      %923 = vmatpush1.xpose.msra.mxu0 0.0
      %924 = vmatprep.subr.mxu0 0.0
      %925 = vmatpush1.xpose.msra.mxu0 0.0
      %926 = vmatprep.subr.mxu0 0.0
      %927 = vmatpush1.xpose.msra.mxu0 0.0
      %928 = vmatprep.subr.mxu0 0.0
      %929 = vmatpush1.xpose.msra.mxu0 %v896
      %930 = vmatprep.subr.mxu0 0.0
      %931 = vmatpush2.xpose.msra.mxu0 0.0
      %932 = vmatprep.subr.mxu0 0.0
      %933 = vmatpush2.xpose.msra.mxu0 0.0
      %934 = vmatprep.subr.mxu0 0.0
      %935 = vmatpush2.xpose.msra.mxu0 0.0
      %936 = vmatprep.subr.mxu0 0.0
      %937 = vmatpush2.xpose.msra.mxu0 0.0
      %938 = vmatprep.subr.mxu0 0.0
      %939 = vmatpush2.xpose.msra.mxu0 0.0
      %940 = vmatprep.subr.mxu0 0.0
      %941 = vmatpush2.xpose.msra.mxu0 0.0
      %942 = vmatprep.subr.mxu0 0.0
      %943 = vmatpush2.xpose.msra.mxu0 0.0
      %944 = vmatprep.subr.mxu0 0.0
      %945 = vmatpush2.xpose.msra.mxu0 0.0
      %946 = vmatprep.subr.mxu0 0.0
      %947 = vmatpush2.xpose.msra.mxu0 0.0
      %948 = vmatprep.subr.mxu0 0.0
      %949 = vmatpush2.xpose.msra.mxu0 0.0
      %950 = vmatprep.subr.mxu0 0.0
      %951 = vmatpush2.xpose.msra.mxu0 0.0
      %952 = vmatprep.subr.mxu0 0.0
      %953 = vmatpush2.xpose.msra.mxu0 0.0
      %954 = vmatprep.subr.mxu0 0.0
      %955 = vmatpush2.xpose.msra.mxu0 0.0
      %956 = vmatprep.subr.mxu0 0.0
      %957 = vmatpush2.xpose.msra.mxu0 0.0
      %958 = vmatprep.subr.mxu0 0.0
      %959 = vmatpush2.xpose.msra.mxu0 0.0
      %960 = vmatprep.subr.mxu0 0.0
      %961 = vmatpush2.xpose.msra.mxu0 0.0
      %962 = vmatprep.mubr.f32.mxu0 0.0
      %963 = vmatmul.mubr.f32.gmra.mxu0 %v894
      %v964 = vpop.f32.mrf.mxu0
      %v965 = vadd.f32 %v737, %v964
      %v966 = vpop.f32.mrf.mxu0
      %967 = vdwg.mxu0
      %968 = vrot.lane.b32.xlu0 %v722, 64
      %v969 = vpop.permute.xlu0 %968
      %v970 = vsel %vm741, %v715, 0
      %v972 = vsel %vm741, %v969, 0
      %974 = vmatprep.subr.mxu0 0.0
      %975 = vmatpush1.xpose.msra.mxu0 0.0
      %976 = vmatprep.subr.mxu0 0.0
      %977 = vmatpush1.xpose.msra.mxu0 0.0
      %978 = vmatprep.subr.mxu0 0.0
      %979 = vmatpush1.xpose.msra.mxu0 0.0
      %980 = vmatprep.subr.mxu0 0.0
      %981 = vmatpush1.xpose.msra.mxu0 0.0
      %982 = vmatprep.subr.mxu0 0.0
      %983 = vmatpush1.xpose.msra.mxu0 0.0
      %984 = vmatprep.subr.mxu0 0.0
      %985 = vmatpush1.xpose.msra.mxu0 0.0
      %986 = vmatprep.subr.mxu0 0.0
      %987 = vmatpush1.xpose.msra.mxu0 0.0
      %988 = vmatprep.subr.mxu0 0.0
      %989 = vmatpush1.xpose.msra.mxu0 0.0
      %990 = vmatprep.subr.mxu0 0.0
      %991 = vmatpush1.xpose.msra.mxu0 0.0
      %992 = vmatprep.subr.mxu0 0.0
      %993 = vmatpush1.xpose.msra.mxu0 0.0
      %994 = vmatprep.subr.mxu0 0.0
      %995 = vmatpush1.xpose.msra.mxu0 0.0
      %996 = vmatprep.subr.mxu0 0.0
      %997 = vmatpush1.xpose.msra.mxu0 0.0
      %998 = vmatprep.subr.mxu0 0.0
      %999 = vmatpush1.xpose.msra.mxu0 0.0
      %1000 = vmatprep.subr.mxu0 0.0
      %1001 = vmatpush1.xpose.msra.mxu0 0.0
      %1002 = vmatprep.subr.mxu0 0.0
      %1003 = vmatpush1.xpose.msra.mxu0 0.0
      %1004 = vmatprep.subr.mxu0 0.0
      %1005 = vmatpush1.xpose.msra.mxu0 %v972
      %1006 = vmatprep.subr.mxu0 0.0
      %1007 = vmatpush2.xpose.msra.mxu0 0.0
      %1008 = vmatprep.subr.mxu0 0.0
      %1009 = vmatpush2.xpose.msra.mxu0 0.0
      %1010 = vmatprep.subr.mxu0 0.0
      %1011 = vmatpush2.xpose.msra.mxu0 0.0
      %1012 = vmatprep.subr.mxu0 0.0
      %1013 = vmatpush2.xpose.msra.mxu0 0.0
      %1014 = vmatprep.subr.mxu0 0.0
      %1015 = vmatpush2.xpose.msra.mxu0 0.0
      %1016 = vmatprep.subr.mxu0 0.0
      %1017 = vmatpush2.xpose.msra.mxu0 0.0
      %1018 = vmatprep.subr.mxu0 0.0
      %1019 = vmatpush2.xpose.msra.mxu0 0.0
      %1020 = vmatprep.subr.mxu0 0.0
      %1021 = vmatpush2.xpose.msra.mxu0 0.0
      %1022 = vmatprep.subr.mxu0 0.0
      %1023 = vmatpush2.xpose.msra.mxu0 0.0
      %1024 = vmatprep.subr.mxu0 0.0
      %1025 = vmatpush2.xpose.msra.mxu0 0.0
      %1026 = vmatprep.subr.mxu0 0.0
      %1027 = vmatpush2.xpose.msra.mxu0 0.0
      %1028 = vmatprep.subr.mxu0 0.0
      %1029 = vmatpush2.xpose.msra.mxu0 0.0
      %1030 = vmatprep.subr.mxu0 0.0
      %1031 = vmatpush2.xpose.msra.mxu0 0.0
      %1032 = vmatprep.subr.mxu0 0.0
      %1033 = vmatpush2.xpose.msra.mxu0 0.0
      %1034 = vmatprep.subr.mxu0 0.0
      %1035 = vmatpush2.xpose.msra.mxu0 0.0
      %1036 = vmatprep.subr.mxu0 0.0
      %1037 = vmatpush2.xpose.msra.mxu0 0.0
      %1038 = vmatprep.mubr.f32.mxu0 0.0
      %1039 = vmatmul.mubr.f32.gmra.mxu0 %v970
      %v1040 = vpop.f32.mrf.mxu0
      %v1041 = vadd.f32 %v737, %v1040
      %v1042 = vpop.f32.mrf.mxu0
      %1043 = vdwg.mxu0
      %vm1044 = vcmask 64512
      %v1045 = vsel %vm1044, %v813, -inf
      %1046 = vmax.xlane.f32.xlu0 %v1045
      %v1047 = vpop.xlane.xlu0 %1046
      %v1048 = vsel %vm1044, %v889, -inf
      %1049 = vmax.xlane.f32.xlu0 %v1048
      %v1050 = vpop.xlane.xlu0 %1049
      %v1051 = vsel %vm1044, %v965, -inf
      %1052 = vmax.xlane.f32.xlu0 %v1051
      %v1053 = vpop.xlane.xlu0 %1052
      %v1054 = vsel %vm1044, %v1041, -inf
      %1055 = vmax.xlane.f32.xlu0 %v1054
      %v1056 = vpop.xlane.xlu0 %1055
      %v1057 = vsub.f32 %v813, %v1047
      %v1058 = vsub.f32 %v889, %v1050
      %v1059 = vsub.f32 %v965, %v1053
      %v1060 = vsub.f32 %v1041, %v1056
      %v1061 = vmul.f32 %v1057, 1.442695
      %v1062 = vpow.pop %v1061
      %v1063 = vmul.f32 %v1058, 1.442695
      %v1064 = vpow.pop %v1063
      %v1065 = vmul.f32 %v1059, 1.442695
      %v1066 = vpow.pop %v1065
      %v1067 = vmul.f32 %v1060, 1.442695
      %v1068 = vpow.pop %v1067
      %v1069 = vsel %vm1044, %v1062, 0.0
      %1070 = vadd.xlane.f32.xlu0 %v1069
      %v1071 = vpop.xlane.xlu0 %1070
      %v1072 = vsel %vm1044, %v1064, 0.0
      %1073 = vadd.xlane.f32.xlu0 %v1072
      %v1074 = vpop.xlane.xlu0 %1073
      %v1075 = vsel %vm1044, %v1066, 0.0
      %1076 = vadd.xlane.f32.xlu0 %v1075
      %v1077 = vpop.xlane.xlu0 %1076
      %v1078 = vsel %vm1044, %v1068, 0.0
      %1079 = vadd.xlane.f32.xlu0 %v1078
      %v1080 = vpop.xlane.xlu0 %1079
      %v1081 = vrcp.pop %v1071
      %v1082 = vrcp.pop %v1074
      %v1083 = vrcp.pop %v1077
      %v1084 = vrcp.pop %v1080
      %v1085 = vmul.f32 %v1062, %v1081
      %v1086 = vmul.f32 %v1064, %v1082
      %v1087 = vmul.f32 %v1066, %v1083
      %v1088 = vmul.f32 %v1068, %v1084
      %v1090 = vsel %vm1044, %v1085, 0
      %1092 = vmatprep.subr.mxu0 0.0
      %1093 = vmatpush1.msra.mxu0 0.0
      %1094 = vmatprep.subr.mxu0 0.0
      %1095 = vmatpush1.msra.mxu0 0.0
      %1096 = vmatprep.subr.mxu0 0.0
      %1097 = vmatpush1.msra.mxu0 0.0
      %1098 = vmatprep.subr.mxu0 0.0
      %1099 = vmatpush1.msra.mxu0 0.0
      %1100 = vmatprep.subr.mxu0 0.0
      %1101 = vmatpush1.msra.mxu0 0.0
      %1102 = vmatprep.subr.mxu0 0.0
      %1103 = vmatpush1.msra.mxu0 0.0
      %1104 = vmatprep.subr.mxu0 0.0
      %1105 = vmatpush1.msra.mxu0 0.0
      %1106 = vmatprep.subr.mxu0 0.0
      %1107 = vmatpush1.msra.mxu0 0.0
      %1108 = vmatprep.subr.mxu0 0.0
      %1109 = vmatpush1.msra.mxu0 0.0
      %1110 = vmatprep.subr.mxu0 0.0
      %1111 = vmatpush1.msra.mxu0 0.0
      %1112 = vmatprep.subr.mxu0 0.0
      %1113 = vmatpush1.msra.mxu0 0.0
      %1114 = vmatprep.subr.mxu0 0.0
      %1115 = vmatpush1.msra.mxu0 0.0
      %1116 = vmatprep.subr.mxu0 0.0
      %1117 = vmatpush1.msra.mxu0 0.0
      %1118 = vmatprep.subr.mxu0 0.0
      %1119 = vmatpush1.msra.mxu0 0.0
      %1120 = vmatprep.subr.mxu0 0.0
      %1121 = vmatpush1.msra.mxu0 0.0
      %1122 = vmatprep.subr.mxu0 0.0
      %1123 = vmatpush1.msra.mxu0 %v706
      %1124 = vmatprep.subr.mxu0 0.0
      %1125 = vmatpush2.msra.mxu0 0.0
      %1126 = vmatprep.subr.mxu0 0.0
      %1127 = vmatpush2.msra.mxu0 0.0
      %1128 = vmatprep.subr.mxu0 0.0
      %1129 = vmatpush2.msra.mxu0 0.0
      %1130 = vmatprep.subr.mxu0 0.0
      %1131 = vmatpush2.msra.mxu0 0.0
      %1132 = vmatprep.subr.mxu0 0.0
      %1133 = vmatpush2.msra.mxu0 0.0
      %1134 = vmatprep.subr.mxu0 0.0
      %1135 = vmatpush2.msra.mxu0 0.0
      %1136 = vmatprep.subr.mxu0 0.0
      %1137 = vmatpush2.msra.mxu0 0.0
      %1138 = vmatprep.subr.mxu0 0.0
      %1139 = vmatpush2.msra.mxu0 0.0
      %1140 = vmatprep.subr.mxu0 0.0
      %1141 = vmatpush2.msra.mxu0 0.0
      %1142 = vmatprep.subr.mxu0 0.0
      %1143 = vmatpush2.msra.mxu0 0.0
      %1144 = vmatprep.subr.mxu0 0.0
      %1145 = vmatpush2.msra.mxu0 0.0
      %1146 = vmatprep.subr.mxu0 0.0
      %1147 = vmatpush2.msra.mxu0 0.0
      %1148 = vmatprep.subr.mxu0 0.0
      %1149 = vmatpush2.msra.mxu0 0.0
      %1150 = vmatprep.subr.mxu0 0.0
      %1151 = vmatpush2.msra.mxu0 0.0
      %1152 = vmatprep.subr.mxu0 0.0
      %1153 = vmatpush2.msra.mxu0 0.0
      %1154 = vmatprep.subr.mxu0 0.0
      %1155 = vmatpush2.msra.mxu0 0.0
      %1156 = vmatprep.mubr.f32.mxu0 0.0
      %1157 = vmatmul.mubr.f32.gmra.mxu0 %v1090
      %v1158 = vpop.f32.mrf.mxu0
      %v1159 = vadd.f32 0.0, %v1158
      %v1160 = vpop.f32.mrf.mxu0
      %1161 = vdwg.mxu0
      %v1163 = vsel %vm1044, %v1086, 0
      %1165 = vmatprep.subr.mxu0 0.0
      %1166 = vmatpush1.msra.mxu0 0.0
      %1167 = vmatprep.subr.mxu0 0.0
      %1168 = vmatpush1.msra.mxu0 0.0
      %1169 = vmatprep.subr.mxu0 0.0
      %1170 = vmatpush1.msra.mxu0 0.0
      %1171 = vmatprep.subr.mxu0 0.0
      %1172 = vmatpush1.msra.mxu0 0.0
      %1173 = vmatprep.subr.mxu0 0.0
      %1174 = vmatpush1.msra.mxu0 0.0
      %1175 = vmatprep.subr.mxu0 0.0
      %1176 = vmatpush1.msra.mxu0 0.0
      %1177 = vmatprep.subr.mxu0 0.0
      %1178 = vmatpush1.msra.mxu0 0.0
      %1179 = vmatprep.subr.mxu0 0.0
      %1180 = vmatpush1.msra.mxu0 0.0
      %1181 = vmatprep.subr.mxu0 0.0
      %1182 = vmatpush1.msra.mxu0 0.0
      %1183 = vmatprep.subr.mxu0 0.0
      %1184 = vmatpush1.msra.mxu0 0.0
      %1185 = vmatprep.subr.mxu0 0.0
      %1186 = vmatpush1.msra.mxu0 0.0
      %1187 = vmatprep.subr.mxu0 0.0
      %1188 = vmatpush1.msra.mxu0 0.0
      %1189 = vmatprep.subr.mxu0 0.0
      %1190 = vmatpush1.msra.mxu0 0.0
      %1191 = vmatprep.subr.mxu0 0.0
      %1192 = vmatpush1.msra.mxu0 0.0
      %1193 = vmatprep.subr.mxu0 0.0
      %1194 = vmatpush1.msra.mxu0 0.0
      %1195 = vmatprep.subr.mxu0 0.0
      %1196 = vmatpush1.msra.mxu0 %v725
      %1197 = vmatprep.subr.mxu0 0.0
      %1198 = vmatpush2.msra.mxu0 0.0
      %1199 = vmatprep.subr.mxu0 0.0
      %1200 = vmatpush2.msra.mxu0 0.0
      %1201 = vmatprep.subr.mxu0 0.0
      %1202 = vmatpush2.msra.mxu0 0.0
      %1203 = vmatprep.subr.mxu0 0.0
      %1204 = vmatpush2.msra.mxu0 0.0
      %1205 = vmatprep.subr.mxu0 0.0
      %1206 = vmatpush2.msra.mxu0 0.0
      %1207 = vmatprep.subr.mxu0 0.0
      %1208 = vmatpush2.msra.mxu0 0.0
      %1209 = vmatprep.subr.mxu0 0.0
      %1210 = vmatpush2.msra.mxu0 0.0
      %1211 = vmatprep.subr.mxu0 0.0
      %1212 = vmatpush2.msra.mxu0 0.0
      %1213 = vmatprep.subr.mxu0 0.0
      %1214 = vmatpush2.msra.mxu0 0.0
      %1215 = vmatprep.subr.mxu0 0.0
      %1216 = vmatpush2.msra.mxu0 0.0
      %1217 = vmatprep.subr.mxu0 0.0
      %1218 = vmatpush2.msra.mxu0 0.0
      %1219 = vmatprep.subr.mxu0 0.0
      %1220 = vmatpush2.msra.mxu0 0.0
      %1221 = vmatprep.subr.mxu0 0.0
      %1222 = vmatpush2.msra.mxu0 0.0
      %1223 = vmatprep.subr.mxu0 0.0
      %1224 = vmatpush2.msra.mxu0 0.0
      %1225 = vmatprep.subr.mxu0 0.0
      %1226 = vmatpush2.msra.mxu0 0.0
      %1227 = vmatprep.subr.mxu0 0.0
      %1228 = vmatpush2.msra.mxu0 0.0
      %1229 = vmatprep.mubr.f32.mxu0 0.0
      %1230 = vmatmul.mubr.f32.gmra.mxu0 %v1163
      %v1231 = vpop.f32.mrf.mxu0
      %v1232 = vadd.f32 0.0, %v1231
      %v1233 = vpop.f32.mrf.mxu0
      %1234 = vdwg.mxu0
      %v1236 = vsel %vm1044, %v1087, 0
      %1238 = vmatprep.subr.mxu0 0.0
      %1239 = vmatpush1.msra.mxu0 0.0
      %1240 = vmatprep.subr.mxu0 0.0
      %1241 = vmatpush1.msra.mxu0 0.0
      %1242 = vmatprep.subr.mxu0 0.0
      %1243 = vmatpush1.msra.mxu0 0.0
      %1244 = vmatprep.subr.mxu0 0.0
      %1245 = vmatpush1.msra.mxu0 0.0
      %1246 = vmatprep.subr.mxu0 0.0
      %1247 = vmatpush1.msra.mxu0 0.0
      %1248 = vmatprep.subr.mxu0 0.0
      %1249 = vmatpush1.msra.mxu0 0.0
      %1250 = vmatprep.subr.mxu0 0.0
      %1251 = vmatpush1.msra.mxu0 0.0
      %1252 = vmatprep.subr.mxu0 0.0
      %1253 = vmatpush1.msra.mxu0 0.0
      %1254 = vmatprep.subr.mxu0 0.0
      %1255 = vmatpush1.msra.mxu0 0.0
      %1256 = vmatprep.subr.mxu0 0.0
      %1257 = vmatpush1.msra.mxu0 0.0
      %1258 = vmatprep.subr.mxu0 0.0
      %1259 = vmatpush1.msra.mxu0 0.0
      %1260 = vmatprep.subr.mxu0 0.0
      %1261 = vmatpush1.msra.mxu0 0.0
      %1262 = vmatprep.subr.mxu0 0.0
      %1263 = vmatpush1.msra.mxu0 0.0
      %1264 = vmatprep.subr.mxu0 0.0
      %1265 = vmatpush1.msra.mxu0 0.0
      %1266 = vmatprep.subr.mxu0 0.0
      %1267 = vmatpush1.msra.mxu0 0.0
      %1268 = vmatprep.subr.mxu0 0.0
      %1269 = vmatpush1.msra.mxu0 %v728
      %1270 = vmatprep.subr.mxu0 0.0
      %1271 = vmatpush2.msra.mxu0 0.0
      %1272 = vmatprep.subr.mxu0 0.0
      %1273 = vmatpush2.msra.mxu0 0.0
      %1274 = vmatprep.subr.mxu0 0.0
      %1275 = vmatpush2.msra.mxu0 0.0
      %1276 = vmatprep.subr.mxu0 0.0
      %1277 = vmatpush2.msra.mxu0 0.0
      %1278 = vmatprep.subr.mxu0 0.0
      %1279 = vmatpush2.msra.mxu0 0.0
      %1280 = vmatprep.subr.mxu0 0.0
      %1281 = vmatpush2.msra.mxu0 0.0
      %1282 = vmatprep.subr.mxu0 0.0
      %1283 = vmatpush2.msra.mxu0 0.0
      %1284 = vmatprep.subr.mxu0 0.0
      %1285 = vmatpush2.msra.mxu0 0.0
      %1286 = vmatprep.subr.mxu0 0.0
      %1287 = vmatpush2.msra.mxu0 0.0
      %1288 = vmatprep.subr.mxu0 0.0
      %1289 = vmatpush2.msra.mxu0 0.0
      %1290 = vmatprep.subr.mxu0 0.0
      %1291 = vmatpush2.msra.mxu0 0.0
      %1292 = vmatprep.subr.mxu0 0.0
      %1293 = vmatpush2.msra.mxu0 0.0
      %1294 = vmatprep.subr.mxu0 0.0
      %1295 = vmatpush2.msra.mxu0 0.0
      %1296 = vmatprep.subr.mxu0 0.0
      %1297 = vmatpush2.msra.mxu0 0.0
      %1298 = vmatprep.subr.mxu0 0.0
      %1299 = vmatpush2.msra.mxu0 0.0
      %1300 = vmatprep.subr.mxu0 0.0
      %1301 = vmatpush2.msra.mxu0 0.0
      %1302 = vmatprep.mubr.f32.mxu0 0.0
      %1303 = vmatmul.mubr.f32.gmra.mxu0 %v1236
      %v1304 = vpop.f32.mrf.mxu0
      %v1305 = vadd.f32 0.0, %v1304
      %v1306 = vpop.f32.mrf.mxu0
      %1307 = vdwg.mxu0
      %v1309 = vsel %vm1044, %v1088, 0
      %1311 = vmatprep.subr.mxu0 0.0
      %1312 = vmatpush1.msra.mxu0 0.0
      %1313 = vmatprep.subr.mxu0 0.0
      %1314 = vmatpush1.msra.mxu0 0.0
      %1315 = vmatprep.subr.mxu0 0.0
      %1316 = vmatpush1.msra.mxu0 0.0
      %1317 = vmatprep.subr.mxu0 0.0
      %1318 = vmatpush1.msra.mxu0 0.0
      %1319 = vmatprep.subr.mxu0 0.0
      %1320 = vmatpush1.msra.mxu0 0.0
      %1321 = vmatprep.subr.mxu0 0.0
      %1322 = vmatpush1.msra.mxu0 0.0
      %1323 = vmatprep.subr.mxu0 0.0
      %1324 = vmatpush1.msra.mxu0 0.0
      %1325 = vmatprep.subr.mxu0 0.0
      %1326 = vmatpush1.msra.mxu0 0.0
      %1327 = vmatprep.subr.mxu0 0.0
      %1328 = vmatpush1.msra.mxu0 0.0
      %1329 = vmatprep.subr.mxu0 0.0
      %1330 = vmatpush1.msra.mxu0 0.0
      %1331 = vmatprep.subr.mxu0 0.0
      %1332 = vmatpush1.msra.mxu0 0.0
      %1333 = vmatprep.subr.mxu0 0.0
      %1334 = vmatpush1.msra.mxu0 0.0
      %1335 = vmatprep.subr.mxu0 0.0
      %1336 = vmatpush1.msra.mxu0 0.0
      %1337 = vmatprep.subr.mxu0 0.0
      %1338 = vmatpush1.msra.mxu0 0.0
      %1339 = vmatprep.subr.mxu0 0.0
      %1340 = vmatpush1.msra.mxu0 0.0
      %1341 = vmatprep.subr.mxu0 0.0
      %1342 = vmatpush1.msra.mxu0 %v731
      %1343 = vmatprep.subr.mxu0 0.0
      %1344 = vmatpush2.msra.mxu0 0.0
      %1345 = vmatprep.subr.mxu0 0.0
      %1346 = vmatpush2.msra.mxu0 0.0
      %1347 = vmatprep.subr.mxu0 0.0
      %1348 = vmatpush2.msra.mxu0 0.0
      %1349 = vmatprep.subr.mxu0 0.0
      %1350 = vmatpush2.msra.mxu0 0.0
      %1351 = vmatprep.subr.mxu0 0.0
      %1352 = vmatpush2.msra.mxu0 0.0
      %1353 = vmatprep.subr.mxu0 0.0
      %1354 = vmatpush2.msra.mxu0 0.0
      %1355 = vmatprep.subr.mxu0 0.0
      %1356 = vmatpush2.msra.mxu0 0.0
      %1357 = vmatprep.subr.mxu0 0.0
      %1358 = vmatpush2.msra.mxu0 0.0
      %1359 = vmatprep.subr.mxu0 0.0
      %1360 = vmatpush2.msra.mxu0 0.0
      %1361 = vmatprep.subr.mxu0 0.0
      %1362 = vmatpush2.msra.mxu0 0.0
      %1363 = vmatprep.subr.mxu0 0.0
      %1364 = vmatpush2.msra.mxu0 0.0
      %1365 = vmatprep.subr.mxu0 0.0
      %1366 = vmatpush2.msra.mxu0 0.0
      %1367 = vmatprep.subr.mxu0 0.0
      %1368 = vmatpush2.msra.mxu0 0.0
      %1369 = vmatprep.subr.mxu0 0.0
      %1370 = vmatpush2.msra.mxu0 0.0
      %1371 = vmatprep.subr.mxu0 0.0
      %1372 = vmatpush2.msra.mxu0 0.0
      %1373 = vmatprep.subr.mxu0 0.0
      %1374 = vmatpush2.msra.mxu0 0.0
      %1375 = vmatprep.mubr.f32.mxu0 0.0
      %1376 = vmatmul.mubr.f32.gmra.mxu0 %v1309
      %v1377 = vpop.f32.mrf.mxu0
      %v1378 = vadd.f32 0.0, %v1377
      %v1379 = vpop.f32.mrf.mxu0
      %1380 = vdwg.mxu0
      %v1381 = vld [vmem:[%s550] sm:$0xff]
      %v1382 = vld [vmem:[%s550 + $0x8] sm:$0xff]
      %v1383 = vld [vmem:[%s550 + $0x10] sm:$0xff]
      %v1384 = vld [vmem:[%s550 + $0x18] sm:$0xff]
      %v1385 = vld [vmem:[%s550 + $0x20] sm:$0xff]
      %v1386 = vld [vmem:[%s550 + $0x28] sm:$0xff]
      %v1387 = vld [vmem:[%s550 + $0x30] sm:$0xff]
      %v1388 = vld [vmem:[%s550 + $0x38] sm:$0xff]
      %v1390 = vsel %vm741, %v1159, 0
      %1392 = vmatprep.subr.mxu0 0.0
      %1393 = vmatpush1.msra.mxu0 0.0
      %1394 = vmatprep.subr.mxu0 0.0
      %1395 = vmatpush1.msra.mxu0 0.0
      %1396 = vmatprep.subr.mxu0 0.0
      %1397 = vmatpush1.msra.mxu0 0.0
      %1398 = vmatprep.subr.mxu0 0.0
      %1399 = vmatpush1.msra.mxu0 0.0
      %1400 = vmatprep.subr.mxu0 0.0
      %1401 = vmatpush1.msra.mxu0 0.0
      %1402 = vmatprep.subr.mxu0 0.0
      %1403 = vmatpush1.msra.mxu0 0.0
      %1404 = vmatprep.subr.mxu0 0.0
      %1405 = vmatpush1.msra.mxu0 0.0
      %1406 = vmatprep.subr.mxu0 0.0
      %1407 = vmatpush1.msra.mxu0 0.0
      %1408 = vmatprep.subr.mxu0 0.0
      %1409 = vmatpush1.msra.mxu0 0.0
      %1410 = vmatprep.subr.mxu0 0.0
      %1411 = vmatpush1.msra.mxu0 0.0
      %1412 = vmatprep.subr.mxu0 0.0
      %1413 = vmatpush1.msra.mxu0 0.0
      %1414 = vmatprep.subr.mxu0 0.0
      %1415 = vmatpush1.msra.mxu0 0.0
      %1416 = vmatprep.subr.mxu0 0.0
      %1417 = vmatpush1.msra.mxu0 0.0
      %1418 = vmatprep.subr.mxu0 0.0
      %1419 = vmatpush1.msra.mxu0 0.0
      %1420 = vmatprep.subr.mxu0 0.0
      %1421 = vmatpush1.msra.mxu0 %v1382
      %1422 = vmatprep.subr.mxu0 0.0
      %1423 = vmatpush1.msra.mxu0 %v1381
      %1424 = vmatprep.subr.mxu0 0.0
      %1425 = vmatpush2.msra.mxu0 0.0
      %1426 = vmatprep.subr.mxu0 0.0
      %1427 = vmatpush2.msra.mxu0 0.0
      %1428 = vmatprep.subr.mxu0 0.0
      %1429 = vmatpush2.msra.mxu0 0.0
      %1430 = vmatprep.subr.mxu0 0.0
      %1431 = vmatpush2.msra.mxu0 0.0
      %1432 = vmatprep.subr.mxu0 0.0
      %1433 = vmatpush2.msra.mxu0 0.0
      %1434 = vmatprep.subr.mxu0 0.0
      %1435 = vmatpush2.msra.mxu0 0.0
      %1436 = vmatprep.subr.mxu0 0.0
      %1437 = vmatpush2.msra.mxu0 0.0
      %1438 = vmatprep.subr.mxu0 0.0
      %1439 = vmatpush2.msra.mxu0 0.0
      %1440 = vmatprep.subr.mxu0 0.0
      %1441 = vmatpush2.msra.mxu0 0.0
      %1442 = vmatprep.subr.mxu0 0.0
      %1443 = vmatpush2.msra.mxu0 0.0
      %1444 = vmatprep.subr.mxu0 0.0
      %1445 = vmatpush2.msra.mxu0 0.0
      %1446 = vmatprep.subr.mxu0 0.0
      %1447 = vmatpush2.msra.mxu0 0.0
      %1448 = vmatprep.subr.mxu0 0.0
      %1449 = vmatpush2.msra.mxu0 0.0
      %1450 = vmatprep.subr.mxu0 0.0
      %1451 = vmatpush2.msra.mxu0 0.0
      %1452 = vmatprep.subr.mxu0 0.0
      %1453 = vmatpush2.msra.mxu0 0.0
      %1454 = vmatprep.subr.mxu0 0.0
      %1455 = vmatpush2.msra.mxu0 0.0
      %1456 = vmatprep.mubr.f32.mxu0 0.0
      %1457 = vmatmul.mubr.f32.gmra.mxu0 %v1390
      %v1458 = vpop.f32.mrf.mxu0
      %v1459 = vadd.f32 0.0, %v1458
      %v1460 = vpop.f32.mrf.mxu0
      %1461 = vdwg.mxu0
      %v1463 = vsel %vm741, %v1232, 0
      %1465 = vmatprep.subr.mxu0 0.0
      %1466 = vmatpush1.msra.mxu0 0.0
      %1467 = vmatprep.subr.mxu0 0.0
      %1468 = vmatpush1.msra.mxu0 0.0
      %1469 = vmatprep.subr.mxu0 0.0
      %1470 = vmatpush1.msra.mxu0 0.0
      %1471 = vmatprep.subr.mxu0 0.0
      %1472 = vmatpush1.msra.mxu0 0.0
      %1473 = vmatprep.subr.mxu0 0.0
      %1474 = vmatpush1.msra.mxu0 0.0
      %1475 = vmatprep.subr.mxu0 0.0
      %1476 = vmatpush1.msra.mxu0 0.0
      %1477 = vmatprep.subr.mxu0 0.0
      %1478 = vmatpush1.msra.mxu0 0.0
      %1479 = vmatprep.subr.mxu0 0.0
      %1480 = vmatpush1.msra.mxu0 0.0
      %1481 = vmatprep.subr.mxu0 0.0
      %1482 = vmatpush1.msra.mxu0 0.0
      %1483 = vmatprep.subr.mxu0 0.0
      %1484 = vmatpush1.msra.mxu0 0.0
      %1485 = vmatprep.subr.mxu0 0.0
      %1486 = vmatpush1.msra.mxu0 0.0
      %1487 = vmatprep.subr.mxu0 0.0
      %1488 = vmatpush1.msra.mxu0 0.0
      %1489 = vmatprep.subr.mxu0 0.0
      %1490 = vmatpush1.msra.mxu0 0.0
      %1491 = vmatprep.subr.mxu0 0.0
      %1492 = vmatpush1.msra.mxu0 0.0
      %1493 = vmatprep.subr.mxu0 0.0
      %1494 = vmatpush1.msra.mxu0 %v1384
      %1495 = vmatprep.subr.mxu0 0.0
      %1496 = vmatpush1.msra.mxu0 %v1383
      %1497 = vmatprep.subr.mxu0 0.0
      %1498 = vmatpush2.msra.mxu0 0.0
      %1499 = vmatprep.subr.mxu0 0.0
      %1500 = vmatpush2.msra.mxu0 0.0
      %1501 = vmatprep.subr.mxu0 0.0
      %1502 = vmatpush2.msra.mxu0 0.0
      %1503 = vmatprep.subr.mxu0 0.0
      %1504 = vmatpush2.msra.mxu0 0.0
      %1505 = vmatprep.subr.mxu0 0.0
      %1506 = vmatpush2.msra.mxu0 0.0
      %1507 = vmatprep.subr.mxu0 0.0
      %1508 = vmatpush2.msra.mxu0 0.0
      %1509 = vmatprep.subr.mxu0 0.0
      %1510 = vmatpush2.msra.mxu0 0.0
      %1511 = vmatprep.subr.mxu0 0.0
      %1512 = vmatpush2.msra.mxu0 0.0
      %1513 = vmatprep.subr.mxu0 0.0
      %1514 = vmatpush2.msra.mxu0 0.0
      %1515 = vmatprep.subr.mxu0 0.0
      %1516 = vmatpush2.msra.mxu0 0.0
      %1517 = vmatprep.subr.mxu0 0.0
      %1518 = vmatpush2.msra.mxu0 0.0
      %1519 = vmatprep.subr.mxu0 0.0
      %1520 = vmatpush2.msra.mxu0 0.0
      %1521 = vmatprep.subr.mxu0 0.0
      %1522 = vmatpush2.msra.mxu0 0.0
      %1523 = vmatprep.subr.mxu0 0.0
      %1524 = vmatpush2.msra.mxu0 0.0
      %1525 = vmatprep.subr.mxu0 0.0
      %1526 = vmatpush2.msra.mxu0 0.0
      %1527 = vmatprep.subr.mxu0 0.0
      %1528 = vmatpush2.msra.mxu0 0.0
      %1529 = vmatprep.mubr.f32.mxu0 0.0
      %1530 = vmatmul.mubr.f32.gmra.mxu0 %v1463
      %v1531 = vpop.f32.mrf.mxu0
      %v1532 = vadd.f32 0.0, %v1531
      %v1533 = vpop.f32.mrf.mxu0
      %1534 = vdwg.mxu0
      %v1536 = vsel %vm741, %v1305, 0
      %1538 = vmatprep.subr.mxu0 0.0
      %1539 = vmatpush1.msra.mxu0 0.0
      %1540 = vmatprep.subr.mxu0 0.0
      %1541 = vmatpush1.msra.mxu0 0.0
      %1542 = vmatprep.subr.mxu0 0.0
      %1543 = vmatpush1.msra.mxu0 0.0
      %1544 = vmatprep.subr.mxu0 0.0
      %1545 = vmatpush1.msra.mxu0 0.0
      %1546 = vmatprep.subr.mxu0 0.0
      %1547 = vmatpush1.msra.mxu0 0.0
      %1548 = vmatprep.subr.mxu0 0.0
      %1549 = vmatpush1.msra.mxu0 0.0
      %1550 = vmatprep.subr.mxu0 0.0
      %1551 = vmatpush1.msra.mxu0 0.0
      %1552 = vmatprep.subr.mxu0 0.0
      %1553 = vmatpush1.msra.mxu0 0.0
      %1554 = vmatprep.subr.mxu0 0.0
      %1555 = vmatpush1.msra.mxu0 0.0
      %1556 = vmatprep.subr.mxu0 0.0
      %1557 = vmatpush1.msra.mxu0 0.0
      %1558 = vmatprep.subr.mxu0 0.0
      %1559 = vmatpush1.msra.mxu0 0.0
      %1560 = vmatprep.subr.mxu0 0.0
      %1561 = vmatpush1.msra.mxu0 0.0
      %1562 = vmatprep.subr.mxu0 0.0
      %1563 = vmatpush1.msra.mxu0 0.0
      %1564 = vmatprep.subr.mxu0 0.0
      %1565 = vmatpush1.msra.mxu0 0.0
      %1566 = vmatprep.subr.mxu0 0.0
      %1567 = vmatpush1.msra.mxu0 %v1386
      %1568 = vmatprep.subr.mxu0 0.0
      %1569 = vmatpush1.msra.mxu0 %v1385
      %1570 = vmatprep.subr.mxu0 0.0
      %1571 = vmatpush2.msra.mxu0 0.0
      %1572 = vmatprep.subr.mxu0 0.0
      %1573 = vmatpush2.msra.mxu0 0.0
      %1574 = vmatprep.subr.mxu0 0.0
      %1575 = vmatpush2.msra.mxu0 0.0
      %1576 = vmatprep.subr.mxu0 0.0
      %1577 = vmatpush2.msra.mxu0 0.0
      %1578 = vmatprep.subr.mxu0 0.0
      %1579 = vmatpush2.msra.mxu0 0.0
      %1580 = vmatprep.subr.mxu0 0.0
      %1581 = vmatpush2.msra.mxu0 0.0
      %1582 = vmatprep.subr.mxu0 0.0
      %1583 = vmatpush2.msra.mxu0 0.0
      %1584 = vmatprep.subr.mxu0 0.0
      %1585 = vmatpush2.msra.mxu0 0.0
      %1586 = vmatprep.subr.mxu0 0.0
      %1587 = vmatpush2.msra.mxu0 0.0
      %1588 = vmatprep.subr.mxu0 0.0
      %1589 = vmatpush2.msra.mxu0 0.0
      %1590 = vmatprep.subr.mxu0 0.0
      %1591 = vmatpush2.msra.mxu0 0.0
      %1592 = vmatprep.subr.mxu0 0.0
      %1593 = vmatpush2.msra.mxu0 0.0
      %1594 = vmatprep.subr.mxu0 0.0
      %1595 = vmatpush2.msra.mxu0 0.0
      %1596 = vmatprep.subr.mxu0 0.0
      %1597 = vmatpush2.msra.mxu0 0.0
      %1598 = vmatprep.subr.mxu0 0.0
      %1599 = vmatpush2.msra.mxu0 0.0
      %1600 = vmatprep.subr.mxu0 0.0
      %1601 = vmatpush2.msra.mxu0 0.0
      %1602 = vmatprep.mubr.f32.mxu0 0.0
      %1603 = vmatmul.mubr.f32.gmra.mxu0 %v1536
      %v1604 = vpop.f32.mrf.mxu0
      %v1605 = vadd.f32 0.0, %v1604
      %v1606 = vpop.f32.mrf.mxu0
      %1607 = vdwg.mxu0
      %v1609 = vsel %vm741, %v1378, 0
      %1611 = vmatprep.subr.mxu0 0.0
      %1612 = vmatpush1.msra.mxu0 0.0
      %1613 = vmatprep.subr.mxu0 0.0
      %1614 = vmatpush1.msra.mxu0 0.0
      %1615 = vmatprep.subr.mxu0 0.0
      %1616 = vmatpush1.msra.mxu0 0.0
      %1617 = vmatprep.subr.mxu0 0.0
      %1618 = vmatpush1.msra.mxu0 0.0
      %1619 = vmatprep.subr.mxu0 0.0
      %1620 = vmatpush1.msra.mxu0 0.0
      %1621 = vmatprep.subr.mxu0 0.0
      %1622 = vmatpush1.msra.mxu0 0.0
      %1623 = vmatprep.subr.mxu0 0.0
      %1624 = vmatpush1.msra.mxu0 0.0
      %1625 = vmatprep.subr.mxu0 0.0
      %1626 = vmatpush1.msra.mxu0 0.0
      %1627 = vmatprep.subr.mxu0 0.0
      %1628 = vmatpush1.msra.mxu0 0.0
      %1629 = vmatprep.subr.mxu0 0.0
      %1630 = vmatpush1.msra.mxu0 0.0
      %1631 = vmatprep.subr.mxu0 0.0
      %1632 = vmatpush1.msra.mxu0 0.0
      %1633 = vmatprep.subr.mxu0 0.0
      %1634 = vmatpush1.msra.mxu0 0.0
      %1635 = vmatprep.subr.mxu0 0.0
      %1636 = vmatpush1.msra.mxu0 0.0
      %1637 = vmatprep.subr.mxu0 0.0
      %1638 = vmatpush1.msra.mxu0 0.0
      %1639 = vmatprep.subr.mxu0 0.0
      %1640 = vmatpush1.msra.mxu0 %v1388
      %1641 = vmatprep.subr.mxu0 0.0
      %1642 = vmatpush1.msra.mxu0 %v1387
      %1643 = vmatprep.subr.mxu0 0.0
      %1644 = vmatpush2.msra.mxu0 0.0
      %1645 = vmatprep.subr.mxu0 0.0
      %1646 = vmatpush2.msra.mxu0 0.0
      %1647 = vmatprep.subr.mxu0 0.0
      %1648 = vmatpush2.msra.mxu0 0.0
      %1649 = vmatprep.subr.mxu0 0.0
      %1650 = vmatpush2.msra.mxu0 0.0
      %1651 = vmatprep.subr.mxu0 0.0
      %1652 = vmatpush2.msra.mxu0 0.0
      %1653 = vmatprep.subr.mxu0 0.0
      %1654 = vmatpush2.msra.mxu0 0.0
      %1655 = vmatprep.subr.mxu0 0.0
      %1656 = vmatpush2.msra.mxu0 0.0
      %1657 = vmatprep.subr.mxu0 0.0
      %1658 = vmatpush2.msra.mxu0 0.0
      %1659 = vmatprep.subr.mxu0 0.0
      %1660 = vmatpush2.msra.mxu0 0.0
      %1661 = vmatprep.subr.mxu0 0.0
      %1662 = vmatpush2.msra.mxu0 0.0
      %1663 = vmatprep.subr.mxu0 0.0
      %1664 = vmatpush2.msra.mxu0 0.0
      %1665 = vmatprep.subr.mxu0 0.0
      %1666 = vmatpush2.msra.mxu0 0.0
      %1667 = vmatprep.subr.mxu0 0.0
      %1668 = vmatpush2.msra.mxu0 0.0
      %1669 = vmatprep.subr.mxu0 0.0
      %1670 = vmatpush2.msra.mxu0 0.0
      %1671 = vmatprep.subr.mxu0 0.0
      %1672 = vmatpush2.msra.mxu0 0.0
      %1673 = vmatprep.subr.mxu0 0.0
      %1674 = vmatpush2.msra.mxu0 0.0
      %1675 = vmatprep.mubr.f32.mxu0 0.0
      %1676 = vmatmul.mubr.f32.gmra.mxu0 %v1609
      %v1677 = vpop.f32.mrf.mxu0
      %v1678 = vadd.f32 0.0, %v1677
      %v1679 = vpop.f32.mrf.mxu0
      %1680 = vdwg.mxu0
      %v1681 = vsel %vm577, %v1459, 0.0
      %v1682 = vsel %vm577, %v1532, 0.0
      %v1683 = vadd.f32 %v1681, %v1682
      %v1684 = vsel %vm577, %v1605, 0.0
      %v1685 = vadd.f32 %v1683, %v1684
      %v1686 = vsel %vm577, %v1678, 0.0
      %v1687 = vadd.f32 %v1685, %v1686
      %v1688 = vld [vmem:[%s553] sm:$0x1]
      %v1690 = vlaneseq
      %v1691 = vshrl.u32 %v1690, 7
      %v1692 = vsub.s32 0, %v1691
      %v1693 = vrot.slane %v1688, %v1692
      %v1695 = vadd.f32 %v1687, %v1693
      %v1696 = vadd.f32 %v1695, %v604
      %v1697 = vsel %vm577, %v1696, 0.0
      %1698 = vadd.xlane.f32.xlu0 %v1697
      %v1699 = vpop.xlane.xlu0 %1698
      %v1700 = vmul.f32 %v1699, 0.015625
      %v1701 = vsub.f32 %v1696, %v1700
      %v1702 = vmul.f32 %v1701, %v1701
      %v1703 = vsel %vm577, %v1702, 0.0
      %1704 = vadd.xlane.f32.xlu0 %v1703
      %v1705 = vpop.xlane.xlu0 %1704
      %v1706 = vmul.f32 %v1705, 0.015625
      %v1707 = vadd.f32 %v1706, 1e-05
      %v1708 = vrsqrt.pop %v1707
      %v1709 = vmul.f32 %v1701, %v1708
      %v1710 = vld [vmem:[%s558] sm:$0xff]
      %v1711 = vld [vmem:[%s558 + $0x8] sm:$0xff]
      %v1712 = vld [vmem:[%s558 + $0x10] sm:$0xff]
      %v1713 = vld [vmem:[%s558 + $0x18] sm:$0xff]
      %v1714 = vld [vmem:[%s558 + $0x20] sm:$0xff]
      %v1715 = vld [vmem:[%s558 + $0x28] sm:$0xff]
      %v1716 = vld [vmem:[%s558 + $0x30] sm:$0xff]
      %v1717 = vld [vmem:[%s558 + $0x38] sm:$0xff]
      %v1718 = vld [vmem:[%s561] sm:$0x1]
      %v1720 = vlaneseq
      %v1721 = vshrl.u32 %v1720, 7
      %v1722 = vsub.s32 0, %v1721
      %v1723 = vrot.slane %v1718, %v1722
      %v1726 = vsel %vm577, %v1709, 0
      %1728 = vmatprep.subr.mxu0 0.0
      %1729 = vmatpush1.msra.mxu0 0.0
      %1730 = vmatprep.subr.mxu0 0.0
      %1731 = vmatpush1.msra.mxu0 0.0
      %1732 = vmatprep.subr.mxu0 0.0
      %1733 = vmatpush1.msra.mxu0 0.0
      %1734 = vmatprep.subr.mxu0 0.0
      %1735 = vmatpush1.msra.mxu0 0.0
      %1736 = vmatprep.subr.mxu0 0.0
      %1737 = vmatpush1.msra.mxu0 0.0
      %1738 = vmatprep.subr.mxu0 0.0
      %1739 = vmatpush1.msra.mxu0 0.0
      %1740 = vmatprep.subr.mxu0 0.0
      %1741 = vmatpush1.msra.mxu0 0.0
      %1742 = vmatprep.subr.mxu0 0.0
      %1743 = vmatpush1.msra.mxu0 0.0
      %1744 = vmatprep.subr.mxu0 0.0
      %1745 = vmatpush1.msra.mxu0 %v1717
      %1746 = vmatprep.subr.mxu0 0.0
      %1747 = vmatpush1.msra.mxu0 %v1716
      %1748 = vmatprep.subr.mxu0 0.0
      %1749 = vmatpush1.msra.mxu0 %v1715
      %1750 = vmatprep.subr.mxu0 0.0
      %1751 = vmatpush1.msra.mxu0 %v1714
      %1752 = vmatprep.subr.mxu0 0.0
      %1753 = vmatpush1.msra.mxu0 %v1713
      %1754 = vmatprep.subr.mxu0 0.0
      %1755 = vmatpush1.msra.mxu0 %v1712
      %1756 = vmatprep.subr.mxu0 0.0
      %1757 = vmatpush1.msra.mxu0 %v1711
      %1758 = vmatprep.subr.mxu0 0.0
      %1759 = vmatpush1.msra.mxu0 %v1710
      %1760 = vmatprep.subr.mxu0 0.0
      %1761 = vmatpush2.msra.mxu0 0.0
      %1762 = vmatprep.subr.mxu0 0.0
      %1763 = vmatpush2.msra.mxu0 0.0
      %1764 = vmatprep.subr.mxu0 0.0
      %1765 = vmatpush2.msra.mxu0 0.0
      %1766 = vmatprep.subr.mxu0 0.0
      %1767 = vmatpush2.msra.mxu0 0.0
      %1768 = vmatprep.subr.mxu0 0.0
      %1769 = vmatpush2.msra.mxu0 0.0
      %1770 = vmatprep.subr.mxu0 0.0
      %1771 = vmatpush2.msra.mxu0 0.0
      %1772 = vmatprep.subr.mxu0 0.0
      %1773 = vmatpush2.msra.mxu0 0.0
      %1774 = vmatprep.subr.mxu0 0.0
      %1775 = vmatpush2.msra.mxu0 0.0
      %1776 = vmatprep.subr.mxu0 0.0
      %1777 = vmatpush2.msra.mxu0 0.0
      %1778 = vmatprep.subr.mxu0 0.0
      %1779 = vmatpush2.msra.mxu0 0.0
      %1780 = vmatprep.subr.mxu0 0.0
      %1781 = vmatpush2.msra.mxu0 0.0
      %1782 = vmatprep.subr.mxu0 0.0
      %1783 = vmatpush2.msra.mxu0 0.0
      %1784 = vmatprep.subr.mxu0 0.0
      %1785 = vmatpush2.msra.mxu0 0.0
      %1786 = vmatprep.subr.mxu0 0.0
      %1787 = vmatpush2.msra.mxu0 0.0
      %1788 = vmatprep.subr.mxu0 0.0
      %1789 = vmatpush2.msra.mxu0 0.0
      %1790 = vmatprep.subr.mxu0 0.0
      %1791 = vmatpush2.msra.mxu0 0.0
      %1792 = vmatprep.mubr.f32.mxu0 0.0
      %1793 = vmatmul.mubr.f32.gmra.mxu0 %v1726
      %v1794 = vpop.f32.mrf.mxu0
      %v1795 = vadd.f32 %v1723, %v1794
      %v1796 = vpop.f32.mrf.mxu0
      %1797 = vdwg.mxu0
      %v1798 = vmul.f32 %v1795, 0.5
      %v1799 = vmul.f32 %v1795, 0.044715
      %v1800 = vmul.f32 %v1799, %v1795
      %v1801 = vmul.f32 %v1800, %v1795
      %v1802 = vadd.f32 %v1795, %v1801
      %v1803 = vmul.f32 %v1802, 0.7978846
      %v1804 = vtanh.pop %v1803
      %v1805 = vadd.f32 %v1804, 1.0
      %v1806 = vmul.f32 %v1798, %v1805
      %v1807 = vld [vmem:[%s566] sm:$0xff]
      %v1808 = vld [vmem:[%s566 + $0x8] sm:$0xff]
      %v1809 = vld [vmem:[%s566 + $0x10] sm:$0xff]
      %v1810 = vld [vmem:[%s566 + $0x18] sm:$0xff]
      %v1811 = vld [vmem:[%s566 + $0x20] sm:$0xff]
      %v1812 = vld [vmem:[%s566 + $0x28] sm:$0xff]
      %v1813 = vld [vmem:[%s566 + $0x30] sm:$0xff]
      %v1814 = vld [vmem:[%s566 + $0x38] sm:$0xff]
      %v1815 = vld [vmem:[%s566 + $0x40] sm:$0xff]
      %v1816 = vld [vmem:[%s566 + $0x48] sm:$0xff]
      %v1817 = vld [vmem:[%s566 + $0x50] sm:$0xff]
      %v1818 = vld [vmem:[%s566 + $0x58] sm:$0xff]
      %v1819 = vld [vmem:[%s566 + $0x60] sm:$0xff]
      %v1820 = vld [vmem:[%s566 + $0x68] sm:$0xff]
      %v1821 = vld [vmem:[%s566 + $0x70] sm:$0xff]
      %v1822 = vld [vmem:[%s566 + $0x78] sm:$0xff]
      %v1823 = vld [vmem:[%s569] sm:$0x1]
      %v1825 = vlaneseq
      %v1826 = vshrl.u32 %v1825, 7
      %v1827 = vsub.s32 0, %v1826
      %v1828 = vrot.slane %v1823, %v1827
      %1830 = vmatprep.subr.mxu0 0.0
      %1831 = vmatpush1.msra.mxu0 %v1822
      %1832 = vmatprep.subr.mxu0 0.0
      %1833 = vmatpush1.msra.mxu0 %v1821
      %1834 = vmatprep.subr.mxu0 0.0
      %1835 = vmatpush1.msra.mxu0 %v1820
      %1836 = vmatprep.subr.mxu0 0.0
      %1837 = vmatpush1.msra.mxu0 %v1819
      %1838 = vmatprep.subr.mxu0 0.0
      %1839 = vmatpush1.msra.mxu0 %v1818
      %1840 = vmatprep.subr.mxu0 0.0
      %1841 = vmatpush1.msra.mxu0 %v1817
      %1842 = vmatprep.subr.mxu0 0.0
      %1843 = vmatpush1.msra.mxu0 %v1816
      %1844 = vmatprep.subr.mxu0 0.0
      %1845 = vmatpush1.msra.mxu0 %v1815
      %1846 = vmatprep.subr.mxu0 0.0
      %1847 = vmatpush1.msra.mxu0 %v1814
      %1848 = vmatprep.subr.mxu0 0.0
      %1849 = vmatpush1.msra.mxu0 %v1813
      %1850 = vmatprep.subr.mxu0 0.0
      %1851 = vmatpush1.msra.mxu0 %v1812
      %1852 = vmatprep.subr.mxu0 0.0
      %1853 = vmatpush1.msra.mxu0 %v1811
      %1854 = vmatprep.subr.mxu0 0.0
      %1855 = vmatpush1.msra.mxu0 %v1810
      %1856 = vmatprep.subr.mxu0 0.0
      %1857 = vmatpush1.msra.mxu0 %v1809
      %1858 = vmatprep.subr.mxu0 0.0
      %1859 = vmatpush1.msra.mxu0 %v1808
      %1860 = vmatprep.subr.mxu0 0.0
      %1861 = vmatpush1.msra.mxu0 %v1807
      %1862 = vmatprep.subr.mxu0 0.0
      %1863 = vmatpush2.msra.mxu0 0.0
      %1864 = vmatprep.subr.mxu0 0.0
      %1865 = vmatpush2.msra.mxu0 0.0
      %1866 = vmatprep.subr.mxu0 0.0
      %1867 = vmatpush2.msra.mxu0 0.0
      %1868 = vmatprep.subr.mxu0 0.0
      %1869 = vmatpush2.msra.mxu0 0.0
      %1870 = vmatprep.subr.mxu0 0.0
      %1871 = vmatpush2.msra.mxu0 0.0
      %1872 = vmatprep.subr.mxu0 0.0
      %1873 = vmatpush2.msra.mxu0 0.0
      %1874 = vmatprep.subr.mxu0 0.0
      %1875 = vmatpush2.msra.mxu0 0.0
      %1876 = vmatprep.subr.mxu0 0.0
      %1877 = vmatpush2.msra.mxu0 0.0
      %1878 = vmatprep.subr.mxu0 0.0
      %1879 = vmatpush2.msra.mxu0 0.0
      %1880 = vmatprep.subr.mxu0 0.0
      %1881 = vmatpush2.msra.mxu0 0.0
      %1882 = vmatprep.subr.mxu0 0.0
      %1883 = vmatpush2.msra.mxu0 0.0
      %1884 = vmatprep.subr.mxu0 0.0
      %1885 = vmatpush2.msra.mxu0 0.0
      %1886 = vmatprep.subr.mxu0 0.0
      %1887 = vmatpush2.msra.mxu0 0.0
      %1888 = vmatprep.subr.mxu0 0.0
      %1889 = vmatpush2.msra.mxu0 0.0
      %1890 = vmatprep.subr.mxu0 0.0
      %1891 = vmatpush2.msra.mxu0 0.0
      %1892 = vmatprep.subr.mxu0 0.0
      %1893 = vmatpush2.msra.mxu0 0.0
      %1894 = vmatprep.mubr.f32.mxu0 0.0
      %1895 = vmatmul.mubr.f32.gmra.mxu0 %v1806
      %v1896 = vpop.f32.mrf.mxu0
      %v1897 = vadd.f32 %v1828, %v1896
      %v1898 = vpop.f32.mrf.mxu0
      %1899 = vdwg.mxu0
      %1900 = vst.msk [vmem:[%s573] sm:$0xff] %vm577, %v1897
      %p1901 = scmp.lt.s32.totalorder %s27, 1
      %s1902 = scalar_select %p1901, %s27, 1
      %s1903 = smul.addr %s1902, 8
      %s1904 = scalar_lea.vmem %s12, %s1903
      // Predicated region
      $region69: #{bert_forward.2} parent=67 // pred_check
        %p1905 = pneg %p355
      $region70: #{bert_forward.2} parent=67 // pred_check_branch
        %1907 = sbr.rel (%p1905) target = $region72
      $region71: #{bert_forward.2} parent=67 // pred_region
        _
      $region72: #{bert_forward.2} parent=67 // pred_fallthru
        _
    $region68: #{bert_forward.2} parent=5 // pred_fallthru
      _
    %p1908 = scmp.le.s32.totalorder 2, %s18
    // Predicated region
    $region73: #{bert_forward.2} parent=5 // pred_check
      %p1909 = pneg %p1908
    $region74: #{bert_forward.2} parent=5 // pred_check_branch
      %1911 = sbr.rel (%p1909) target = $region76
    $region75: #{bert_forward.2} parent=5 // pred_region
      %s1912 = ssub.s32 %s18, 2
      // Predicated region
      $region77: #{bert_forward.2} parent=75 // pred_check
        %p1913 = pneg %p361
      $region78: #{bert_forward.2} parent=75 // pred_check_branch
        %1915 = sbr.rel (%p1913) target = $region80
      $region79: #{bert_forward.2} parent=75 // pred_region
        %p1916 = scmp.lt.s32.totalorder %s29, 1
        %s1917 = scalar_select %p1916, %s29, 1
        %s1918 = smul.addr %s1917, 8
        %s1919 = scalar_lea.vmem %s12, %s1918
      $region80: #{bert_forward.2} parent=75 // pred_fallthru
        _
    $region76: #{bert_forward.2} parent=5 // pred_fallthru
      _
  $region6: #{bert_forward.2} parent=0 // loop_footer
    %s22 = sadd.s32 1, %s18
  $region7: #{bert_forward.2} parent=0 // loop_footer_branch
    %17 = sbr.rel target = $region3
  $region8: #{bert_forward.2} parent=0 // loop_exit
    _

</llo_original>
